<compile_context>
chip_gen: v7x
topology: tpu7x:2x2x1
jax: 0.10.0
libtpu: 0.0.40
codegen_flags: <defaults>
</compile_context>

<pallas_src>
import math

import jax
import jax.numpy as jnp
from jax.experimental import pallas as pl
from jax.experimental.pallas import tpu as pltpu


# ----------------------------------------------------------------------------
# Pallas kernel (static sizes baked in via closure).
# ----------------------------------------------------------------------------
def _make_h3_kernel(D, T, NT, H, n):
    """D: model dim, T: chunk length, NT: shift taps, H: k-history rows,
    n: number of S4D modes (= d_state // 2)."""

    def kernel(u_ref, wqkv_ref, bqkv_ref, kshift_ref, kD_ref,
               tintra_ref, wout_re_ref, wout_im_ref, win_re_ref, win_im_ref,
               dAT_re_ref, dAT_im_ref, dskip_ref, wo_ref, bo_ref,
               out_ref, k_hist, s_re_scr, s_im_scr):
        c = pl.program_id(1)          # chunk index within the sequence

        # Reset carried state at the start of every sequence.
        @pl.when(c == 0)
        def _():
            k_hist[...] = jnp.zeros_like(k_hist)
            s_re_scr[...] = jnp.zeros_like(s_re_scr)
            s_im_scr[...] = jnp.zeros_like(s_im_scr)

        # ---- fused q/k/v projection: one MXU matmul (bf16 in, f32 acc) ----
        u16 = u_ref[...].astype(jnp.bfloat16)                       # (T, D)
        qkv = jnp.dot(u16, wqkv_ref[...],
                      preferred_element_type=jnp.float32) + bqkv_ref[...]
        q = qkv[:, 0:D]
        k = qkv[:, D:2 * D]
        v = qkv[:, 2 * D:3 * D]

        # ---- shift-SSM: banded causal depthwise conv (NT taps) + skip ----
        hist = k_hist[...]                                          # (H, D)
        k_full = jnp.concatenate([hist, k], axis=0)                 # (H+T, D)
        shift_k = jnp.zeros((T, D), jnp.float32)
        for tau in range(NT):
            shift_k = shift_k + (kshift_ref[tau:tau + 1, :]
                                 * k_full[H - tau:H - tau + T, :])
        k_hist[...] = k_full[T:T + H, :]        # carry last H raw-k rows
        k_new = shift_k + kD_ref[...] * k

        # head_dim == 1: per-channel gate of v by shifted k
        kv = k_new * v                                              # (T, D)

        # ---- diag-SSM (S4D): intra-chunk conv + cross-chunk state carry ----
        s_re = s_re_scr[...]                                        # (n, D)
        s_im = s_im_scr[...]

        # intra-chunk causal conv (lags 0..T-1)
        y = jnp.zeros((T, D), jnp.float32)
        for si in range(T):
            y = y + tintra_ref[si] * kv[si:si + 1, :]

        # cross-chunk contribution: y[t] += Re(2*Ceff*dA^(t+1) * s_in)
        for mi in range(n):
            y = y + (wout_re_ref[mi] * s_re[mi:mi + 1, :]
                     - wout_im_ref[mi] * s_im[mi:mi + 1, :])

        # state update: s' = dA^T * s_in + sum_t dA^(T-1-t) * kv[t]
        acc_re = dAT_re_ref[...] * s_re - dAT_im_ref[...] * s_im
        acc_im = dAT_re_ref[...] * s_im + dAT_im_ref[...] * s_re
        for ti in range(T):
            acc_re = acc_re + win_re_ref[ti] * kv[ti:ti + 1, :]
            acc_im = acc_im + win_im_ref[ti] * kv[ti:ti + 1, :]
        s_re_scr[...] = acc_re
        s_im_scr[...] = acc_im

        # skip connection, gate by q, output projection (bf16 MXU, f32 acc)
        y = y + dskip_ref[...] * kv
        y = y * q
        out = jnp.dot(y.astype(jnp.bfloat16), wo_ref[...],
                      preferred_element_type=jnp.float32) + bo_ref[...]
        out_ref[...] = out.astype(out_ref.dtype)

    return kernel


def h3_forward(u, kernel_params):
    """u: (B, L, D) float32 -> (B, L, D) float32."""
    (wqkvT, bqkv, kshift, ssm_k_D, t_intra, wout_re, wout_im,
     win_re, win_im, dAT_re, dAT_im, d_skip, woT, bo) = kernel_params
    B, L, D = u.shape
    T = t_intra.shape[0]
    NT = kshift.shape[0]
    n = dAT_re.shape[0]
    H = max(8, ((NT - 1 + 7) // 8) * 8)        # k-history rows (>= NT-1)
    assert L % T == 0, "sequence length must be a multiple of the chunk size"
    n_chunks = L // T

    inv2 = lambda b, c: (0, 0)
    inv3 = lambda b, c: (0, 0, 0)
    seq = lambda b, c: (b, c, 0)

    flops = int(8 * B * L * D * D + B * L * D * (2 * NT + 2 * T + 12 * n))
    param_bytes = sum(int(p.size) * p.dtype.itemsize for p in kernel_params)
    bytes_accessed = int(2 * 4 * B * L * D + 2 * param_bytes)

    kernel = _make_h3_kernel(D, T, NT, H, n)
    return pl.pallas_call(
        kernel,
        out_shape=jax.ShapeDtypeStruct((B, L, D), jnp.float32),
        grid_spec=pltpu.PrefetchScalarGridSpec(
            num_scalar_prefetch=0,
            grid=(B, n_chunks),
            in_specs=[
                pl.BlockSpec((None, T, D), seq),       # u chunk (batch squeezed)
                pl.BlockSpec((D, 3 * D), inv2),        # fused Wqkv^T (bf16)
                pl.BlockSpec((1, 3 * D), inv2),        # fused bias
                pl.BlockSpec((NT, D), inv2),           # shift-SSM taps
                pl.BlockSpec((1, D), inv2),            # ssm_k_D skip
                pl.BlockSpec((T, T, D), inv3),         # intra-chunk S4D Toeplitz
                pl.BlockSpec((n, T, D), inv3),         # Wout re
                pl.BlockSpec((n, T, D), inv3),         # Wout im
                pl.BlockSpec((T, n, D), inv3),         # Win re
                pl.BlockSpec((T, n, D), inv3),         # Win im
                pl.BlockSpec((n, D), inv2),            # dA^T re
                pl.BlockSpec((n, D), inv2),            # dA^T im
                pl.BlockSpec((1, D), inv2),            # D skip
                pl.BlockSpec((D, D), inv2),            # Wo^T (bf16)
                pl.BlockSpec((1, D), inv2),            # bo
            ],
            out_specs=pl.BlockSpec((None, T, D), seq),
            scratch_shapes=[
                pltpu.VMEM((H, D), jnp.float32),       # raw-k history (shift conv)
                pltpu.VMEM((n, D), jnp.float32),       # S4D state (real)
                pltpu.VMEM((n, D), jnp.float32),       # S4D state (imag)
            ],
        ),
        compiler_params=pltpu.CompilerParams(
            dimension_semantics=("parallel", "arbitrary"),
            vmem_limit_bytes=48 * 1024 * 1024),
        cost_estimate=pl.CostEstimate(flops=flops, transcendentals=0,
                                      bytes_accessed=bytes_accessed),
    )(u, *kernel_params)


# ----------------------------------------------------------------------------
# Parameter / SSM-kernel construction (plain-JAX glue, deterministic).
# ----------------------------------------------------------------------------
def make_h3_params(key, d_model, d_state, L, chunk, dt_min=1e-3, dt_max=1e-1):
    D = d_model                     # head_dim == 1 -> H == d_model
    T = chunk
    n = d_state // 2
    ks = jax.random.split(key, 12)

    def linear(kw, kb):
        bound = 1.0 / math.sqrt(D)
        w = jax.random.uniform(kw, (D, D), jnp.float32, -bound, bound)
        b = jax.random.uniform(kb, (D,), jnp.float32, -bound, bound)
        return w, b

    Wq, bq = linear(ks[0], ks[1])
    Wk, bk = linear(ks[2], ks[3])
    Wv, bv = linear(ks[4], ks[5])
    Wo, bo = linear(ks[6], ks[7])
    ssm_k_D = jax.random.normal(ks[8], (D,), jnp.float32)
    D_skip = jax.random.normal(ks[9], (D,), jnp.float32)

    # SSKernel(mode='shift'): A = shift matrix, B = e0 => K_shift[d,l] = C[d,l]
    C_shift = jax.random.normal(ks[10], (D, d_state), jnp.float32) / math.sqrt(d_state)
    NT = min(L, d_state)
    K_shift_full = jnp.zeros((D, L), jnp.float32).at[:, :NT].set(C_shift[:, :NT])

    # SSKernel(mode='diag'), measure='diag-lin', ZOH discretization (S4D)
    kdt, kc = jax.random.split(ks[11])
    log_dt = (jax.random.uniform(kdt, (D,), jnp.float32)
              * (math.log(dt_max) - math.log(dt_min)) + math.log(dt_min))
    dt = jnp.exp(log_dt)                                            # (D,)
    A = (-0.5 + 1j * jnp.pi * jnp.arange(n)).astype(jnp.complex64)  # diag-lin
    Cc = jax.random.normal(kc, (D, n, 2), jnp.float32)
    C = (Cc[..., 0] + 1j * Cc[..., 1]).astype(jnp.complex64)        # B = 1
    dtA = dt[:, None].astype(jnp.complex64) * A[None, :]            # (D, n)
    dA = jnp.exp(dtA)
    dB = (dA - 1.0) / A[None, :]
    Ceff = C * dB                                                   # (D, n)

    # full-length kernel (only for the pure-JAX FFT reference)
    lags_L = jnp.arange(L)
    K_ssm_full = 2.0 * jnp.real(
        jnp.einsum('dn,dnl->dl', Ceff,
                   jnp.exp(dtA[:, :, None] * lags_L[None, None, :]))
    ).astype(jnp.float32)

    raw = (Wq, bq, Wk, bk, Wv, bv, K_shift_full, ssm_k_D, K_ssm_full,
           D_skip, Wo, bo)

    # ---- kernel-side precomputation: O(L*D) / O(T*n*D), no (L,L,D) blobs ----
    Wqkv_T = jnp.concatenate([Wq.T, Wk.T, Wv.T], axis=1).astype(jnp.bfloat16)
    b_qkv = jnp.concatenate([bq, bk, bv])[None, :].astype(jnp.float32)

    kshift_taps = C_shift[:, :NT].T.astype(jnp.float32)             # (NT, D)

    lags_T = jnp.arange(T)
    K_intra = 2.0 * jnp.real(
        jnp.einsum('dn,dnt->dt', Ceff,
                   jnp.exp(dtA[:, :, None] * lags_T[None, None, :]))
    ).astype(jnp.float32)                                           # (D, T)
    idx = lags_T[None, :] - lags_T[:, None]                         # idx[s,t]=t-s
    gathered = jnp.take(K_intra, jnp.clip(idx, 0, T - 1), axis=1)   # (D, s, t)
    T_intra = jnp.where((idx >= 0)[None], gathered, 0.0)
    T_intra = jnp.transpose(T_intra, (1, 2, 0)).astype(jnp.float32)  # (s, t, d)

    t_plus1 = (lags_T + 1).astype(jnp.float32)
    wout = 2.0 * Ceff[:, :, None] * jnp.exp(dtA[:, :, None] * t_plus1[None, None, :])
    Wout_re = jnp.transpose(jnp.real(wout), (1, 2, 0)).astype(jnp.float32)  # (n,T,D)
    Wout_im = jnp.transpose(jnp.imag(wout), (1, 2, 0)).astype(jnp.float32)

    rev = (T - 1 - lags_T).astype(jnp.float32)
    win = jnp.exp(dtA[:, :, None] * rev[None, None, :])              # (D, n, T)
    Win_re = jnp.transpose(jnp.real(win), (2, 1, 0)).astype(jnp.float32)    # (T,n,D)
    Win_im = jnp.transpose(jnp.imag(win), (2, 1, 0)).astype(jnp.float32)

    dAT = jnp.exp(dtA * T)                                           # (D, n)
    dAT_re = jnp.real(dAT).T.astype(jnp.float32)                     # (n, D)
    dAT_im = jnp.imag(dAT).T.astype(jnp.float32)

    kernel_params = (Wqkv_T, b_qkv, kshift_taps, ssm_k_D[None, :],
                     T_intra, Wout_re, Wout_im, Win_re, Win_im,
                     dAT_re, dAT_im, D_skip[None, :],
                     Wo.T.astype(jnp.bfloat16), bo[None, :])
    return raw, kernel_params


# ----------------------------------------------------------------------------
# Pure-JAX reference mirroring the PyTorch forward (FFT-based causal conv).
# ----------------------------------------------------------------------------
def h3_reference(u, raw):
    Wq, bq, Wk, bk, Wv, bv, K_shift, ssm_k_D, K_ssm, D_skip, Wo, bo = raw
    B, L, Dm = u.shape
    uf = u.reshape(B * L, Dm)
    q = (uf @ Wq.T + bq).reshape(B, L, Dm).transpose(0, 2, 1)       # (B, D, L)
    k = (uf @ Wk.T + bk).reshape(B, L, Dm).transpose(0, 2, 1)
    v = (uf @ Wv.T + bv).reshape(B, L, Dm).transpose(0, 2, 1)

    fft_size = 2 * L
    shift_f = jnp.fft.rfft(K_shift, n=fft_size)
    k_f = jnp.fft.rfft(k, n=fft_size)
    shift_k = jnp.fft.irfft(shift_f * k_f, n=fft_size)[..., :L]
    k = shift_k + ssm_k_D[:, None] * k

    kv = k * v                                                      # head_dim == 1
    kv_f = jnp.fft.rfft(kv, n=fft_size) / fft_size
    ssm_f = jnp.fft.rfft(K_ssm, n=fft_size)
    y = jnp.fft.irfft(kv_f * ssm_f, n=fft_size, norm='forward')[..., :L]
    y = y + kv * D_skip[:, None]
    y = y * q
    y = y.transpose(0, 2, 1)                                        # (B, L, D)
    return y @ Wo.T + bo


if __name__ == "__main__":
    # small but lane-dense config: D = 128 (multiple of 128), 4 chunks of 16
    B, L, d_model, d_state, chunk = 2, 64, 128, 64, 16

    key = jax.random.PRNGKey(0)
    k_u, k_p = jax.random.split(key)
    u = jax.random.normal(k_u, (B, L, d_model), jnp.float32)

    raw, kernel_params = make_h3_params(k_p, d_model, d_state, L, chunk)

    out = jax.block_until_ready(h3_forward(u, kernel_params))
    ref = jax.block_until_ready(h3_reference(u, raw))

    max_err = float(jnp.max(jnp.abs(out - ref)))
    scale = float(jnp.max(jnp.abs(ref)))
    assert max_err <= 1e-2 + 3e-2 * scale, (
        f"mismatch vs reference: max abs err = {max_err} (ref scale {scale})")

    print("KERNEL_OK")
</pallas_src>

<mosaic_0001>
module attributes {stable_mosaic.version = 11 : i64} {
  func.func @kernel(%arg0: i32, %arg1: i32, %arg2: memref<1x16x128xf32, #tpu.memory_space<vmem>>, %arg3: memref<128x384xbf16, #tpu.memory_space<vmem>>, %arg4: memref<1x384xf32, #tpu.memory_space<vmem>>, %arg5: memref<64x128xf32, #tpu.memory_space<vmem>>, %arg6: memref<1x128xf32, #tpu.memory_space<vmem>>, %arg7: memref<16x16x128xf32, #tpu.memory_space<vmem>>, %arg8: memref<32x16x128xf32, #tpu.memory_space<vmem>>, %arg9: memref<32x16x128xf32, #tpu.memory_space<vmem>>, %arg10: memref<16x32x128xf32, #tpu.memory_space<vmem>>, %arg11: memref<16x32x128xf32, #tpu.memory_space<vmem>>, %arg12: memref<32x128xf32, #tpu.memory_space<vmem>>, %arg13: memref<32x128xf32, #tpu.memory_space<vmem>>, %arg14: memref<1x128xf32, #tpu.memory_space<vmem>>, %arg15: memref<128x128xbf16, #tpu.memory_space<vmem>>, %arg16: memref<1x128xf32, #tpu.memory_space<vmem>>, %arg17: memref<1x16x128xf32, #tpu.memory_space<vmem>>, %arg18: memref<64x128xf32, #tpu.memory_space<vmem>>, %arg19: memref<32x128xf32, #tpu.memory_space<vmem>>, %arg20: memref<32x128xf32, #tpu.memory_space<vmem>>) attributes {dimension_semantics = [#tpu.dimension_semantics<parallel>, #tpu.dimension_semantics<arbitrary>], iteration_bounds = array<i64: 2, 4>, scalar_prefetch = 0 : i64, scratch_operands = 3 : i64, tpu.core_type = #tpu.core_type<tc>, window_params = [{transform_indices = @transform_0, window_bounds = array<i64: 1, 16, 128>}, {pipeline_mode = #tpu.pipeline_mode<synchronous>, transform_indices = @transform_1, window_bounds = array<i64: 128, 384>}, {pipeline_mode = #tpu.pipeline_mode<synchronous>, transform_indices = @transform_2, window_bounds = array<i64: 1, 384>}, {pipeline_mode = #tpu.pipeline_mode<synchronous>, transform_indices = @transform_3, window_bounds = array<i64: 64, 128>}, {pipeline_mode = #tpu.pipeline_mode<synchronous>, transform_indices = @transform_4, window_bounds = array<i64: 1, 128>}, {pipeline_mode = #tpu.pipeline_mode<synchronous>, transform_indices = @transform_5, window_bounds = array<i64: 16, 16, 128>}, {pipeline_mode = #tpu.pipeline_mode<synchronous>, transform_indices = @transform_6, window_bounds = array<i64: 32, 16, 128>}, {pipeline_mode = #tpu.pipeline_mode<synchronous>, transform_indices = @transform_7, window_bounds = array<i64: 32, 16, 128>}, {pipeline_mode = #tpu.pipeline_mode<synchronous>, transform_indices = @transform_8, window_bounds = array<i64: 16, 32, 128>}, {pipeline_mode = #tpu.pipeline_mode<synchronous>, transform_indices = @transform_9, window_bounds = array<i64: 16, 32, 128>}, {pipeline_mode = #tpu.pipeline_mode<synchronous>, transform_indices = @transform_10, window_bounds = array<i64: 32, 128>}, {pipeline_mode = #tpu.pipeline_mode<synchronous>, transform_indices = @transform_11, window_bounds = array<i64: 32, 128>}, {pipeline_mode = #tpu.pipeline_mode<synchronous>, transform_indices = @transform_12, window_bounds = array<i64: 1, 128>}, {pipeline_mode = #tpu.pipeline_mode<synchronous>, transform_indices = @transform_13, window_bounds = array<i64: 128, 128>}, {pipeline_mode = #tpu.pipeline_mode<synchronous>, transform_indices = @transform_14, window_bounds = array<i64: 1, 128>}, {transform_indices = @transform_15, window_bounds = array<i64: 1, 16, 128>}]} {
    %c0_i32 = arith.constant 0 : i32
    %0 = arith.cmpi eq, %arg1, %c0_i32 : i32
    %1 = arith.extui %0 : i1 to i32
    %c0_i32_0 = arith.constant 0 : i32
    %2 = arith.cmpi ne, %1, %c0_i32_0 : i32
    scf.if %2 {
      %cst_442 = arith.constant 0.000000e+00 : f32
      %1045 = vector.broadcast %cst_442 : f32 to vector<64x128xf32>
      %c0_443 = arith.constant 0 : index
      %c0_444 = arith.constant 0 : index
      %1046 = vector.load %arg18[%c0_443, %c0_444] : memref<64x128xf32, #tpu.memory_space<vmem>>, vector<64x128xf32>
      tpu.vector_store %arg18[%c0_443, %c0_444], %1045 {strides = array<i32>} : memref<64x128xf32, #tpu.memory_space<vmem>>, vector<64x128xf32>,
      %cst_445 = arith.constant 0.000000e+00 : f32
      %1047 = vector.broadcast %cst_445 : f32 to vector<32x128xf32>
      %c0_446 = arith.constant 0 : index
      %c0_447 = arith.constant 0 : index
      %1048 = vector.load %arg19[%c0_446, %c0_447] : memref<32x128xf32, #tpu.memory_space<vmem>>, vector<32x128xf32>
      tpu.vector_store %arg19[%c0_446, %c0_447], %1047 {strides = array<i32>} : memref<32x128xf32, #tpu.memory_space<vmem>>, vector<32x128xf32>,
      %cst_448 = arith.constant 0.000000e+00 : f32
      %1049 = vector.broadcast %cst_448 : f32 to vector<32x128xf32>
      %c0_449 = arith.constant 0 : index
      %c0_450 = arith.constant 0 : index
      %1050 = vector.load %arg20[%c0_449, %c0_450] : memref<32x128xf32, #tpu.memory_space<vmem>>, vector<32x128xf32>
      tpu.vector_store %arg20[%c0_449, %c0_450], %1049 {strides = array<i32>} : memref<32x128xf32, #tpu.memory_space<vmem>>, vector<32x128xf32>,
    } else {
    }
    %c0 = arith.constant 0 : index
    %c0_1 = arith.constant 0 : index
    %c0_2 = arith.constant 0 : index
    %3 = vector.load %arg2[%c0, %c0_1, %c0_2] : memref<1x16x128xf32, #tpu.memory_space<vmem>>, vector<1x16x128xf32>
    %4 = vector.shape_cast %3 : vector<1x16x128xf32> to vector<16x128xf32>
    %5 = arith.truncf %4 : vector<16x128xf32> to vector<16x128xbf16>
    %c0_3 = arith.constant 0 : index
    %c0_4 = arith.constant 0 : index
    %6 = vector.load %arg3[%c0_3, %c0_4] : memref<128x384xbf16, #tpu.memory_space<vmem>>, vector<128x384xbf16>
    %cst = arith.constant dense<0.000000e+00> : vector<16x384xf32>
    %7 = tpu.matmul %5, %6, %cst {dimension_numbers = #tpu.dot_dimension_numbers<[1], [0], [0], [1], [0, 0, 1, 1], [], []>} : vector<16x128xbf16>, vector<128x384xbf16>, vector<16x384xf32> -> vector<16x384xf32>
    %c0_5 = arith.constant 0 : index
    %c0_6 = arith.constant 0 : index
    %8 = vector.load %arg4[%c0_5, %c0_6] : memref<1x384xf32, #tpu.memory_space<vmem>>, vector<1x384xf32>
    %9 = vector.broadcast %8 : vector<1x384xf32> to vector<16x384xf32>
    %10 = arith.addf %7, %9 : vector<16x384xf32>
    %11 = vector.extract_strided_slice %10 {offsets = [0, 0], sizes = [16, 128], strides = [1, 1]} : vector<16x384xf32> to vector<16x128xf32>
    %12 = vector.extract_strided_slice %10 {offsets = [0, 128], sizes = [16, 128], strides = [1, 1]} : vector<16x384xf32> to vector<16x128xf32>
    %13 = vector.extract_strided_slice %10 {offsets = [0, 256], sizes = [16, 128], strides = [1, 1]} : vector<16x384xf32> to vector<16x128xf32>
    %c0_7 = arith.constant 0 : index
    %c0_8 = arith.constant 0 : index
    %14 = vector.load %arg18[%c0_7, %c0_8] : memref<64x128xf32, #tpu.memory_space<vmem>>, vector<64x128xf32>
    %15 = tpu.concatenate %14, %12 in 0 : vector<64x128xf32>, vector<16x128xf32> -> vector<80x128xf32>
    %cst_9 = arith.constant 0.000000e+00 : f32
    %16 = vector.broadcast %cst_9 : f32 to vector<16x128xf32>
    %c0_10 = arith.constant 0 : index
    %c0_11 = arith.constant 0 : index
    %17 = vector.load %arg5[%c0_10, %c0_11] : memref<64x128xf32, #tpu.memory_space<vmem>>, vector<1x128xf32>
    %18 = vector.extract_strided_slice %15 {offsets = [64, 0], sizes = [16, 128], strides = [1, 1]} : vector<80x128xf32> to vector<16x128xf32>
    %19 = vector.broadcast %17 : vector<1x128xf32> to vector<16x128xf32>
    %20 = arith.mulf %19, %18 : vector<16x128xf32>
    %21 = arith.addf %16, %20 : vector<16x128xf32>
    %c1 = arith.constant 1 : index
    %c0_12 = arith.constant 0 : index
    %22 = vector.load %arg5[%c1, %c0_12] : memref<64x128xf32, #tpu.memory_space<vmem>>, vector<1x128xf32>
    %23 = vector.extract_strided_slice %15 {offsets = [63, 0], sizes = [16, 128], strides = [1, 1]} : vector<80x128xf32> to vector<16x128xf32>
    %24 = vector.broadcast %22 : vector<1x128xf32> to vector<16x128xf32>
    %25 = arith.mulf %24, %23 : vector<16x128xf32>
    %26 = arith.addf %21, %25 : vector<16x128xf32>
    %c2 = arith.constant 2 : index
    %c0_13 = arith.constant 0 : index
    %27 = vector.load %arg5[%c2, %c0_13] : memref<64x128xf32, #tpu.memory_space<vmem>>, vector<1x128xf32>
    %28 = vector.extract_strided_slice %15 {offsets = [62, 0], sizes = [16, 128], strides = [1, 1]} : vector<80x128xf32> to vector<16x128xf32>
    %29 = vector.broadcast %27 : vector<1x128xf32> to vector<16x128xf32>
    %30 = arith.mulf %29, %28 : vector<16x128xf32>
    %31 = arith.addf %26, %30 : vector<16x128xf32>
    %c3 = arith.constant 3 : index
    %c0_14 = arith.constant 0 : index
    %32 = vector.load %arg5[%c3, %c0_14] : memref<64x128xf32, #tpu.memory_space<vmem>>, vector<1x128xf32>
    %33 = vector.extract_strided_slice %15 {offsets = [61, 0], sizes = [16, 128], strides = [1, 1]} : vector<80x128xf32> to vector<16x128xf32>
    %34 = vector.broadcast %32 : vector<1x128xf32> to vector<16x128xf32>
    %35 = arith.mulf %34, %33 : vector<16x128xf32>
    %36 = arith.addf %31, %35 : vector<16x128xf32>
    %c4 = arith.constant 4 : index
    %c0_15 = arith.constant 0 : index
    %37 = vector.load %arg5[%c4, %c0_15] : memref<64x128xf32, #tpu.memory_space<vmem>>, vector<1x128xf32>
    %38 = vector.extract_strided_slice %15 {offsets = [60, 0], sizes = [16, 128], strides = [1, 1]} : vector<80x128xf32> to vector<16x128xf32>
    %39 = vector.broadcast %37 : vector<1x128xf32> to vector<16x128xf32>
    %40 = arith.mulf %39, %38 : vector<16x128xf32>
    %41 = arith.addf %36, %40 : vector<16x128xf32>
    %c5 = arith.constant 5 : index
    %c0_16 = arith.constant 0 : index
    %42 = vector.load %arg5[%c5, %c0_16] : memref<64x128xf32, #tpu.memory_space<vmem>>, vector<1x128xf32>
    %43 = vector.extract_strided_slice %15 {offsets = [59, 0], sizes = [16, 128], strides = [1, 1]} : vector<80x128xf32> to vector<16x128xf32>
    %44 = vector.broadcast %42 : vector<1x128xf32> to vector<16x128xf32>
    %45 = arith.mulf %44, %43 : vector<16x128xf32>
    %46 = arith.addf %41, %45 : vector<16x128xf32>
    %c6 = arith.constant 6 : index
    %c0_17 = arith.constant 0 : index
    %47 = vector.load %arg5[%c6, %c0_17] : memref<64x128xf32, #tpu.memory_space<vmem>>, vector<1x128xf32>
    %48 = vector.extract_strided_slice %15 {offsets = [58, 0], sizes = [16, 128], strides = [1, 1]} : vector<80x128xf32> to vector<16x128xf32>
    %49 = vector.broadcast %47 : vector<1x128xf32> to vector<16x128xf32>
    %50 = arith.mulf %49, %48 : vector<16x128xf32>
    %51 = arith.addf %46, %50 : vector<16x128xf32>
    %c7 = arith.constant 7 : index
    %c0_18 = arith.constant 0 : index
    %52 = vector.load %arg5[%c7, %c0_18] : memref<64x128xf32, #tpu.memory_space<vmem>>, vector<1x128xf32>
    %53 = vector.extract_strided_slice %15 {offsets = [57, 0], sizes = [16, 128], strides = [1, 1]} : vector<80x128xf32> to vector<16x128xf32>
    %54 = vector.broadcast %52 : vector<1x128xf32> to vector<16x128xf32>
    %55 = arith.mulf %54, %53 : vector<16x128xf32>
    %56 = arith.addf %51, %55 : vector<16x128xf32>
    %c8 = arith.constant 8 : index
    %c0_19 = arith.constant 0 : index
    %57 = vector.load %arg5[%c8, %c0_19] : memref<64x128xf32, #tpu.memory_space<vmem>>, vector<1x128xf32>
    %58 = vector.extract_strided_slice %15 {offsets = [56, 0], sizes = [16, 128], strides = [1, 1]} : vector<80x128xf32> to vector<16x128xf32>
    %59 = vector.broadcast %57 : vector<1x128xf32> to vector<16x128xf32>
    %60 = arith.mulf %59, %58 : vector<16x128xf32>
    %61 = arith.addf %56, %60 : vector<16x128xf32>
    %c9 = arith.constant 9 : index
    %c0_20 = arith.constant 0 : index
    %62 = vector.load %arg5[%c9, %c0_20] : memref<64x128xf32, #tpu.memory_space<vmem>>, vector<1x128xf32>
    %63 = vector.extract_strided_slice %15 {offsets = [55, 0], sizes = [16, 128], strides = [1, 1]} : vector<80x128xf32> to vector<16x128xf32>
    %64 = vector.broadcast %62 : vector<1x128xf32> to vector<16x128xf32>
    %65 = arith.mulf %64, %63 : vector<16x128xf32>
    %66 = arith.addf %61, %65 : vector<16x128xf32>
    %c10 = arith.constant 10 : index
    %c0_21 = arith.constant 0 : index
    %67 = vector.load %arg5[%c10, %c0_21] : memref<64x128xf32, #tpu.memory_space<vmem>>, vector<1x128xf32>
    %68 = vector.extract_strided_slice %15 {offsets = [54, 0], sizes = [16, 128], strides = [1, 1]} : vector<80x128xf32> to vector<16x128xf32>
    %69 = vector.broadcast %67 : vector<1x128xf32> to vector<16x128xf32>
    %70 = arith.mulf %69, %68 : vector<16x128xf32>
    %71 = arith.addf %66, %70 : vector<16x128xf32>
    %c11 = arith.constant 11 : index
    %c0_22 = arith.constant 0 : index
    %72 = vector.load %arg5[%c11, %c0_22] : memref<64x128xf32, #tpu.memory_space<vmem>>, vector<1x128xf32>
    %73 = vector.extract_strided_slice %15 {offsets = [53, 0], sizes = [16, 128], strides = [1, 1]} : vector<80x128xf32> to vector<16x128xf32>
    %74 = vector.broadcast %72 : vector<1x128xf32> to vector<16x128xf32>
    %75 = arith.mulf %74, %73 : vector<16x128xf32>
    %76 = arith.addf %71, %75 : vector<16x128xf32>
    %c12 = arith.constant 12 : index
    %c0_23 = arith.constant 0 : index
    %77 = vector.load %arg5[%c12, %c0_23] : memref<64x128xf32, #tpu.memory_space<vmem>>, vector<1x128xf32>
    %78 = vector.extract_strided_slice %15 {offsets = [52, 0], sizes = [16, 128], strides = [1, 1]} : vector<80x128xf32> to vector<16x128xf32>
    %79 = vector.broadcast %77 : vector<1x128xf32> to vector<16x128xf32>
    %80 = arith.mulf %79, %78 : vector<16x128xf32>
    %81 = arith.addf %76, %80 : vector<16x128xf32>
    %c13 = arith.constant 13 : index
    %c0_24 = arith.constant 0 : index
    %82 = vector.load %arg5[%c13, %c0_24] : memref<64x128xf32, #tpu.memory_space<vmem>>, vector<1x128xf32>
    %83 = vector.extract_strided_slice %15 {offsets = [51, 0], sizes = [16, 128], strides = [1, 1]} : vector<80x128xf32> to vector<16x128xf32>
    %84 = vector.broadcast %82 : vector<1x128xf32> to vector<16x128xf32>
    %85 = arith.mulf %84, %83 : vector<16x128xf32>
    %86 = arith.addf %81, %85 : vector<16x128xf32>
    %c14 = arith.constant 14 : index
    %c0_25 = arith.constant 0 : index
    %87 = vector.load %arg5[%c14, %c0_25] : memref<64x128xf32, #tpu.memory_space<vmem>>, vector<1x128xf32>
    %88 = vector.extract_strided_slice %15 {offsets = [50, 0], sizes = [16, 128], strides = [1, 1]} : vector<80x128xf32> to vector<16x128xf32>
    %89 = vector.broadcast %87 : vector<1x128xf32> to vector<16x128xf32>
    %90 = arith.mulf %89, %88 : vector<16x128xf32>
    %91 = arith.addf %86, %90 : vector<16x128xf32>
    %c15 = arith.constant 15 : index
    %c0_26 = arith.constant 0 : index
    %92 = vector.load %arg5[%c15, %c0_26] : memref<64x128xf32, #tpu.memory_space<vmem>>, vector<1x128xf32>
    %93 = vector.extract_strided_slice %15 {offsets = [49, 0], sizes = [16, 128], strides = [1, 1]} : vector<80x128xf32> to vector<16x128xf32>
    %94 = vector.broadcast %92 : vector<1x128xf32> to vector<16x128xf32>
    %95 = arith.mulf %94, %93 : vector<16x128xf32>
    %96 = arith.addf %91, %95 : vector<16x128xf32>
    %c16 = arith.constant 16 : index
    %c0_27 = arith.constant 0 : index
    %97 = vector.load %arg5[%c16, %c0_27] : memref<64x128xf32, #tpu.memory_space<vmem>>, vector<1x128xf32>
    %98 = vector.extract_strided_slice %15 {offsets = [48, 0], sizes = [16, 128], strides = [1, 1]} : vector<80x128xf32> to vector<16x128xf32>
    %99 = vector.broadcast %97 : vector<1x128xf32> to vector<16x128xf32>
    %100 = arith.mulf %99, %98 : vector<16x128xf32>
    %101 = arith.addf %96, %100 : vector<16x128xf32>
    %c17 = arith.constant 17 : index
    %c0_28 = arith.constant 0 : index
    %102 = vector.load %arg5[%c17, %c0_28] : memref<64x128xf32, #tpu.memory_space<vmem>>, vector<1x128xf32>
    %103 = vector.extract_strided_slice %15 {offsets = [47, 0], sizes = [16, 128], strides = [1, 1]} : vector<80x128xf32> to vector<16x128xf32>
    %104 = vector.broadcast %102 : vector<1x128xf32> to vector<16x128xf32>
    %105 = arith.mulf %104, %103 : vector<16x128xf32>
    %106 = arith.addf %101, %105 : vector<16x128xf32>
    %c18 = arith.constant 18 : index
    %c0_29 = arith.constant 0 : index
    %107 = vector.load %arg5[%c18, %c0_29] : memref<64x128xf32, #tpu.memory_space<vmem>>, vector<1x128xf32>
    %108 = vector.extract_strided_slice %15 {offsets = [46, 0], sizes = [16, 128], strides = [1, 1]} : vector<80x128xf32> to vector<16x128xf32>
    %109 = vector.broadcast %107 : vector<1x128xf32> to vector<16x128xf32>
    %110 = arith.mulf %109, %108 : vector<16x128xf32>
    %111 = arith.addf %106, %110 : vector<16x128xf32>
    %c19 = arith.constant 19 : index
    %c0_30 = arith.constant 0 : index
    %112 = vector.load %arg5[%c19, %c0_30] : memref<64x128xf32, #tpu.memory_space<vmem>>, vector<1x128xf32>
    %113 = vector.extract_strided_slice %15 {offsets = [45, 0], sizes = [16, 128], strides = [1, 1]} : vector<80x128xf32> to vector<16x128xf32>
    %114 = vector.broadcast %112 : vector<1x128xf32> to vector<16x128xf32>
    %115 = arith.mulf %114, %113 : vector<16x128xf32>
    %116 = arith.addf %111, %115 : vector<16x128xf32>
    %c20 = arith.constant 20 : index
    %c0_31 = arith.constant 0 : index
    %117 = vector.load %arg5[%c20, %c0_31] : memref<64x128xf32, #tpu.memory_space<vmem>>, vector<1x128xf32>
    %118 = vector.extract_strided_slice %15 {offsets = [44, 0], sizes = [16, 128], strides = [1, 1]} : vector<80x128xf32> to vector<16x128xf32>
    %119 = vector.broadcast %117 : vector<1x128xf32> to vector<16x128xf32>
    %120 = arith.mulf %119, %118 : vector<16x128xf32>
    %121 = arith.addf %116, %120 : vector<16x128xf32>
    %c21 = arith.constant 21 : index
    %c0_32 = arith.constant 0 : index
    %122 = vector.load %arg5[%c21, %c0_32] : memref<64x128xf32, #tpu.memory_space<vmem>>, vector<1x128xf32>
    %123 = vector.extract_strided_slice %15 {offsets = [43, 0], sizes = [16, 128], strides = [1, 1]} : vector<80x128xf32> to vector<16x128xf32>
    %124 = vector.broadcast %122 : vector<1x128xf32> to vector<16x128xf32>
    %125 = arith.mulf %124, %123 : vector<16x128xf32>
    %126 = arith.addf %121, %125 : vector<16x128xf32>
    %c22 = arith.constant 22 : index
    %c0_33 = arith.constant 0 : index
    %127 = vector.load %arg5[%c22, %c0_33] : memref<64x128xf32, #tpu.memory_space<vmem>>, vector<1x128xf32>
    %128 = vector.extract_strided_slice %15 {offsets = [42, 0], sizes = [16, 128], strides = [1, 1]} : vector<80x128xf32> to vector<16x128xf32>
    %129 = vector.broadcast %127 : vector<1x128xf32> to vector<16x128xf32>
    %130 = arith.mulf %129, %128 : vector<16x128xf32>
    %131 = arith.addf %126, %130 : vector<16x128xf32>
    %c23 = arith.constant 23 : index
    %c0_34 = arith.constant 0 : index
    %132 = vector.load %arg5[%c23, %c0_34] : memref<64x128xf32, #tpu.memory_space<vmem>>, vector<1x128xf32>
    %133 = vector.extract_strided_slice %15 {offsets = [41, 0], sizes = [16, 128], strides = [1, 1]} : vector<80x128xf32> to vector<16x128xf32>
    %134 = vector.broadcast %132 : vector<1x128xf32> to vector<16x128xf32>
    %135 = arith.mulf %134, %133 : vector<16x128xf32>
    %136 = arith.addf %131, %135 : vector<16x128xf32>
    %c24 = arith.constant 24 : index
    %c0_35 = arith.constant 0 : index
    %137 = vector.load %arg5[%c24, %c0_35] : memref<64x128xf32, #tpu.memory_space<vmem>>, vector<1x128xf32>
    %138 = vector.extract_strided_slice %15 {offsets = [40, 0], sizes = [16, 128], strides = [1, 1]} : vector<80x128xf32> to vector<16x128xf32>
    %139 = vector.broadcast %137 : vector<1x128xf32> to vector<16x128xf32>
    %140 = arith.mulf %139, %138 : vector<16x128xf32>
    %141 = arith.addf %136, %140 : vector<16x128xf32>
    %c25 = arith.constant 25 : index
    %c0_36 = arith.constant 0 : index
    %142 = vector.load %arg5[%c25, %c0_36] : memref<64x128xf32, #tpu.memory_space<vmem>>, vector<1x128xf32>
    %143 = vector.extract_strided_slice %15 {offsets = [39, 0], sizes = [16, 128], strides = [1, 1]} : vector<80x128xf32> to vector<16x128xf32>
    %144 = vector.broadcast %142 : vector<1x128xf32> to vector<16x128xf32>
    %145 = arith.mulf %144, %143 : vector<16x128xf32>
    %146 = arith.addf %141, %145 : vector<16x128xf32>
    %c26 = arith.constant 26 : index
    %c0_37 = arith.constant 0 : index
    %147 = vector.load %arg5[%c26, %c0_37] : memref<64x128xf32, #tpu.memory_space<vmem>>, vector<1x128xf32>
    %148 = vector.extract_strided_slice %15 {offsets = [38, 0], sizes = [16, 128], strides = [1, 1]} : vector<80x128xf32> to vector<16x128xf32>
    %149 = vector.broadcast %147 : vector<1x128xf32> to vector<16x128xf32>
    %150 = arith.mulf %149, %148 : vector<16x128xf32>
    %151 = arith.addf %146, %150 : vector<16x128xf32>
    %c27 = arith.constant 27 : index
    %c0_38 = arith.constant 0 : index
    %152 = vector.load %arg5[%c27, %c0_38] : memref<64x128xf32, #tpu.memory_space<vmem>>, vector<1x128xf32>
    %153 = vector.extract_strided_slice %15 {offsets = [37, 0], sizes = [16, 128], strides = [1, 1]} : vector<80x128xf32> to vector<16x128xf32>
    %154 = vector.broadcast %152 : vector<1x128xf32> to vector<16x128xf32>
    %155 = arith.mulf %154, %153 : vector<16x128xf32>
    %156 = arith.addf %151, %155 : vector<16x128xf32>
    %c28 = arith.constant 28 : index
    %c0_39 = arith.constant 0 : index
    %157 = vector.load %arg5[%c28, %c0_39] : memref<64x128xf32, #tpu.memory_space<vmem>>, vector<1x128xf32>
    %158 = vector.extract_strided_slice %15 {offsets = [36, 0], sizes = [16, 128], strides = [1, 1]} : vector<80x128xf32> to vector<16x128xf32>
    %159 = vector.broadcast %157 : vector<1x128xf32> to vector<16x128xf32>
    %160 = arith.mulf %159, %158 : vector<16x128xf32>
    %161 = arith.addf %156, %160 : vector<16x128xf32>
    %c29 = arith.constant 29 : index
    %c0_40 = arith.constant 0 : index
    %162 = vector.load %arg5[%c29, %c0_40] : memref<64x128xf32, #tpu.memory_space<vmem>>, vector<1x128xf32>
    %163 = vector.extract_strided_slice %15 {offsets = [35, 0], sizes = [16, 128], strides = [1, 1]} : vector<80x128xf32> to vector<16x128xf32>
    %164 = vector.broadcast %162 : vector<1x128xf32> to vector<16x128xf32>
    %165 = arith.mulf %164, %163 : vector<16x128xf32>
    %166 = arith.addf %161, %165 : vector<16x128xf32>
    %c30 = arith.constant 30 : index
    %c0_41 = arith.constant 0 : index
    %167 = vector.load %arg5[%c30, %c0_41] : memref<64x128xf32, #tpu.memory_space<vmem>>, vector<1x128xf32>
    %168 = vector.extract_strided_slice %15 {offsets = [34, 0], sizes = [16, 128], strides = [1, 1]} : vector<80x128xf32> to vector<16x128xf32>
    %169 = vector.broadcast %167 : vector<1x128xf32> to vector<16x128xf32>
    %170 = arith.mulf %169, %168 : vector<16x128xf32>
    %171 = arith.addf %166, %170 : vector<16x128xf32>
    %c31 = arith.constant 31 : index
    %c0_42 = arith.constant 0 : index
    %172 = vector.load %arg5[%c31, %c0_42] : memref<64x128xf32, #tpu.memory_space<vmem>>, vector<1x128xf32>
    %173 = vector.extract_strided_slice %15 {offsets = [33, 0], sizes = [16, 128], strides = [1, 1]} : vector<80x128xf32> to vector<16x128xf32>
    %174 = vector.broadcast %172 : vector<1x128xf32> to vector<16x128xf32>
    %175 = arith.mulf %174, %173 : vector<16x128xf32>
    %176 = arith.addf %171, %175 : vector<16x128xf32>
    %c32 = arith.constant 32 : index
    %c0_43 = arith.constant 0 : index
    %177 = vector.load %arg5[%c32, %c0_43] : memref<64x128xf32, #tpu.memory_space<vmem>>, vector<1x128xf32>
    %178 = vector.extract_strided_slice %15 {offsets = [32, 0], sizes = [16, 128], strides = [1, 1]} : vector<80x128xf32> to vector<16x128xf32>
    %179 = vector.broadcast %177 : vector<1x128xf32> to vector<16x128xf32>
    %180 = arith.mulf %179, %178 : vector<16x128xf32>
    %181 = arith.addf %176, %180 : vector<16x128xf32>
    %c33 = arith.constant 33 : index
    %c0_44 = arith.constant 0 : index
    %182 = vector.load %arg5[%c33, %c0_44] : memref<64x128xf32, #tpu.memory_space<vmem>>, vector<1x128xf32>
    %183 = vector.extract_strided_slice %15 {offsets = [31, 0], sizes = [16, 128], strides = [1, 1]} : vector<80x128xf32> to vector<16x128xf32>
    %184 = vector.broadcast %182 : vector<1x128xf32> to vector<16x128xf32>
    %185 = arith.mulf %184, %183 : vector<16x128xf32>
    %186 = arith.addf %181, %185 : vector<16x128xf32>
    %c34 = arith.constant 34 : index
    %c0_45 = arith.constant 0 : index
    %187 = vector.load %arg5[%c34, %c0_45] : memref<64x128xf32, #tpu.memory_space<vmem>>, vector<1x128xf32>
    %188 = vector.extract_strided_slice %15 {offsets = [30, 0], sizes = [16, 128], strides = [1, 1]} : vector<80x128xf32> to vector<16x128xf32>
    %189 = vector.broadcast %187 : vector<1x128xf32> to vector<16x128xf32>
    %190 = arith.mulf %189, %188 : vector<16x128xf32>
    %191 = arith.addf %186, %190 : vector<16x128xf32>
    %c35 = arith.constant 35 : index
    %c0_46 = arith.constant 0 : index
    %192 = vector.load %arg5[%c35, %c0_46] : memref<64x128xf32, #tpu.memory_space<vmem>>, vector<1x128xf32>
    %193 = vector.extract_strided_slice %15 {offsets = [29, 0], sizes = [16, 128], strides = [1, 1]} : vector<80x128xf32> to vector<16x128xf32>
    %194 = vector.broadcast %192 : vector<1x128xf32> to vector<16x128xf32>
    %195 = arith.mulf %194, %193 : vector<16x128xf32>
    %196 = arith.addf %191, %195 : vector<16x128xf32>
    %c36 = arith.constant 36 : index
    %c0_47 = arith.constant 0 : index
    %197 = vector.load %arg5[%c36, %c0_47] : memref<64x128xf32, #tpu.memory_space<vmem>>, vector<1x128xf32>
    %198 = vector.extract_strided_slice %15 {offsets = [28, 0], sizes = [16, 128], strides = [1, 1]} : vector<80x128xf32> to vector<16x128xf32>
    %199 = vector.broadcast %197 : vector<1x128xf32> to vector<16x128xf32>
    %200 = arith.mulf %199, %198 : vector<16x128xf32>
    %201 = arith.addf %196, %200 : vector<16x128xf32>
    %c37 = arith.constant 37 : index
    %c0_48 = arith.constant 0 : index
    %202 = vector.load %arg5[%c37, %c0_48] : memref<64x128xf32, #tpu.memory_space<vmem>>, vector<1x128xf32>
    %203 = vector.extract_strided_slice %15 {offsets = [27, 0], sizes = [16, 128], strides = [1, 1]} : vector<80x128xf32> to vector<16x128xf32>
    %204 = vector.broadcast %202 : vector<1x128xf32> to vector<16x128xf32>
    %205 = arith.mulf %204, %203 : vector<16x128xf32>
    %206 = arith.addf %201, %205 : vector<16x128xf32>
    %c38 = arith.constant 38 : index
    %c0_49 = arith.constant 0 : index
    %207 = vector.load %arg5[%c38, %c0_49] : memref<64x128xf32, #tpu.memory_space<vmem>>, vector<1x128xf32>
    %208 = vector.extract_strided_slice %15 {offsets = [26, 0], sizes = [16, 128], strides = [1, 1]} : vector<80x128xf32> to vector<16x128xf32>
    %209 = vector.broadcast %207 : vector<1x128xf32> to vector<16x128xf32>
    %210 = arith.mulf %209, %208 : vector<16x128xf32>
    %211 = arith.addf %206, %210 : vector<16x128xf32>
    %c39 = arith.constant 39 : index
    %c0_50 = arith.constant 0 : index
    %212 = vector.load %arg5[%c39, %c0_50] : memref<64x128xf32, #tpu.memory_space<vmem>>, vector<1x128xf32>
    %213 = vector.extract_strided_slice %15 {offsets = [25, 0], sizes = [16, 128], strides = [1, 1]} : vector<80x128xf32> to vector<16x128xf32>
    %214 = vector.broadcast %212 : vector<1x128xf32> to vector<16x128xf32>
    %215 = arith.mulf %214, %213 : vector<16x128xf32>
    %216 = arith.addf %211, %215 : vector<16x128xf32>
    %c40 = arith.constant 40 : index
    %c0_51 = arith.constant 0 : index
    %217 = vector.load %arg5[%c40, %c0_51] : memref<64x128xf32, #tpu.memory_space<vmem>>, vector<1x128xf32>
    %218 = vector.extract_strided_slice %15 {offsets = [24, 0], sizes = [16, 128], strides = [1, 1]} : vector<80x128xf32> to vector<16x128xf32>
    %219 = vector.broadcast %217 : vector<1x128xf32> to vector<16x128xf32>
    %220 = arith.mulf %219, %218 : vector<16x128xf32>
    %221 = arith.addf %216, %220 : vector<16x128xf32>
    %c41 = arith.constant 41 : index
    %c0_52 = arith.constant 0 : index
    %222 = vector.load %arg5[%c41, %c0_52] : memref<64x128xf32, #tpu.memory_space<vmem>>, vector<1x128xf32>
    %223 = vector.extract_strided_slice %15 {offsets = [23, 0], sizes = [16, 128], strides = [1, 1]} : vector<80x128xf32> to vector<16x128xf32>
    %224 = vector.broadcast %222 : vector<1x128xf32> to vector<16x128xf32>
    %225 = arith.mulf %224, %223 : vector<16x128xf32>
    %226 = arith.addf %221, %225 : vector<16x128xf32>
    %c42 = arith.constant 42 : index
    %c0_53 = arith.constant 0 : index
    %227 = vector.load %arg5[%c42, %c0_53] : memref<64x128xf32, #tpu.memory_space<vmem>>, vector<1x128xf32>
    %228 = vector.extract_strided_slice %15 {offsets = [22, 0], sizes = [16, 128], strides = [1, 1]} : vector<80x128xf32> to vector<16x128xf32>
    %229 = vector.broadcast %227 : vector<1x128xf32> to vector<16x128xf32>
    %230 = arith.mulf %229, %228 : vector<16x128xf32>
    %231 = arith.addf %226, %230 : vector<16x128xf32>
    %c43 = arith.constant 43 : index
    %c0_54 = arith.constant 0 : index
    %232 = vector.load %arg5[%c43, %c0_54] : memref<64x128xf32, #tpu.memory_space<vmem>>, vector<1x128xf32>
    %233 = vector.extract_strided_slice %15 {offsets = [21, 0], sizes = [16, 128], strides = [1, 1]} : vector<80x128xf32> to vector<16x128xf32>
    %234 = vector.broadcast %232 : vector<1x128xf32> to vector<16x128xf32>
    %235 = arith.mulf %234, %233 : vector<16x128xf32>
    %236 = arith.addf %231, %235 : vector<16x128xf32>
    %c44 = arith.constant 44 : index
    %c0_55 = arith.constant 0 : index
    %237 = vector.load %arg5[%c44, %c0_55] : memref<64x128xf32, #tpu.memory_space<vmem>>, vector<1x128xf32>
    %238 = vector.extract_strided_slice %15 {offsets = [20, 0], sizes = [16, 128], strides = [1, 1]} : vector<80x128xf32> to vector<16x128xf32>
    %239 = vector.broadcast %237 : vector<1x128xf32> to vector<16x128xf32>
    %240 = arith.mulf %239, %238 : vector<16x128xf32>
    %241 = arith.addf %236, %240 : vector<16x128xf32>
    %c45 = arith.constant 45 : index
    %c0_56 = arith.constant 0 : index
    %242 = vector.load %arg5[%c45, %c0_56] : memref<64x128xf32, #tpu.memory_space<vmem>>, vector<1x128xf32>
    %243 = vector.extract_strided_slice %15 {offsets = [19, 0], sizes = [16, 128], strides = [1, 1]} : vector<80x128xf32> to vector<16x128xf32>
    %244 = vector.broadcast %242 : vector<1x128xf32> to vector<16x128xf32>
    %245 = arith.mulf %244, %243 : vector<16x128xf32>
    %246 = arith.addf %241, %245 : vector<16x128xf32>
    %c46 = arith.constant 46 : index
    %c0_57 = arith.constant 0 : index
    %247 = vector.load %arg5[%c46, %c0_57] : memref<64x128xf32, #tpu.memory_space<vmem>>, vector<1x128xf32>
    %248 = vector.extract_strided_slice %15 {offsets = [18, 0], sizes = [16, 128], strides = [1, 1]} : vector<80x128xf32> to vector<16x128xf32>
    %249 = vector.broadcast %247 : vector<1x128xf32> to vector<16x128xf32>
    %250 = arith.mulf %249, %248 : vector<16x128xf32>
    %251 = arith.addf %246, %250 : vector<16x128xf32>
    %c47 = arith.constant 47 : index
    %c0_58 = arith.constant 0 : index
    %252 = vector.load %arg5[%c47, %c0_58] : memref<64x128xf32, #tpu.memory_space<vmem>>, vector<1x128xf32>
    %253 = vector.extract_strided_slice %15 {offsets = [17, 0], sizes = [16, 128], strides = [1, 1]} : vector<80x128xf32> to vector<16x128xf32>
    %254 = vector.broadcast %252 : vector<1x128xf32> to vector<16x128xf32>
    %255 = arith.mulf %254, %253 : vector<16x128xf32>
    %256 = arith.addf %251, %255 : vector<16x128xf32>
    %c48 = arith.constant 48 : index
    %c0_59 = arith.constant 0 : index
    %257 = vector.load %arg5[%c48, %c0_59] : memref<64x128xf32, #tpu.memory_space<vmem>>, vector<1x128xf32>
    %258 = vector.extract_strided_slice %15 {offsets = [16, 0], sizes = [16, 128], strides = [1, 1]} : vector<80x128xf32> to vector<16x128xf32>
    %259 = vector.broadcast %257 : vector<1x128xf32> to vector<16x128xf32>
    %260 = arith.mulf %259, %258 : vector<16x128xf32>
    %261 = arith.addf %256, %260 : vector<16x128xf32>
    %c49 = arith.constant 49 : index
    %c0_60 = arith.constant 0 : index
    %262 = vector.load %arg5[%c49, %c0_60] : memref<64x128xf32, #tpu.memory_space<vmem>>, vector<1x128xf32>
    %263 = vector.extract_strided_slice %15 {offsets = [15, 0], sizes = [16, 128], strides = [1, 1]} : vector<80x128xf32> to vector<16x128xf32>
    %264 = vector.broadcast %262 : vector<1x128xf32> to vector<16x128xf32>
    %265 = arith.mulf %264, %263 : vector<16x128xf32>
    %266 = arith.addf %261, %265 : vector<16x128xf32>
    %c50 = arith.constant 50 : index
    %c0_61 = arith.constant 0 : index
    %267 = vector.load %arg5[%c50, %c0_61] : memref<64x128xf32, #tpu.memory_space<vmem>>, vector<1x128xf32>
    %268 = vector.extract_strided_slice %15 {offsets = [14, 0], sizes = [16, 128], strides = [1, 1]} : vector<80x128xf32> to vector<16x128xf32>
    %269 = vector.broadcast %267 : vector<1x128xf32> to vector<16x128xf32>
    %270 = arith.mulf %269, %268 : vector<16x128xf32>
    %271 = arith.addf %266, %270 : vector<16x128xf32>
    %c51 = arith.constant 51 : index
    %c0_62 = arith.constant 0 : index
    %272 = vector.load %arg5[%c51, %c0_62] : memref<64x128xf32, #tpu.memory_space<vmem>>, vector<1x128xf32>
    %273 = vector.extract_strided_slice %15 {offsets = [13, 0], sizes = [16, 128], strides = [1, 1]} : vector<80x128xf32> to vector<16x128xf32>
    %274 = vector.broadcast %272 : vector<1x128xf32> to vector<16x128xf32>
    %275 = arith.mulf %274, %273 : vector<16x128xf32>
    %276 = arith.addf %271, %275 : vector<16x128xf32>
    %c52 = arith.constant 52 : index
    %c0_63 = arith.constant 0 : index
    %277 = vector.load %arg5[%c52, %c0_63] : memref<64x128xf32, #tpu.memory_space<vmem>>, vector<1x128xf32>
    %278 = vector.extract_strided_slice %15 {offsets = [12, 0], sizes = [16, 128], strides = [1, 1]} : vector<80x128xf32> to vector<16x128xf32>
    %279 = vector.broadcast %277 : vector<1x128xf32> to vector<16x128xf32>
    %280 = arith.mulf %279, %278 : vector<16x128xf32>
    %281 = arith.addf %276, %280 : vector<16x128xf32>
    %c53 = arith.constant 53 : index
    %c0_64 = arith.constant 0 : index
    %282 = vector.load %arg5[%c53, %c0_64] : memref<64x128xf32, #tpu.memory_space<vmem>>, vector<1x128xf32>
    %283 = vector.extract_strided_slice %15 {offsets = [11, 0], sizes = [16, 128], strides = [1, 1]} : vector<80x128xf32> to vector<16x128xf32>
    %284 = vector.broadcast %282 : vector<1x128xf32> to vector<16x128xf32>
    %285 = arith.mulf %284, %283 : vector<16x128xf32>
    %286 = arith.addf %281, %285 : vector<16x128xf32>
    %c54 = arith.constant 54 : index
    %c0_65 = arith.constant 0 : index
    %287 = vector.load %arg5[%c54, %c0_65] : memref<64x128xf32, #tpu.memory_space<vmem>>, vector<1x128xf32>
    %288 = vector.extract_strided_slice %15 {offsets = [10, 0], sizes = [16, 128], strides = [1, 1]} : vector<80x128xf32> to vector<16x128xf32>
    %289 = vector.broadcast %287 : vector<1x128xf32> to vector<16x128xf32>
    %290 = arith.mulf %289, %288 : vector<16x128xf32>
    %291 = arith.addf %286, %290 : vector<16x128xf32>
    %c55 = arith.constant 55 : index
    %c0_66 = arith.constant 0 : index
    %292 = vector.load %arg5[%c55, %c0_66] : memref<64x128xf32, #tpu.memory_space<vmem>>, vector<1x128xf32>
    %293 = vector.extract_strided_slice %15 {offsets = [9, 0], sizes = [16, 128], strides = [1, 1]} : vector<80x128xf32> to vector<16x128xf32>
    %294 = vector.broadcast %292 : vector<1x128xf32> to vector<16x128xf32>
    %295 = arith.mulf %294, %293 : vector<16x128xf32>
    %296 = arith.addf %291, %295 : vector<16x128xf32>
    %c56 = arith.constant 56 : index
    %c0_67 = arith.constant 0 : index
    %297 = vector.load %arg5[%c56, %c0_67] : memref<64x128xf32, #tpu.memory_space<vmem>>, vector<1x128xf32>
    %298 = vector.extract_strided_slice %15 {offsets = [8, 0], sizes = [16, 128], strides = [1, 1]} : vector<80x128xf32> to vector<16x128xf32>
    %299 = vector.broadcast %297 : vector<1x128xf32> to vector<16x128xf32>
    %300 = arith.mulf %299, %298 : vector<16x128xf32>
    %301 = arith.addf %296, %300 : vector<16x128xf32>
    %c57 = arith.constant 57 : index
    %c0_68 = arith.constant 0 : index
    %302 = vector.load %arg5[%c57, %c0_68] : memref<64x128xf32, #tpu.memory_space<vmem>>, vector<1x128xf32>
    %303 = vector.extract_strided_slice %15 {offsets = [7, 0], sizes = [16, 128], strides = [1, 1]} : vector<80x128xf32> to vector<16x128xf32>
    %304 = vector.broadcast %302 : vector<1x128xf32> to vector<16x128xf32>
    %305 = arith.mulf %304, %303 : vector<16x128xf32>
    %306 = arith.addf %301, %305 : vector<16x128xf32>
    %c58 = arith.constant 58 : index
    %c0_69 = arith.constant 0 : index
    %307 = vector.load %arg5[%c58, %c0_69] : memref<64x128xf32, #tpu.memory_space<vmem>>, vector<1x128xf32>
    %308 = vector.extract_strided_slice %15 {offsets = [6, 0], sizes = [16, 128], strides = [1, 1]} : vector<80x128xf32> to vector<16x128xf32>
    %309 = vector.broadcast %307 : vector<1x128xf32> to vector<16x128xf32>
    %310 = arith.mulf %309, %308 : vector<16x128xf32>
    %311 = arith.addf %306, %310 : vector<16x128xf32>
    %c59 = arith.constant 59 : index
    %c0_70 = arith.constant 0 : index
    %312 = vector.load %arg5[%c59, %c0_70] : memref<64x128xf32, #tpu.memory_space<vmem>>, vector<1x128xf32>
    %313 = vector.extract_strided_slice %15 {offsets = [5, 0], sizes = [16, 128], strides = [1, 1]} : vector<80x128xf32> to vector<16x128xf32>
    %314 = vector.broadcast %312 : vector<1x128xf32> to vector<16x128xf32>
    %315 = arith.mulf %314, %313 : vector<16x128xf32>
    %316 = arith.addf %311, %315 : vector<16x128xf32>
    %c60 = arith.constant 60 : index
    %c0_71 = arith.constant 0 : index
    %317 = vector.load %arg5[%c60, %c0_71] : memref<64x128xf32, #tpu.memory_space<vmem>>, vector<1x128xf32>
    %318 = vector.extract_strided_slice %15 {offsets = [4, 0], sizes = [16, 128], strides = [1, 1]} : vector<80x128xf32> to vector<16x128xf32>
    %319 = vector.broadcast %317 : vector<1x128xf32> to vector<16x128xf32>
    %320 = arith.mulf %319, %318 : vector<16x128xf32>
    %321 = arith.addf %316, %320 : vector<16x128xf32>
    %c61 = arith.constant 61 : index
    %c0_72 = arith.constant 0 : index
    %322 = vector.load %arg5[%c61, %c0_72] : memref<64x128xf32, #tpu.memory_space<vmem>>, vector<1x128xf32>
    %323 = vector.extract_strided_slice %15 {offsets = [3, 0], sizes = [16, 128], strides = [1, 1]} : vector<80x128xf32> to vector<16x128xf32>
    %324 = vector.broadcast %322 : vector<1x128xf32> to vector<16x128xf32>
    %325 = arith.mulf %324, %323 : vector<16x128xf32>
    %326 = arith.addf %321, %325 : vector<16x128xf32>
    %c62 = arith.constant 62 : index
    %c0_73 = arith.constant 0 : index
    %327 = vector.load %arg5[%c62, %c0_73] : memref<64x128xf32, #tpu.memory_space<vmem>>, vector<1x128xf32>
    %328 = vector.extract_strided_slice %15 {offsets = [2, 0], sizes = [16, 128], strides = [1, 1]} : vector<80x128xf32> to vector<16x128xf32>
    %329 = vector.broadcast %327 : vector<1x128xf32> to vector<16x128xf32>
    %330 = arith.mulf %329, %328 : vector<16x128xf32>
    %331 = arith.addf %326, %330 : vector<16x128xf32>
    %c63 = arith.constant 63 : index
    %c0_74 = arith.constant 0 : index
    %332 = vector.load %arg5[%c63, %c0_74] : memref<64x128xf32, #tpu.memory_space<vmem>>, vector<1x128xf32>
    %333 = vector.extract_strided_slice %15 {offsets = [1, 0], sizes = [16, 128], strides = [1, 1]} : vector<80x128xf32> to vector<16x128xf32>
    %334 = vector.broadcast %332 : vector<1x128xf32> to vector<16x128xf32>
    %335 = arith.mulf %334, %333 : vector<16x128xf32>
    %336 = arith.addf %331, %335 : vector<16x128xf32>
    %337 = vector.extract_strided_slice %15 {offsets = [16, 0], sizes = [64, 128], strides = [1, 1]} : vector<80x128xf32> to vector<64x128xf32>
    %c0_75 = arith.constant 0 : index
    %c0_76 = arith.constant 0 : index
    %338 = vector.load %arg18[%c0_75, %c0_76] : memref<64x128xf32, #tpu.memory_space<vmem>>, vector<64x128xf32>
    tpu.vector_store %arg18[%c0_75, %c0_76], %337 {strides = array<i32>} : memref<64x128xf32, #tpu.memory_space<vmem>>, vector<64x128xf32>,
    %c0_77 = arith.constant 0 : index
    %c0_78 = arith.constant 0 : index
    %339 = vector.load %arg6[%c0_77, %c0_78] : memref<1x128xf32, #tpu.memory_space<vmem>>, vector<1x128xf32>
    %340 = vector.broadcast %339 : vector<1x128xf32> to vector<16x128xf32>
    %341 = arith.mulf %340, %12 : vector<16x128xf32>
    %342 = arith.addf %336, %341 : vector<16x128xf32>
    %343 = arith.mulf %342, %13 : vector<16x128xf32>
    %c0_79 = arith.constant 0 : index
    %c0_80 = arith.constant 0 : index
    %344 = vector.load %arg19[%c0_79, %c0_80] : memref<32x128xf32, #tpu.memory_space<vmem>>, vector<32x128xf32>
    %c0_81 = arith.constant 0 : index
    %c0_82 = arith.constant 0 : index
    %345 = vector.load %arg20[%c0_81, %c0_82] : memref<32x128xf32, #tpu.memory_space<vmem>>, vector<32x128xf32>
    %cst_83 = arith.constant 0.000000e+00 : f32
    %346 = vector.broadcast %cst_83 : f32 to vector<16x128xf32>
    %c0_84 = arith.constant 0 : index
    %c0_85 = arith.constant 0 : index
    %c0_86 = arith.constant 0 : index
    %347 = vector.load %arg7[%c0_84, %c0_85, %c0_86] : memref<16x16x128xf32, #tpu.memory_space<vmem>>, vector<1x16x128xf32>
    %348 = vector.shape_cast %347 : vector<1x16x128xf32> to vector<16x128xf32>
    %349 = vector.extract_strided_slice %343 {offsets = [0, 0], sizes = [1, 128], strides = [1, 1]} : vector<16x128xf32> to vector<1x128xf32>
    %350 = vector.broadcast %349 : vector<1x128xf32> to vector<16x128xf32>
    %351 = arith.mulf %348, %350 : vector<16x128xf32>
    %352 = arith.addf %346, %351 : vector<16x128xf32>
    %c1_87 = arith.constant 1 : index
    %c0_88 = arith.constant 0 : index
    %c0_89 = arith.constant 0 : index
    %353 = vector.load %arg7[%c1_87, %c0_88, %c0_89] : memref<16x16x128xf32, #tpu.memory_space<vmem>>, vector<1x16x128xf32>
    %354 = vector.shape_cast %353 : vector<1x16x128xf32> to vector<16x128xf32>
    %355 = vector.extract_strided_slice %343 {offsets = [1, 0], sizes = [1, 128], strides = [1, 1]} : vector<16x128xf32> to vector<1x128xf32>
    %356 = vector.broadcast %355 : vector<1x128xf32> to vector<16x128xf32>
    %357 = arith.mulf %354, %356 : vector<16x128xf32>
    %358 = arith.addf %352, %357 : vector<16x128xf32>
    %c2_90 = arith.constant 2 : index
    %c0_91 = arith.constant 0 : index
    %c0_92 = arith.constant 0 : index
    %359 = vector.load %arg7[%c2_90, %c0_91, %c0_92] : memref<16x16x128xf32, #tpu.memory_space<vmem>>, vector<1x16x128xf32>
    %360 = vector.shape_cast %359 : vector<1x16x128xf32> to vector<16x128xf32>
    %361 = vector.extract_strided_slice %343 {offsets = [2, 0], sizes = [1, 128], strides = [1, 1]} : vector<16x128xf32> to vector<1x128xf32>
    %362 = vector.broadcast %361 : vector<1x128xf32> to vector<16x128xf32>
    %363 = arith.mulf %360, %362 : vector<16x128xf32>
    %364 = arith.addf %358, %363 : vector<16x128xf32>
    %c3_93 = arith.constant 3 : index
    %c0_94 = arith.constant 0 : index
    %c0_95 = arith.constant 0 : index
    %365 = vector.load %arg7[%c3_93, %c0_94, %c0_95] : memref<16x16x128xf32, #tpu.memory_space<vmem>>, vector<1x16x128xf32>
    %366 = vector.shape_cast %365 : vector<1x16x128xf32> to vector<16x128xf32>
    %367 = vector.extract_strided_slice %343 {offsets = [3, 0], sizes = [1, 128], strides = [1, 1]} : vector<16x128xf32> to vector<1x128xf32>
    %368 = vector.broadcast %367 : vector<1x128xf32> to vector<16x128xf32>
    %369 = arith.mulf %366, %368 : vector<16x128xf32>
    %370 = arith.addf %364, %369 : vector<16x128xf32>
    %c4_96 = arith.constant 4 : index
    %c0_97 = arith.constant 0 : index
    %c0_98 = arith.constant 0 : index
    %371 = vector.load %arg7[%c4_96, %c0_97, %c0_98] : memref<16x16x128xf32, #tpu.memory_space<vmem>>, vector<1x16x128xf32>
    %372 = vector.shape_cast %371 : vector<1x16x128xf32> to vector<16x128xf32>
    %373 = vector.extract_strided_slice %343 {offsets = [4, 0], sizes = [1, 128], strides = [1, 1]} : vector<16x128xf32> to vector<1x128xf32>
    %374 = vector.broadcast %373 : vector<1x128xf32> to vector<16x128xf32>
    %375 = arith.mulf %372, %374 : vector<16x128xf32>
    %376 = arith.addf %370, %375 : vector<16x128xf32>
    %c5_99 = arith.constant 5 : index
    %c0_100 = arith.constant 0 : index
    %c0_101 = arith.constant 0 : index
    %377 = vector.load %arg7[%c5_99, %c0_100, %c0_101] : memref<16x16x128xf32, #tpu.memory_space<vmem>>, vector<1x16x128xf32>
    %378 = vector.shape_cast %377 : vector<1x16x128xf32> to vector<16x128xf32>
    %379 = vector.extract_strided_slice %343 {offsets = [5, 0], sizes = [1, 128], strides = [1, 1]} : vector<16x128xf32> to vector<1x128xf32>
    %380 = vector.broadcast %379 : vector<1x128xf32> to vector<16x128xf32>
    %381 = arith.mulf %378, %380 : vector<16x128xf32>
    %382 = arith.addf %376, %381 : vector<16x128xf32>
    %c6_102 = arith.constant 6 : index
    %c0_103 = arith.constant 0 : index
    %c0_104 = arith.constant 0 : index
    %383 = vector.load %arg7[%c6_102, %c0_103, %c0_104] : memref<16x16x128xf32, #tpu.memory_space<vmem>>, vector<1x16x128xf32>
    %384 = vector.shape_cast %383 : vector<1x16x128xf32> to vector<16x128xf32>
    %385 = vector.extract_strided_slice %343 {offsets = [6, 0], sizes = [1, 128], strides = [1, 1]} : vector<16x128xf32> to vector<1x128xf32>
    %386 = vector.broadcast %385 : vector<1x128xf32> to vector<16x128xf32>
    %387 = arith.mulf %384, %386 : vector<16x128xf32>
    %388 = arith.addf %382, %387 : vector<16x128xf32>
    %c7_105 = arith.constant 7 : index
    %c0_106 = arith.constant 0 : index
    %c0_107 = arith.constant 0 : index
    %389 = vector.load %arg7[%c7_105, %c0_106, %c0_107] : memref<16x16x128xf32, #tpu.memory_space<vmem>>, vector<1x16x128xf32>
    %390 = vector.shape_cast %389 : vector<1x16x128xf32> to vector<16x128xf32>
    %391 = vector.extract_strided_slice %343 {offsets = [7, 0], sizes = [1, 128], strides = [1, 1]} : vector<16x128xf32> to vector<1x128xf32>
    %392 = vector.broadcast %391 : vector<1x128xf32> to vector<16x128xf32>
    %393 = arith.mulf %390, %392 : vector<16x128xf32>
    %394 = arith.addf %388, %393 : vector<16x128xf32>
    %c8_108 = arith.constant 8 : index
    %c0_109 = arith.constant 0 : index
    %c0_110 = arith.constant 0 : index
    %395 = vector.load %arg7[%c8_108, %c0_109, %c0_110] : memref<16x16x128xf32, #tpu.memory_space<vmem>>, vector<1x16x128xf32>
    %396 = vector.shape_cast %395 : vector<1x16x128xf32> to vector<16x128xf32>
    %397 = vector.extract_strided_slice %343 {offsets = [8, 0], sizes = [1, 128], strides = [1, 1]} : vector<16x128xf32> to vector<1x128xf32>
    %398 = vector.broadcast %397 : vector<1x128xf32> to vector<16x128xf32>
    %399 = arith.mulf %396, %398 : vector<16x128xf32>
    %400 = arith.addf %394, %399 : vector<16x128xf32>
    %c9_111 = arith.constant 9 : index
    %c0_112 = arith.constant 0 : index
    %c0_113 = arith.constant 0 : index
    %401 = vector.load %arg7[%c9_111, %c0_112, %c0_113] : memref<16x16x128xf32, #tpu.memory_space<vmem>>, vector<1x16x128xf32>
    %402 = vector.shape_cast %401 : vector<1x16x128xf32> to vector<16x128xf32>
    %403 = vector.extract_strided_slice %343 {offsets = [9, 0], sizes = [1, 128], strides = [1, 1]} : vector<16x128xf32> to vector<1x128xf32>
    %404 = vector.broadcast %403 : vector<1x128xf32> to vector<16x128xf32>
    %405 = arith.mulf %402, %404 : vector<16x128xf32>
    %406 = arith.addf %400, %405 : vector<16x128xf32>
    %c10_114 = arith.constant 10 : index
    %c0_115 = arith.constant 0 : index
    %c0_116 = arith.constant 0 : index
    %407 = vector.load %arg7[%c10_114, %c0_115, %c0_116] : memref<16x16x128xf32, #tpu.memory_space<vmem>>, vector<1x16x128xf32>
    %408 = vector.shape_cast %407 : vector<1x16x128xf32> to vector<16x128xf32>
    %409 = vector.extract_strided_slice %343 {offsets = [10, 0], sizes = [1, 128], strides = [1, 1]} : vector<16x128xf32> to vector<1x128xf32>
    %410 = vector.broadcast %409 : vector<1x128xf32> to vector<16x128xf32>
    %411 = arith.mulf %408, %410 : vector<16x128xf32>
    %412 = arith.addf %406, %411 : vector<16x128xf32>
    %c11_117 = arith.constant 11 : index
    %c0_118 = arith.constant 0 : index
    %c0_119 = arith.constant 0 : index
    %413 = vector.load %arg7[%c11_117, %c0_118, %c0_119] : memref<16x16x128xf32, #tpu.memory_space<vmem>>, vector<1x16x128xf32>
    %414 = vector.shape_cast %413 : vector<1x16x128xf32> to vector<16x128xf32>
    %415 = vector.extract_strided_slice %343 {offsets = [11, 0], sizes = [1, 128], strides = [1, 1]} : vector<16x128xf32> to vector<1x128xf32>
    %416 = vector.broadcast %415 : vector<1x128xf32> to vector<16x128xf32>
    %417 = arith.mulf %414, %416 : vector<16x128xf32>
    %418 = arith.addf %412, %417 : vector<16x128xf32>
    %c12_120 = arith.constant 12 : index
    %c0_121 = arith.constant 0 : index
    %c0_122 = arith.constant 0 : index
    %419 = vector.load %arg7[%c12_120, %c0_121, %c0_122] : memref<16x16x128xf32, #tpu.memory_space<vmem>>, vector<1x16x128xf32>
    %420 = vector.shape_cast %419 : vector<1x16x128xf32> to vector<16x128xf32>
    %421 = vector.extract_strided_slice %343 {offsets = [12, 0], sizes = [1, 128], strides = [1, 1]} : vector<16x128xf32> to vector<1x128xf32>
    %422 = vector.broadcast %421 : vector<1x128xf32> to vector<16x128xf32>
    %423 = arith.mulf %420, %422 : vector<16x128xf32>
    %424 = arith.addf %418, %423 : vector<16x128xf32>
    %c13_123 = arith.constant 13 : index
    %c0_124 = arith.constant 0 : index
    %c0_125 = arith.constant 0 : index
    %425 = vector.load %arg7[%c13_123, %c0_124, %c0_125] : memref<16x16x128xf32, #tpu.memory_space<vmem>>, vector<1x16x128xf32>
    %426 = vector.shape_cast %425 : vector<1x16x128xf32> to vector<16x128xf32>
    %427 = vector.extract_strided_slice %343 {offsets = [13, 0], sizes = [1, 128], strides = [1, 1]} : vector<16x128xf32> to vector<1x128xf32>
    %428 = vector.broadcast %427 : vector<1x128xf32> to vector<16x128xf32>
    %429 = arith.mulf %426, %428 : vector<16x128xf32>
    %430 = arith.addf %424, %429 : vector<16x128xf32>
    %c14_126 = arith.constant 14 : index
    %c0_127 = arith.constant 0 : index
    %c0_128 = arith.constant 0 : index
    %431 = vector.load %arg7[%c14_126, %c0_127, %c0_128] : memref<16x16x128xf32, #tpu.memory_space<vmem>>, vector<1x16x128xf32>
    %432 = vector.shape_cast %431 : vector<1x16x128xf32> to vector<16x128xf32>
    %433 = vector.extract_strided_slice %343 {offsets = [14, 0], sizes = [1, 128], strides = [1, 1]} : vector<16x128xf32> to vector<1x128xf32>
    %434 = vector.broadcast %433 : vector<1x128xf32> to vector<16x128xf32>
    %435 = arith.mulf %432, %434 : vector<16x128xf32>
    %436 = arith.addf %430, %435 : vector<16x128xf32>
    %c15_129 = arith.constant 15 : index
    %c0_130 = arith.constant 0 : index
    %c0_131 = arith.constant 0 : index
    %437 = vector.load %arg7[%c15_129, %c0_130, %c0_131] : memref<16x16x128xf32, #tpu.memory_space<vmem>>, vector<1x16x128xf32>
    %438 = vector.shape_cast %437 : vector<1x16x128xf32> to vector<16x128xf32>
    %439 = vector.extract_strided_slice %343 {offsets = [15, 0], sizes = [1, 128], strides = [1, 1]} : vector<16x128xf32> to vector<1x128xf32>
    %440 = vector.broadcast %439 : vector<1x128xf32> to vector<16x128xf32>
    %441 = arith.mulf %438, %440 : vector<16x128xf32>
    %442 = arith.addf %436, %441 : vector<16x128xf32>
    %c0_132 = arith.constant 0 : index
    %c0_133 = arith.constant 0 : index
    %c0_134 = arith.constant 0 : index
    %443 = vector.load %arg8[%c0_132, %c0_133, %c0_134] : memref<32x16x128xf32, #tpu.memory_space<vmem>>, vector<1x16x128xf32>
    %444 = vector.shape_cast %443 : vector<1x16x128xf32> to vector<16x128xf32>
    %445 = vector.extract_strided_slice %344 {offsets = [0, 0], sizes = [1, 128], strides = [1, 1]} : vector<32x128xf32> to vector<1x128xf32>
    %446 = vector.broadcast %445 : vector<1x128xf32> to vector<16x128xf32>
    %447 = arith.mulf %444, %446 : vector<16x128xf32>
    %c0_135 = arith.constant 0 : index
    %c0_136 = arith.constant 0 : index
    %c0_137 = arith.constant 0 : index
    %448 = vector.load %arg9[%c0_135, %c0_136, %c0_137] : memref<32x16x128xf32, #tpu.memory_space<vmem>>, vector<1x16x128xf32>
    %449 = vector.shape_cast %448 : vector<1x16x128xf32> to vector<16x128xf32>
    %450 = vector.extract_strided_slice %345 {offsets = [0, 0], sizes = [1, 128], strides = [1, 1]} : vector<32x128xf32> to vector<1x128xf32>
    %451 = vector.broadcast %450 : vector<1x128xf32> to vector<16x128xf32>
    %452 = arith.mulf %449, %451 : vector<16x128xf32>
    %453 = arith.subf %447, %452 : vector<16x128xf32>
    %454 = arith.addf %442, %453 : vector<16x128xf32>
    %c1_138 = arith.constant 1 : index
    %c0_139 = arith.constant 0 : index
    %c0_140 = arith.constant 0 : index
    %455 = vector.load %arg8[%c1_138, %c0_139, %c0_140] : memref<32x16x128xf32, #tpu.memory_space<vmem>>, vector<1x16x128xf32>
    %456 = vector.shape_cast %455 : vector<1x16x128xf32> to vector<16x128xf32>
    %457 = vector.extract_strided_slice %344 {offsets = [1, 0], sizes = [1, 128], strides = [1, 1]} : vector<32x128xf32> to vector<1x128xf32>
    %458 = vector.broadcast %457 : vector<1x128xf32> to vector<16x128xf32>
    %459 = arith.mulf %456, %458 : vector<16x128xf32>
    %c1_141 = arith.constant 1 : index
    %c0_142 = arith.constant 0 : index
    %c0_143 = arith.constant 0 : index
    %460 = vector.load %arg9[%c1_141, %c0_142, %c0_143] : memref<32x16x128xf32, #tpu.memory_space<vmem>>, vector<1x16x128xf32>
    %461 = vector.shape_cast %460 : vector<1x16x128xf32> to vector<16x128xf32>
    %462 = vector.extract_strided_slice %345 {offsets = [1, 0], sizes = [1, 128], strides = [1, 1]} : vector<32x128xf32> to vector<1x128xf32>
    %463 = vector.broadcast %462 : vector<1x128xf32> to vector<16x128xf32>
    %464 = arith.mulf %461, %463 : vector<16x128xf32>
    %465 = arith.subf %459, %464 : vector<16x128xf32>
    %466 = arith.addf %454, %465 : vector<16x128xf32>
    %c2_144 = arith.constant 2 : index
    %c0_145 = arith.constant 0 : index
    %c0_146 = arith.constant 0 : index
    %467 = vector.load %arg8[%c2_144, %c0_145, %c0_146] : memref<32x16x128xf32, #tpu.memory_space<vmem>>, vector<1x16x128xf32>
    %468 = vector.shape_cast %467 : vector<1x16x128xf32> to vector<16x128xf32>
    %469 = vector.extract_strided_slice %344 {offsets = [2, 0], sizes = [1, 128], strides = [1, 1]} : vector<32x128xf32> to vector<1x128xf32>
    %470 = vector.broadcast %469 : vector<1x128xf32> to vector<16x128xf32>
    %471 = arith.mulf %468, %470 : vector<16x128xf32>
    %c2_147 = arith.constant 2 : index
    %c0_148 = arith.constant 0 : index
    %c0_149 = arith.constant 0 : index
    %472 = vector.load %arg9[%c2_147, %c0_148, %c0_149] : memref<32x16x128xf32, #tpu.memory_space<vmem>>, vector<1x16x128xf32>
    %473 = vector.shape_cast %472 : vector<1x16x128xf32> to vector<16x128xf32>
    %474 = vector.extract_strided_slice %345 {offsets = [2, 0], sizes = [1, 128], strides = [1, 1]} : vector<32x128xf32> to vector<1x128xf32>
    %475 = vector.broadcast %474 : vector<1x128xf32> to vector<16x128xf32>
    %476 = arith.mulf %473, %475 : vector<16x128xf32>
    %477 = arith.subf %471, %476 : vector<16x128xf32>
    %478 = arith.addf %466, %477 : vector<16x128xf32>
    %c3_150 = arith.constant 3 : index
    %c0_151 = arith.constant 0 : index
    %c0_152 = arith.constant 0 : index
    %479 = vector.load %arg8[%c3_150, %c0_151, %c0_152] : memref<32x16x128xf32, #tpu.memory_space<vmem>>, vector<1x16x128xf32>
    %480 = vector.shape_cast %479 : vector<1x16x128xf32> to vector<16x128xf32>
    %481 = vector.extract_strided_slice %344 {offsets = [3, 0], sizes = [1, 128], strides = [1, 1]} : vector<32x128xf32> to vector<1x128xf32>
    %482 = vector.broadcast %481 : vector<1x128xf32> to vector<16x128xf32>
    %483 = arith.mulf %480, %482 : vector<16x128xf32>
    %c3_153 = arith.constant 3 : index
    %c0_154 = arith.constant 0 : index
    %c0_155 = arith.constant 0 : index
    %484 = vector.load %arg9[%c3_153, %c0_154, %c0_155] : memref<32x16x128xf32, #tpu.memory_space<vmem>>, vector<1x16x128xf32>
    %485 = vector.shape_cast %484 : vector<1x16x128xf32> to vector<16x128xf32>
    %486 = vector.extract_strided_slice %345 {offsets = [3, 0], sizes = [1, 128], strides = [1, 1]} : vector<32x128xf32> to vector<1x128xf32>
    %487 = vector.broadcast %486 : vector<1x128xf32> to vector<16x128xf32>
    %488 = arith.mulf %485, %487 : vector<16x128xf32>
    %489 = arith.subf %483, %488 : vector<16x128xf32>
    %490 = arith.addf %478, %489 : vector<16x128xf32>
    %c4_156 = arith.constant 4 : index
    %c0_157 = arith.constant 0 : index
    %c0_158 = arith.constant 0 : index
    %491 = vector.load %arg8[%c4_156, %c0_157, %c0_158] : memref<32x16x128xf32, #tpu.memory_space<vmem>>, vector<1x16x128xf32>
    %492 = vector.shape_cast %491 : vector<1x16x128xf32> to vector<16x128xf32>
    %493 = vector.extract_strided_slice %344 {offsets = [4, 0], sizes = [1, 128], strides = [1, 1]} : vector<32x128xf32> to vector<1x128xf32>
    %494 = vector.broadcast %493 : vector<1x128xf32> to vector<16x128xf32>
    %495 = arith.mulf %492, %494 : vector<16x128xf32>
    %c4_159 = arith.constant 4 : index
    %c0_160 = arith.constant 0 : index
    %c0_161 = arith.constant 0 : index
    %496 = vector.load %arg9[%c4_159, %c0_160, %c0_161] : memref<32x16x128xf32, #tpu.memory_space<vmem>>, vector<1x16x128xf32>
    %497 = vector.shape_cast %496 : vector<1x16x128xf32> to vector<16x128xf32>
    %498 = vector.extract_strided_slice %345 {offsets = [4, 0], sizes = [1, 128], strides = [1, 1]} : vector<32x128xf32> to vector<1x128xf32>
    %499 = vector.broadcast %498 : vector<1x128xf32> to vector<16x128xf32>
    %500 = arith.mulf %497, %499 : vector<16x128xf32>
    %501 = arith.subf %495, %500 : vector<16x128xf32>
    %502 = arith.addf %490, %501 : vector<16x128xf32>
    %c5_162 = arith.constant 5 : index
    %c0_163 = arith.constant 0 : index
    %c0_164 = arith.constant 0 : index
    %503 = vector.load %arg8[%c5_162, %c0_163, %c0_164] : memref<32x16x128xf32, #tpu.memory_space<vmem>>, vector<1x16x128xf32>
    %504 = vector.shape_cast %503 : vector<1x16x128xf32> to vector<16x128xf32>
    %505 = vector.extract_strided_slice %344 {offsets = [5, 0], sizes = [1, 128], strides = [1, 1]} : vector<32x128xf32> to vector<1x128xf32>
    %506 = vector.broadcast %505 : vector<1x128xf32> to vector<16x128xf32>
    %507 = arith.mulf %504, %506 : vector<16x128xf32>
    %c5_165 = arith.constant 5 : index
    %c0_166 = arith.constant 0 : index
    %c0_167 = arith.constant 0 : index
    %508 = vector.load %arg9[%c5_165, %c0_166, %c0_167] : memref<32x16x128xf32, #tpu.memory_space<vmem>>, vector<1x16x128xf32>
    %509 = vector.shape_cast %508 : vector<1x16x128xf32> to vector<16x128xf32>
    %510 = vector.extract_strided_slice %345 {offsets = [5, 0], sizes = [1, 128], strides = [1, 1]} : vector<32x128xf32> to vector<1x128xf32>
    %511 = vector.broadcast %510 : vector<1x128xf32> to vector<16x128xf32>
    %512 = arith.mulf %509, %511 : vector<16x128xf32>
    %513 = arith.subf %507, %512 : vector<16x128xf32>
    %514 = arith.addf %502, %513 : vector<16x128xf32>
    %c6_168 = arith.constant 6 : index
    %c0_169 = arith.constant 0 : index
    %c0_170 = arith.constant 0 : index
    %515 = vector.load %arg8[%c6_168, %c0_169, %c0_170] : memref<32x16x128xf32, #tpu.memory_space<vmem>>, vector<1x16x128xf32>
    %516 = vector.shape_cast %515 : vector<1x16x128xf32> to vector<16x128xf32>
    %517 = vector.extract_strided_slice %344 {offsets = [6, 0], sizes = [1, 128], strides = [1, 1]} : vector<32x128xf32> to vector<1x128xf32>
    %518 = vector.broadcast %517 : vector<1x128xf32> to vector<16x128xf32>
    %519 = arith.mulf %516, %518 : vector<16x128xf32>
    %c6_171 = arith.constant 6 : index
    %c0_172 = arith.constant 0 : index
    %c0_173 = arith.constant 0 : index
    %520 = vector.load %arg9[%c6_171, %c0_172, %c0_173] : memref<32x16x128xf32, #tpu.memory_space<vmem>>, vector<1x16x128xf32>
    %521 = vector.shape_cast %520 : vector<1x16x128xf32> to vector<16x128xf32>
    %522 = vector.extract_strided_slice %345 {offsets = [6, 0], sizes = [1, 128], strides = [1, 1]} : vector<32x128xf32> to vector<1x128xf32>
    %523 = vector.broadcast %522 : vector<1x128xf32> to vector<16x128xf32>
    %524 = arith.mulf %521, %523 : vector<16x128xf32>
    %525 = arith.subf %519, %524 : vector<16x128xf32>
    %526 = arith.addf %514, %525 : vector<16x128xf32>
    %c7_174 = arith.constant 7 : index
    %c0_175 = arith.constant 0 : index
    %c0_176 = arith.constant 0 : index
    %527 = vector.load %arg8[%c7_174, %c0_175, %c0_176] : memref<32x16x128xf32, #tpu.memory_space<vmem>>, vector<1x16x128xf32>
    %528 = vector.shape_cast %527 : vector<1x16x128xf32> to vector<16x128xf32>
    %529 = vector.extract_strided_slice %344 {offsets = [7, 0], sizes = [1, 128], strides = [1, 1]} : vector<32x128xf32> to vector<1x128xf32>
    %530 = vector.broadcast %529 : vector<1x128xf32> to vector<16x128xf32>
    %531 = arith.mulf %528, %530 : vector<16x128xf32>
    %c7_177 = arith.constant 7 : index
    %c0_178 = arith.constant 0 : index
    %c0_179 = arith.constant 0 : index
    %532 = vector.load %arg9[%c7_177, %c0_178, %c0_179] : memref<32x16x128xf32, #tpu.memory_space<vmem>>, vector<1x16x128xf32>
    %533 = vector.shape_cast %532 : vector<1x16x128xf32> to vector<16x128xf32>
    %534 = vector.extract_strided_slice %345 {offsets = [7, 0], sizes = [1, 128], strides = [1, 1]} : vector<32x128xf32> to vector<1x128xf32>
    %535 = vector.broadcast %534 : vector<1x128xf32> to vector<16x128xf32>
    %536 = arith.mulf %533, %535 : vector<16x128xf32>
    %537 = arith.subf %531, %536 : vector<16x128xf32>
    %538 = arith.addf %526, %537 : vector<16x128xf32>
    %c8_180 = arith.constant 8 : index
    %c0_181 = arith.constant 0 : index
    %c0_182 = arith.constant 0 : index
    %539 = vector.load %arg8[%c8_180, %c0_181, %c0_182] : memref<32x16x128xf32, #tpu.memory_space<vmem>>, vector<1x16x128xf32>
    %540 = vector.shape_cast %539 : vector<1x16x128xf32> to vector<16x128xf32>
    %541 = vector.extract_strided_slice %344 {offsets = [8, 0], sizes = [1, 128], strides = [1, 1]} : vector<32x128xf32> to vector<1x128xf32>
    %542 = vector.broadcast %541 : vector<1x128xf32> to vector<16x128xf32>
    %543 = arith.mulf %540, %542 : vector<16x128xf32>
    %c8_183 = arith.constant 8 : index
    %c0_184 = arith.constant 0 : index
    %c0_185 = arith.constant 0 : index
    %544 = vector.load %arg9[%c8_183, %c0_184, %c0_185] : memref<32x16x128xf32, #tpu.memory_space<vmem>>, vector<1x16x128xf32>
    %545 = vector.shape_cast %544 : vector<1x16x128xf32> to vector<16x128xf32>
    %546 = vector.extract_strided_slice %345 {offsets = [8, 0], sizes = [1, 128], strides = [1, 1]} : vector<32x128xf32> to vector<1x128xf32>
    %547 = vector.broadcast %546 : vector<1x128xf32> to vector<16x128xf32>
    %548 = arith.mulf %545, %547 : vector<16x128xf32>
    %549 = arith.subf %543, %548 : vector<16x128xf32>
    %550 = arith.addf %538, %549 : vector<16x128xf32>
    %c9_186 = arith.constant 9 : index
    %c0_187 = arith.constant 0 : index
    %c0_188 = arith.constant 0 : index
    %551 = vector.load %arg8[%c9_186, %c0_187, %c0_188] : memref<32x16x128xf32, #tpu.memory_space<vmem>>, vector<1x16x128xf32>
    %552 = vector.shape_cast %551 : vector<1x16x128xf32> to vector<16x128xf32>
    %553 = vector.extract_strided_slice %344 {offsets = [9, 0], sizes = [1, 128], strides = [1, 1]} : vector<32x128xf32> to vector<1x128xf32>
    %554 = vector.broadcast %553 : vector<1x128xf32> to vector<16x128xf32>
    %555 = arith.mulf %552, %554 : vector<16x128xf32>
    %c9_189 = arith.constant 9 : index
    %c0_190 = arith.constant 0 : index
    %c0_191 = arith.constant 0 : index
    %556 = vector.load %arg9[%c9_189, %c0_190, %c0_191] : memref<32x16x128xf32, #tpu.memory_space<vmem>>, vector<1x16x128xf32>
    %557 = vector.shape_cast %556 : vector<1x16x128xf32> to vector<16x128xf32>
    %558 = vector.extract_strided_slice %345 {offsets = [9, 0], sizes = [1, 128], strides = [1, 1]} : vector<32x128xf32> to vector<1x128xf32>
    %559 = vector.broadcast %558 : vector<1x128xf32> to vector<16x128xf32>
    %560 = arith.mulf %557, %559 : vector<16x128xf32>
    %561 = arith.subf %555, %560 : vector<16x128xf32>
    %562 = arith.addf %550, %561 : vector<16x128xf32>
    %c10_192 = arith.constant 10 : index
    %c0_193 = arith.constant 0 : index
    %c0_194 = arith.constant 0 : index
    %563 = vector.load %arg8[%c10_192, %c0_193, %c0_194] : memref<32x16x128xf32, #tpu.memory_space<vmem>>, vector<1x16x128xf32>
    %564 = vector.shape_cast %563 : vector<1x16x128xf32> to vector<16x128xf32>
    %565 = vector.extract_strided_slice %344 {offsets = [10, 0], sizes = [1, 128], strides = [1, 1]} : vector<32x128xf32> to vector<1x128xf32>
    %566 = vector.broadcast %565 : vector<1x128xf32> to vector<16x128xf32>
    %567 = arith.mulf %564, %566 : vector<16x128xf32>
    %c10_195 = arith.constant 10 : index
    %c0_196 = arith.constant 0 : index
    %c0_197 = arith.constant 0 : index
    %568 = vector.load %arg9[%c10_195, %c0_196, %c0_197] : memref<32x16x128xf32, #tpu.memory_space<vmem>>, vector<1x16x128xf32>
    %569 = vector.shape_cast %568 : vector<1x16x128xf32> to vector<16x128xf32>
    %570 = vector.extract_strided_slice %345 {offsets = [10, 0], sizes = [1, 128], strides = [1, 1]} : vector<32x128xf32> to vector<1x128xf32>
    %571 = vector.broadcast %570 : vector<1x128xf32> to vector<16x128xf32>
    %572 = arith.mulf %569, %571 : vector<16x128xf32>
    %573 = arith.subf %567, %572 : vector<16x128xf32>
    %574 = arith.addf %562, %573 : vector<16x128xf32>
    %c11_198 = arith.constant 11 : index
    %c0_199 = arith.constant 0 : index
    %c0_200 = arith.constant 0 : index
    %575 = vector.load %arg8[%c11_198, %c0_199, %c0_200] : memref<32x16x128xf32, #tpu.memory_space<vmem>>, vector<1x16x128xf32>
    %576 = vector.shape_cast %575 : vector<1x16x128xf32> to vector<16x128xf32>
    %577 = vector.extract_strided_slice %344 {offsets = [11, 0], sizes = [1, 128], strides = [1, 1]} : vector<32x128xf32> to vector<1x128xf32>
    %578 = vector.broadcast %577 : vector<1x128xf32> to vector<16x128xf32>
    %579 = arith.mulf %576, %578 : vector<16x128xf32>
    %c11_201 = arith.constant 11 : index
    %c0_202 = arith.constant 0 : index
    %c0_203 = arith.constant 0 : index
    %580 = vector.load %arg9[%c11_201, %c0_202, %c0_203] : memref<32x16x128xf32, #tpu.memory_space<vmem>>, vector<1x16x128xf32>
    %581 = vector.shape_cast %580 : vector<1x16x128xf32> to vector<16x128xf32>
    %582 = vector.extract_strided_slice %345 {offsets = [11, 0], sizes = [1, 128], strides = [1, 1]} : vector<32x128xf32> to vector<1x128xf32>
    %583 = vector.broadcast %582 : vector<1x128xf32> to vector<16x128xf32>
    %584 = arith.mulf %581, %583 : vector<16x128xf32>
    %585 = arith.subf %579, %584 : vector<16x128xf32>
    %586 = arith.addf %574, %585 : vector<16x128xf32>
    %c12_204 = arith.constant 12 : index
    %c0_205 = arith.constant 0 : index
    %c0_206 = arith.constant 0 : index
    %587 = vector.load %arg8[%c12_204, %c0_205, %c0_206] : memref<32x16x128xf32, #tpu.memory_space<vmem>>, vector<1x16x128xf32>
    %588 = vector.shape_cast %587 : vector<1x16x128xf32> to vector<16x128xf32>
    %589 = vector.extract_strided_slice %344 {offsets = [12, 0], sizes = [1, 128], strides = [1, 1]} : vector<32x128xf32> to vector<1x128xf32>
    %590 = vector.broadcast %589 : vector<1x128xf32> to vector<16x128xf32>
    %591 = arith.mulf %588, %590 : vector<16x128xf32>
    %c12_207 = arith.constant 12 : index
    %c0_208 = arith.constant 0 : index
    %c0_209 = arith.constant 0 : index
    %592 = vector.load %arg9[%c12_207, %c0_208, %c0_209] : memref<32x16x128xf32, #tpu.memory_space<vmem>>, vector<1x16x128xf32>
    %593 = vector.shape_cast %592 : vector<1x16x128xf32> to vector<16x128xf32>
    %594 = vector.extract_strided_slice %345 {offsets = [12, 0], sizes = [1, 128], strides = [1, 1]} : vector<32x128xf32> to vector<1x128xf32>
    %595 = vector.broadcast %594 : vector<1x128xf32> to vector<16x128xf32>
    %596 = arith.mulf %593, %595 : vector<16x128xf32>
    %597 = arith.subf %591, %596 : vector<16x128xf32>
    %598 = arith.addf %586, %597 : vector<16x128xf32>
    %c13_210 = arith.constant 13 : index
    %c0_211 = arith.constant 0 : index
    %c0_212 = arith.constant 0 : index
    %599 = vector.load %arg8[%c13_210, %c0_211, %c0_212] : memref<32x16x128xf32, #tpu.memory_space<vmem>>, vector<1x16x128xf32>
    %600 = vector.shape_cast %599 : vector<1x16x128xf32> to vector<16x128xf32>
    %601 = vector.extract_strided_slice %344 {offsets = [13, 0], sizes = [1, 128], strides = [1, 1]} : vector<32x128xf32> to vector<1x128xf32>
    %602 = vector.broadcast %601 : vector<1x128xf32> to vector<16x128xf32>
    %603 = arith.mulf %600, %602 : vector<16x128xf32>
    %c13_213 = arith.constant 13 : index
    %c0_214 = arith.constant 0 : index
    %c0_215 = arith.constant 0 : index
    %604 = vector.load %arg9[%c13_213, %c0_214, %c0_215] : memref<32x16x128xf32, #tpu.memory_space<vmem>>, vector<1x16x128xf32>
    %605 = vector.shape_cast %604 : vector<1x16x128xf32> to vector<16x128xf32>
    %606 = vector.extract_strided_slice %345 {offsets = [13, 0], sizes = [1, 128], strides = [1, 1]} : vector<32x128xf32> to vector<1x128xf32>
    %607 = vector.broadcast %606 : vector<1x128xf32> to vector<16x128xf32>
    %608 = arith.mulf %605, %607 : vector<16x128xf32>
    %609 = arith.subf %603, %608 : vector<16x128xf32>
    %610 = arith.addf %598, %609 : vector<16x128xf32>
    %c14_216 = arith.constant 14 : index
    %c0_217 = arith.constant 0 : index
    %c0_218 = arith.constant 0 : index
    %611 = vector.load %arg8[%c14_216, %c0_217, %c0_218] : memref<32x16x128xf32, #tpu.memory_space<vmem>>, vector<1x16x128xf32>
    %612 = vector.shape_cast %611 : vector<1x16x128xf32> to vector<16x128xf32>
    %613 = vector.extract_strided_slice %344 {offsets = [14, 0], sizes = [1, 128], strides = [1, 1]} : vector<32x128xf32> to vector<1x128xf32>
    %614 = vector.broadcast %613 : vector<1x128xf32> to vector<16x128xf32>
    %615 = arith.mulf %612, %614 : vector<16x128xf32>
    %c14_219 = arith.constant 14 : index
    %c0_220 = arith.constant 0 : index
    %c0_221 = arith.constant 0 : index
    %616 = vector.load %arg9[%c14_219, %c0_220, %c0_221] : memref<32x16x128xf32, #tpu.memory_space<vmem>>, vector<1x16x128xf32>
    %617 = vector.shape_cast %616 : vector<1x16x128xf32> to vector<16x128xf32>
    %618 = vector.extract_strided_slice %345 {offsets = [14, 0], sizes = [1, 128], strides = [1, 1]} : vector<32x128xf32> to vector<1x128xf32>
    %619 = vector.broadcast %618 : vector<1x128xf32> to vector<16x128xf32>
    %620 = arith.mulf %617, %619 : vector<16x128xf32>
    %621 = arith.subf %615, %620 : vector<16x128xf32>
    %622 = arith.addf %610, %621 : vector<16x128xf32>
    %c15_222 = arith.constant 15 : index
    %c0_223 = arith.constant 0 : index
    %c0_224 = arith.constant 0 : index
    %623 = vector.load %arg8[%c15_222, %c0_223, %c0_224] : memref<32x16x128xf32, #tpu.memory_space<vmem>>, vector<1x16x128xf32>
    %624 = vector.shape_cast %623 : vector<1x16x128xf32> to vector<16x128xf32>
    %625 = vector.extract_strided_slice %344 {offsets = [15, 0], sizes = [1, 128], strides = [1, 1]} : vector<32x128xf32> to vector<1x128xf32>
    %626 = vector.broadcast %625 : vector<1x128xf32> to vector<16x128xf32>
    %627 = arith.mulf %624, %626 : vector<16x128xf32>
    %c15_225 = arith.constant 15 : index
    %c0_226 = arith.constant 0 : index
    %c0_227 = arith.constant 0 : index
    %628 = vector.load %arg9[%c15_225, %c0_226, %c0_227] : memref<32x16x128xf32, #tpu.memory_space<vmem>>, vector<1x16x128xf32>
    %629 = vector.shape_cast %628 : vector<1x16x128xf32> to vector<16x128xf32>
    %630 = vector.extract_strided_slice %345 {offsets = [15, 0], sizes = [1, 128], strides = [1, 1]} : vector<32x128xf32> to vector<1x128xf32>
    %631 = vector.broadcast %630 : vector<1x128xf32> to vector<16x128xf32>
    %632 = arith.mulf %629, %631 : vector<16x128xf32>
    %633 = arith.subf %627, %632 : vector<16x128xf32>
    %634 = arith.addf %622, %633 : vector<16x128xf32>
    %c16_228 = arith.constant 16 : index
    %c0_229 = arith.constant 0 : index
    %c0_230 = arith.constant 0 : index
    %635 = vector.load %arg8[%c16_228, %c0_229, %c0_230] : memref<32x16x128xf32, #tpu.memory_space<vmem>>, vector<1x16x128xf32>
    %636 = vector.shape_cast %635 : vector<1x16x128xf32> to vector<16x128xf32>
    %637 = vector.extract_strided_slice %344 {offsets = [16, 0], sizes = [1, 128], strides = [1, 1]} : vector<32x128xf32> to vector<1x128xf32>
    %638 = vector.broadcast %637 : vector<1x128xf32> to vector<16x128xf32>
    %639 = arith.mulf %636, %638 : vector<16x128xf32>
    %c16_231 = arith.constant 16 : index
    %c0_232 = arith.constant 0 : index
    %c0_233 = arith.constant 0 : index
    %640 = vector.load %arg9[%c16_231, %c0_232, %c0_233] : memref<32x16x128xf32, #tpu.memory_space<vmem>>, vector<1x16x128xf32>
    %641 = vector.shape_cast %640 : vector<1x16x128xf32> to vector<16x128xf32>
    %642 = vector.extract_strided_slice %345 {offsets = [16, 0], sizes = [1, 128], strides = [1, 1]} : vector<32x128xf32> to vector<1x128xf32>
    %643 = vector.broadcast %642 : vector<1x128xf32> to vector<16x128xf32>
    %644 = arith.mulf %641, %643 : vector<16x128xf32>
    %645 = arith.subf %639, %644 : vector<16x128xf32>
    %646 = arith.addf %634, %645 : vector<16x128xf32>
    %c17_234 = arith.constant 17 : index
    %c0_235 = arith.constant 0 : index
    %c0_236 = arith.constant 0 : index
    %647 = vector.load %arg8[%c17_234, %c0_235, %c0_236] : memref<32x16x128xf32, #tpu.memory_space<vmem>>, vector<1x16x128xf32>
    %648 = vector.shape_cast %647 : vector<1x16x128xf32> to vector<16x128xf32>
    %649 = vector.extract_strided_slice %344 {offsets = [17, 0], sizes = [1, 128], strides = [1, 1]} : vector<32x128xf32> to vector<1x128xf32>
    %650 = vector.broadcast %649 : vector<1x128xf32> to vector<16x128xf32>
    %651 = arith.mulf %648, %650 : vector<16x128xf32>
    %c17_237 = arith.constant 17 : index
    %c0_238 = arith.constant 0 : index
    %c0_239 = arith.constant 0 : index
    %652 = vector.load %arg9[%c17_237, %c0_238, %c0_239] : memref<32x16x128xf32, #tpu.memory_space<vmem>>, vector<1x16x128xf32>
    %653 = vector.shape_cast %652 : vector<1x16x128xf32> to vector<16x128xf32>
    %654 = vector.extract_strided_slice %345 {offsets = [17, 0], sizes = [1, 128], strides = [1, 1]} : vector<32x128xf32> to vector<1x128xf32>
    %655 = vector.broadcast %654 : vector<1x128xf32> to vector<16x128xf32>
    %656 = arith.mulf %653, %655 : vector<16x128xf32>
    %657 = arith.subf %651, %656 : vector<16x128xf32>
    %658 = arith.addf %646, %657 : vector<16x128xf32>
    %c18_240 = arith.constant 18 : index
    %c0_241 = arith.constant 0 : index
    %c0_242 = arith.constant 0 : index
    %659 = vector.load %arg8[%c18_240, %c0_241, %c0_242] : memref<32x16x128xf32, #tpu.memory_space<vmem>>, vector<1x16x128xf32>
    %660 = vector.shape_cast %659 : vector<1x16x128xf32> to vector<16x128xf32>
    %661 = vector.extract_strided_slice %344 {offsets = [18, 0], sizes = [1, 128], strides = [1, 1]} : vector<32x128xf32> to vector<1x128xf32>
    %662 = vector.broadcast %661 : vector<1x128xf32> to vector<16x128xf32>
    %663 = arith.mulf %660, %662 : vector<16x128xf32>
    %c18_243 = arith.constant 18 : index
    %c0_244 = arith.constant 0 : index
    %c0_245 = arith.constant 0 : index
    %664 = vector.load %arg9[%c18_243, %c0_244, %c0_245] : memref<32x16x128xf32, #tpu.memory_space<vmem>>, vector<1x16x128xf32>
    %665 = vector.shape_cast %664 : vector<1x16x128xf32> to vector<16x128xf32>
    %666 = vector.extract_strided_slice %345 {offsets = [18, 0], sizes = [1, 128], strides = [1, 1]} : vector<32x128xf32> to vector<1x128xf32>
    %667 = vector.broadcast %666 : vector<1x128xf32> to vector<16x128xf32>
    %668 = arith.mulf %665, %667 : vector<16x128xf32>
    %669 = arith.subf %663, %668 : vector<16x128xf32>
    %670 = arith.addf %658, %669 : vector<16x128xf32>
    %c19_246 = arith.constant 19 : index
    %c0_247 = arith.constant 0 : index
    %c0_248 = arith.constant 0 : index
    %671 = vector.load %arg8[%c19_246, %c0_247, %c0_248] : memref<32x16x128xf32, #tpu.memory_space<vmem>>, vector<1x16x128xf32>
    %672 = vector.shape_cast %671 : vector<1x16x128xf32> to vector<16x128xf32>
    %673 = vector.extract_strided_slice %344 {offsets = [19, 0], sizes = [1, 128], strides = [1, 1]} : vector<32x128xf32> to vector<1x128xf32>
    %674 = vector.broadcast %673 : vector<1x128xf32> to vector<16x128xf32>
    %675 = arith.mulf %672, %674 : vector<16x128xf32>
    %c19_249 = arith.constant 19 : index
    %c0_250 = arith.constant 0 : index
    %c0_251 = arith.constant 0 : index
    %676 = vector.load %arg9[%c19_249, %c0_250, %c0_251] : memref<32x16x128xf32, #tpu.memory_space<vmem>>, vector<1x16x128xf32>
    %677 = vector.shape_cast %676 : vector<1x16x128xf32> to vector<16x128xf32>
    %678 = vector.extract_strided_slice %345 {offsets = [19, 0], sizes = [1, 128], strides = [1, 1]} : vector<32x128xf32> to vector<1x128xf32>
    %679 = vector.broadcast %678 : vector<1x128xf32> to vector<16x128xf32>
    %680 = arith.mulf %677, %679 : vector<16x128xf32>
    %681 = arith.subf %675, %680 : vector<16x128xf32>
    %682 = arith.addf %670, %681 : vector<16x128xf32>
    %c20_252 = arith.constant 20 : index
    %c0_253 = arith.constant 0 : index
    %c0_254 = arith.constant 0 : index
    %683 = vector.load %arg8[%c20_252, %c0_253, %c0_254] : memref<32x16x128xf32, #tpu.memory_space<vmem>>, vector<1x16x128xf32>
    %684 = vector.shape_cast %683 : vector<1x16x128xf32> to vector<16x128xf32>
    %685 = vector.extract_strided_slice %344 {offsets = [20, 0], sizes = [1, 128], strides = [1, 1]} : vector<32x128xf32> to vector<1x128xf32>
    %686 = vector.broadcast %685 : vector<1x128xf32> to vector<16x128xf32>
    %687 = arith.mulf %684, %686 : vector<16x128xf32>
    %c20_255 = arith.constant 20 : index
    %c0_256 = arith.constant 0 : index
    %c0_257 = arith.constant 0 : index
    %688 = vector.load %arg9[%c20_255, %c0_256, %c0_257] : memref<32x16x128xf32, #tpu.memory_space<vmem>>, vector<1x16x128xf32>
    %689 = vector.shape_cast %688 : vector<1x16x128xf32> to vector<16x128xf32>
    %690 = vector.extract_strided_slice %345 {offsets = [20, 0], sizes = [1, 128], strides = [1, 1]} : vector<32x128xf32> to vector<1x128xf32>
    %691 = vector.broadcast %690 : vector<1x128xf32> to vector<16x128xf32>
    %692 = arith.mulf %689, %691 : vector<16x128xf32>
    %693 = arith.subf %687, %692 : vector<16x128xf32>
    %694 = arith.addf %682, %693 : vector<16x128xf32>
    %c21_258 = arith.constant 21 : index
    %c0_259 = arith.constant 0 : index
    %c0_260 = arith.constant 0 : index
    %695 = vector.load %arg8[%c21_258, %c0_259, %c0_260] : memref<32x16x128xf32, #tpu.memory_space<vmem>>, vector<1x16x128xf32>
    %696 = vector.shape_cast %695 : vector<1x16x128xf32> to vector<16x128xf32>
    %697 = vector.extract_strided_slice %344 {offsets = [21, 0], sizes = [1, 128], strides = [1, 1]} : vector<32x128xf32> to vector<1x128xf32>
    %698 = vector.broadcast %697 : vector<1x128xf32> to vector<16x128xf32>
    %699 = arith.mulf %696, %698 : vector<16x128xf32>
    %c21_261 = arith.constant 21 : index
    %c0_262 = arith.constant 0 : index
    %c0_263 = arith.constant 0 : index
    %700 = vector.load %arg9[%c21_261, %c0_262, %c0_263] : memref<32x16x128xf32, #tpu.memory_space<vmem>>, vector<1x16x128xf32>
    %701 = vector.shape_cast %700 : vector<1x16x128xf32> to vector<16x128xf32>
    %702 = vector.extract_strided_slice %345 {offsets = [21, 0], sizes = [1, 128], strides = [1, 1]} : vector<32x128xf32> to vector<1x128xf32>
    %703 = vector.broadcast %702 : vector<1x128xf32> to vector<16x128xf32>
    %704 = arith.mulf %701, %703 : vector<16x128xf32>
    %705 = arith.subf %699, %704 : vector<16x128xf32>
    %706 = arith.addf %694, %705 : vector<16x128xf32>
    %c22_264 = arith.constant 22 : index
    %c0_265 = arith.constant 0 : index
    %c0_266 = arith.constant 0 : index
    %707 = vector.load %arg8[%c22_264, %c0_265, %c0_266] : memref<32x16x128xf32, #tpu.memory_space<vmem>>, vector<1x16x128xf32>
    %708 = vector.shape_cast %707 : vector<1x16x128xf32> to vector<16x128xf32>
    %709 = vector.extract_strided_slice %344 {offsets = [22, 0], sizes = [1, 128], strides = [1, 1]} : vector<32x128xf32> to vector<1x128xf32>
    %710 = vector.broadcast %709 : vector<1x128xf32> to vector<16x128xf32>
    %711 = arith.mulf %708, %710 : vector<16x128xf32>
    %c22_267 = arith.constant 22 : index
    %c0_268 = arith.constant 0 : index
    %c0_269 = arith.constant 0 : index
    %712 = vector.load %arg9[%c22_267, %c0_268, %c0_269] : memref<32x16x128xf32, #tpu.memory_space<vmem>>, vector<1x16x128xf32>
    %713 = vector.shape_cast %712 : vector<1x16x128xf32> to vector<16x128xf32>
    %714 = vector.extract_strided_slice %345 {offsets = [22, 0], sizes = [1, 128], strides = [1, 1]} : vector<32x128xf32> to vector<1x128xf32>
    %715 = vector.broadcast %714 : vector<1x128xf32> to vector<16x128xf32>
    %716 = arith.mulf %713, %715 : vector<16x128xf32>
    %717 = arith.subf %711, %716 : vector<16x128xf32>
    %718 = arith.addf %706, %717 : vector<16x128xf32>
    %c23_270 = arith.constant 23 : index
    %c0_271 = arith.constant 0 : index
    %c0_272 = arith.constant 0 : index
    %719 = vector.load %arg8[%c23_270, %c0_271, %c0_272] : memref<32x16x128xf32, #tpu.memory_space<vmem>>, vector<1x16x128xf32>
    %720 = vector.shape_cast %719 : vector<1x16x128xf32> to vector<16x128xf32>
    %721 = vector.extract_strided_slice %344 {offsets = [23, 0], sizes = [1, 128], strides = [1, 1]} : vector<32x128xf32> to vector<1x128xf32>
    %722 = vector.broadcast %721 : vector<1x128xf32> to vector<16x128xf32>
    %723 = arith.mulf %720, %722 : vector<16x128xf32>
    %c23_273 = arith.constant 23 : index
    %c0_274 = arith.constant 0 : index
    %c0_275 = arith.constant 0 : index
    %724 = vector.load %arg9[%c23_273, %c0_274, %c0_275] : memref<32x16x128xf32, #tpu.memory_space<vmem>>, vector<1x16x128xf32>
    %725 = vector.shape_cast %724 : vector<1x16x128xf32> to vector<16x128xf32>
    %726 = vector.extract_strided_slice %345 {offsets = [23, 0], sizes = [1, 128], strides = [1, 1]} : vector<32x128xf32> to vector<1x128xf32>
    %727 = vector.broadcast %726 : vector<1x128xf32> to vector<16x128xf32>
    %728 = arith.mulf %725, %727 : vector<16x128xf32>
    %729 = arith.subf %723, %728 : vector<16x128xf32>
    %730 = arith.addf %718, %729 : vector<16x128xf32>
    %c24_276 = arith.constant 24 : index
    %c0_277 = arith.constant 0 : index
    %c0_278 = arith.constant 0 : index
    %731 = vector.load %arg8[%c24_276, %c0_277, %c0_278] : memref<32x16x128xf32, #tpu.memory_space<vmem>>, vector<1x16x128xf32>
    %732 = vector.shape_cast %731 : vector<1x16x128xf32> to vector<16x128xf32>
    %733 = vector.extract_strided_slice %344 {offsets = [24, 0], sizes = [1, 128], strides = [1, 1]} : vector<32x128xf32> to vector<1x128xf32>
    %734 = vector.broadcast %733 : vector<1x128xf32> to vector<16x128xf32>
    %735 = arith.mulf %732, %734 : vector<16x128xf32>
    %c24_279 = arith.constant 24 : index
    %c0_280 = arith.constant 0 : index
    %c0_281 = arith.constant 0 : index
    %736 = vector.load %arg9[%c24_279, %c0_280, %c0_281] : memref<32x16x128xf32, #tpu.memory_space<vmem>>, vector<1x16x128xf32>
    %737 = vector.shape_cast %736 : vector<1x16x128xf32> to vector<16x128xf32>
    %738 = vector.extract_strided_slice %345 {offsets = [24, 0], sizes = [1, 128], strides = [1, 1]} : vector<32x128xf32> to vector<1x128xf32>
    %739 = vector.broadcast %738 : vector<1x128xf32> to vector<16x128xf32>
    %740 = arith.mulf %737, %739 : vector<16x128xf32>
    %741 = arith.subf %735, %740 : vector<16x128xf32>
    %742 = arith.addf %730, %741 : vector<16x128xf32>
    %c25_282 = arith.constant 25 : index
    %c0_283 = arith.constant 0 : index
    %c0_284 = arith.constant 0 : index
    %743 = vector.load %arg8[%c25_282, %c0_283, %c0_284] : memref<32x16x128xf32, #tpu.memory_space<vmem>>, vector<1x16x128xf32>
    %744 = vector.shape_cast %743 : vector<1x16x128xf32> to vector<16x128xf32>
    %745 = vector.extract_strided_slice %344 {offsets = [25, 0], sizes = [1, 128], strides = [1, 1]} : vector<32x128xf32> to vector<1x128xf32>
    %746 = vector.broadcast %745 : vector<1x128xf32> to vector<16x128xf32>
    %747 = arith.mulf %744, %746 : vector<16x128xf32>
    %c25_285 = arith.constant 25 : index
    %c0_286 = arith.constant 0 : index
    %c0_287 = arith.constant 0 : index
    %748 = vector.load %arg9[%c25_285, %c0_286, %c0_287] : memref<32x16x128xf32, #tpu.memory_space<vmem>>, vector<1x16x128xf32>
    %749 = vector.shape_cast %748 : vector<1x16x128xf32> to vector<16x128xf32>
    %750 = vector.extract_strided_slice %345 {offsets = [25, 0], sizes = [1, 128], strides = [1, 1]} : vector<32x128xf32> to vector<1x128xf32>
    %751 = vector.broadcast %750 : vector<1x128xf32> to vector<16x128xf32>
    %752 = arith.mulf %749, %751 : vector<16x128xf32>
    %753 = arith.subf %747, %752 : vector<16x128xf32>
    %754 = arith.addf %742, %753 : vector<16x128xf32>
    %c26_288 = arith.constant 26 : index
    %c0_289 = arith.constant 0 : index
    %c0_290 = arith.constant 0 : index
    %755 = vector.load %arg8[%c26_288, %c0_289, %c0_290] : memref<32x16x128xf32, #tpu.memory_space<vmem>>, vector<1x16x128xf32>
    %756 = vector.shape_cast %755 : vector<1x16x128xf32> to vector<16x128xf32>
    %757 = vector.extract_strided_slice %344 {offsets = [26, 0], sizes = [1, 128], strides = [1, 1]} : vector<32x128xf32> to vector<1x128xf32>
    %758 = vector.broadcast %757 : vector<1x128xf32> to vector<16x128xf32>
    %759 = arith.mulf %756, %758 : vector<16x128xf32>
    %c26_291 = arith.constant 26 : index
    %c0_292 = arith.constant 0 : index
    %c0_293 = arith.constant 0 : index
    %760 = vector.load %arg9[%c26_291, %c0_292, %c0_293] : memref<32x16x128xf32, #tpu.memory_space<vmem>>, vector<1x16x128xf32>
    %761 = vector.shape_cast %760 : vector<1x16x128xf32> to vector<16x128xf32>
    %762 = vector.extract_strided_slice %345 {offsets = [26, 0], sizes = [1, 128], strides = [1, 1]} : vector<32x128xf32> to vector<1x128xf32>
    %763 = vector.broadcast %762 : vector<1x128xf32> to vector<16x128xf32>
    %764 = arith.mulf %761, %763 : vector<16x128xf32>
    %765 = arith.subf %759, %764 : vector<16x128xf32>
    %766 = arith.addf %754, %765 : vector<16x128xf32>
    %c27_294 = arith.constant 27 : index
    %c0_295 = arith.constant 0 : index
    %c0_296 = arith.constant 0 : index
    %767 = vector.load %arg8[%c27_294, %c0_295, %c0_296] : memref<32x16x128xf32, #tpu.memory_space<vmem>>, vector<1x16x128xf32>
    %768 = vector.shape_cast %767 : vector<1x16x128xf32> to vector<16x128xf32>
    %769 = vector.extract_strided_slice %344 {offsets = [27, 0], sizes = [1, 128], strides = [1, 1]} : vector<32x128xf32> to vector<1x128xf32>
    %770 = vector.broadcast %769 : vector<1x128xf32> to vector<16x128xf32>
    %771 = arith.mulf %768, %770 : vector<16x128xf32>
    %c27_297 = arith.constant 27 : index
    %c0_298 = arith.constant 0 : index
    %c0_299 = arith.constant 0 : index
    %772 = vector.load %arg9[%c27_297, %c0_298, %c0_299] : memref<32x16x128xf32, #tpu.memory_space<vmem>>, vector<1x16x128xf32>
    %773 = vector.shape_cast %772 : vector<1x16x128xf32> to vector<16x128xf32>
    %774 = vector.extract_strided_slice %345 {offsets = [27, 0], sizes = [1, 128], strides = [1, 1]} : vector<32x128xf32> to vector<1x128xf32>
    %775 = vector.broadcast %774 : vector<1x128xf32> to vector<16x128xf32>
    %776 = arith.mulf %773, %775 : vector<16x128xf32>
    %777 = arith.subf %771, %776 : vector<16x128xf32>
    %778 = arith.addf %766, %777 : vector<16x128xf32>
    %c28_300 = arith.constant 28 : index
    %c0_301 = arith.constant 0 : index
    %c0_302 = arith.constant 0 : index
    %779 = vector.load %arg8[%c28_300, %c0_301, %c0_302] : memref<32x16x128xf32, #tpu.memory_space<vmem>>, vector<1x16x128xf32>
    %780 = vector.shape_cast %779 : vector<1x16x128xf32> to vector<16x128xf32>
    %781 = vector.extract_strided_slice %344 {offsets = [28, 0], sizes = [1, 128], strides = [1, 1]} : vector<32x128xf32> to vector<1x128xf32>
    %782 = vector.broadcast %781 : vector<1x128xf32> to vector<16x128xf32>
    %783 = arith.mulf %780, %782 : vector<16x128xf32>
    %c28_303 = arith.constant 28 : index
    %c0_304 = arith.constant 0 : index
    %c0_305 = arith.constant 0 : index
    %784 = vector.load %arg9[%c28_303, %c0_304, %c0_305] : memref<32x16x128xf32, #tpu.memory_space<vmem>>, vector<1x16x128xf32>
    %785 = vector.shape_cast %784 : vector<1x16x128xf32> to vector<16x128xf32>
    %786 = vector.extract_strided_slice %345 {offsets = [28, 0], sizes = [1, 128], strides = [1, 1]} : vector<32x128xf32> to vector<1x128xf32>
    %787 = vector.broadcast %786 : vector<1x128xf32> to vector<16x128xf32>
    %788 = arith.mulf %785, %787 : vector<16x128xf32>
    %789 = arith.subf %783, %788 : vector<16x128xf32>
    %790 = arith.addf %778, %789 : vector<16x128xf32>
    %c29_306 = arith.constant 29 : index
    %c0_307 = arith.constant 0 : index
    %c0_308 = arith.constant 0 : index
    %791 = vector.load %arg8[%c29_306, %c0_307, %c0_308] : memref<32x16x128xf32, #tpu.memory_space<vmem>>, vector<1x16x128xf32>
    %792 = vector.shape_cast %791 : vector<1x16x128xf32> to vector<16x128xf32>
    %793 = vector.extract_strided_slice %344 {offsets = [29, 0], sizes = [1, 128], strides = [1, 1]} : vector<32x128xf32> to vector<1x128xf32>
    %794 = vector.broadcast %793 : vector<1x128xf32> to vector<16x128xf32>
    %795 = arith.mulf %792, %794 : vector<16x128xf32>
    %c29_309 = arith.constant 29 : index
    %c0_310 = arith.constant 0 : index
    %c0_311 = arith.constant 0 : index
    %796 = vector.load %arg9[%c29_309, %c0_310, %c0_311] : memref<32x16x128xf32, #tpu.memory_space<vmem>>, vector<1x16x128xf32>
    %797 = vector.shape_cast %796 : vector<1x16x128xf32> to vector<16x128xf32>
    %798 = vector.extract_strided_slice %345 {offsets = [29, 0], sizes = [1, 128], strides = [1, 1]} : vector<32x128xf32> to vector<1x128xf32>
    %799 = vector.broadcast %798 : vector<1x128xf32> to vector<16x128xf32>
    %800 = arith.mulf %797, %799 : vector<16x128xf32>
    %801 = arith.subf %795, %800 : vector<16x128xf32>
    %802 = arith.addf %790, %801 : vector<16x128xf32>
    %c30_312 = arith.constant 30 : index
    %c0_313 = arith.constant 0 : index
    %c0_314 = arith.constant 0 : index
    %803 = vector.load %arg8[%c30_312, %c0_313, %c0_314] : memref<32x16x128xf32, #tpu.memory_space<vmem>>, vector<1x16x128xf32>
    %804 = vector.shape_cast %803 : vector<1x16x128xf32> to vector<16x128xf32>
    %805 = vector.extract_strided_slice %344 {offsets = [30, 0], sizes = [1, 128], strides = [1, 1]} : vector<32x128xf32> to vector<1x128xf32>
    %806 = vector.broadcast %805 : vector<1x128xf32> to vector<16x128xf32>
    %807 = arith.mulf %804, %806 : vector<16x128xf32>
    %c30_315 = arith.constant 30 : index
    %c0_316 = arith.constant 0 : index
    %c0_317 = arith.constant 0 : index
    %808 = vector.load %arg9[%c30_315, %c0_316, %c0_317] : memref<32x16x128xf32, #tpu.memory_space<vmem>>, vector<1x16x128xf32>
    %809 = vector.shape_cast %808 : vector<1x16x128xf32> to vector<16x128xf32>
    %810 = vector.extract_strided_slice %345 {offsets = [30, 0], sizes = [1, 128], strides = [1, 1]} : vector<32x128xf32> to vector<1x128xf32>
    %811 = vector.broadcast %810 : vector<1x128xf32> to vector<16x128xf32>
    %812 = arith.mulf %809, %811 : vector<16x128xf32>
    %813 = arith.subf %807, %812 : vector<16x128xf32>
    %814 = arith.addf %802, %813 : vector<16x128xf32>
    %c31_318 = arith.constant 31 : index
    %c0_319 = arith.constant 0 : index
    %c0_320 = arith.constant 0 : index
    %815 = vector.load %arg8[%c31_318, %c0_319, %c0_320] : memref<32x16x128xf32, #tpu.memory_space<vmem>>, vector<1x16x128xf32>
    %816 = vector.shape_cast %815 : vector<1x16x128xf32> to vector<16x128xf32>
    %817 = vector.extract_strided_slice %344 {offsets = [31, 0], sizes = [1, 128], strides = [1, 1]} : vector<32x128xf32> to vector<1x128xf32>
    %818 = vector.broadcast %817 : vector<1x128xf32> to vector<16x128xf32>
    %819 = arith.mulf %816, %818 : vector<16x128xf32>
    %c31_321 = arith.constant 31 : index
    %c0_322 = arith.constant 0 : index
    %c0_323 = arith.constant 0 : index
    %820 = vector.load %arg9[%c31_321, %c0_322, %c0_323] : memref<32x16x128xf32, #tpu.memory_space<vmem>>, vector<1x16x128xf32>
    %821 = vector.shape_cast %820 : vector<1x16x128xf32> to vector<16x128xf32>
    %822 = vector.extract_strided_slice %345 {offsets = [31, 0], sizes = [1, 128], strides = [1, 1]} : vector<32x128xf32> to vector<1x128xf32>
    %823 = vector.broadcast %822 : vector<1x128xf32> to vector<16x128xf32>
    %824 = arith.mulf %821, %823 : vector<16x128xf32>
    %825 = arith.subf %819, %824 : vector<16x128xf32>
    %826 = arith.addf %814, %825 : vector<16x128xf32>
    %c0_324 = arith.constant 0 : index
    %c0_325 = arith.constant 0 : index
    %827 = vector.load %arg12[%c0_324, %c0_325] : memref<32x128xf32, #tpu.memory_space<vmem>>, vector<32x128xf32>
    %828 = arith.mulf %827, %344 : vector<32x128xf32>
    %c0_326 = arith.constant 0 : index
    %c0_327 = arith.constant 0 : index
    %829 = vector.load %arg13[%c0_326, %c0_327] : memref<32x128xf32, #tpu.memory_space<vmem>>, vector<32x128xf32>
    %830 = arith.mulf %829, %345 : vector<32x128xf32>
    %831 = arith.subf %828, %830 : vector<32x128xf32>
    %c0_328 = arith.constant 0 : index
    %c0_329 = arith.constant 0 : index
    %832 = vector.load %arg12[%c0_328, %c0_329] : memref<32x128xf32, #tpu.memory_space<vmem>>, vector<32x128xf32>
    %833 = arith.mulf %832, %345 : vector<32x128xf32>
    %c0_330 = arith.constant 0 : index
    %c0_331 = arith.constant 0 : index
    %834 = vector.load %arg13[%c0_330, %c0_331] : memref<32x128xf32, #tpu.memory_space<vmem>>, vector<32x128xf32>
    %835 = arith.mulf %834, %344 : vector<32x128xf32>
    %836 = arith.addf %833, %835 : vector<32x128xf32>
    %c0_332 = arith.constant 0 : index
    %c0_333 = arith.constant 0 : index
    %c0_334 = arith.constant 0 : index
    %837 = vector.load %arg10[%c0_332, %c0_333, %c0_334] : memref<16x32x128xf32, #tpu.memory_space<vmem>>, vector<1x32x128xf32>
    %838 = vector.shape_cast %837 : vector<1x32x128xf32> to vector<32x128xf32>
    %839 = vector.extract_strided_slice %343 {offsets = [0, 0], sizes = [1, 128], strides = [1, 1]} : vector<16x128xf32> to vector<1x128xf32>
    %840 = vector.broadcast %839 : vector<1x128xf32> to vector<32x128xf32>
    %841 = arith.mulf %838, %840 : vector<32x128xf32>
    %842 = arith.addf %831, %841 : vector<32x128xf32>
    %c0_335 = arith.constant 0 : index
    %c0_336 = arith.constant 0 : index
    %c0_337 = arith.constant 0 : index
    %843 = vector.load %arg11[%c0_335, %c0_336, %c0_337] : memref<16x32x128xf32, #tpu.memory_space<vmem>>, vector<1x32x128xf32>
    %844 = vector.shape_cast %843 : vector<1x32x128xf32> to vector<32x128xf32>
    %845 = vector.extract_strided_slice %343 {offsets = [0, 0], sizes = [1, 128], strides = [1, 1]} : vector<16x128xf32> to vector<1x128xf32>
    %846 = vector.broadcast %845 : vector<1x128xf32> to vector<32x128xf32>
    %847 = arith.mulf %844, %846 : vector<32x128xf32>
    %848 = arith.addf %836, %847 : vector<32x128xf32>
    %c1_338 = arith.constant 1 : index
    %c0_339 = arith.constant 0 : index
    %c0_340 = arith.constant 0 : index
    %849 = vector.load %arg10[%c1_338, %c0_339, %c0_340] : memref<16x32x128xf32, #tpu.memory_space<vmem>>, vector<1x32x128xf32>
    %850 = vector.shape_cast %849 : vector<1x32x128xf32> to vector<32x128xf32>
    %851 = vector.extract_strided_slice %343 {offsets = [1, 0], sizes = [1, 128], strides = [1, 1]} : vector<16x128xf32> to vector<1x128xf32>
    %852 = vector.broadcast %851 : vector<1x128xf32> to vector<32x128xf32>
    %853 = arith.mulf %850, %852 : vector<32x128xf32>
    %854 = arith.addf %842, %853 : vector<32x128xf32>
    %c1_341 = arith.constant 1 : index
    %c0_342 = arith.constant 0 : index
    %c0_343 = arith.constant 0 : index
    %855 = vector.load %arg11[%c1_341, %c0_342, %c0_343] : memref<16x32x128xf32, #tpu.memory_space<vmem>>, vector<1x32x128xf32>
    %856 = vector.shape_cast %855 : vector<1x32x128xf32> to vector<32x128xf32>
    %857 = vector.extract_strided_slice %343 {offsets = [1, 0], sizes = [1, 128], strides = [1, 1]} : vector<16x128xf32> to vector<1x128xf32>
    %858 = vector.broadcast %857 : vector<1x128xf32> to vector<32x128xf32>
    %859 = arith.mulf %856, %858 : vector<32x128xf32>
    %860 = arith.addf %848, %859 : vector<32x128xf32>
    %c2_344 = arith.constant 2 : index
    %c0_345 = arith.constant 0 : index
    %c0_346 = arith.constant 0 : index
    %861 = vector.load %arg10[%c2_344, %c0_345, %c0_346] : memref<16x32x128xf32, #tpu.memory_space<vmem>>, vector<1x32x128xf32>
    %862 = vector.shape_cast %861 : vector<1x32x128xf32> to vector<32x128xf32>
    %863 = vector.extract_strided_slice %343 {offsets = [2, 0], sizes = [1, 128], strides = [1, 1]} : vector<16x128xf32> to vector<1x128xf32>
    %864 = vector.broadcast %863 : vector<1x128xf32> to vector<32x128xf32>
    %865 = arith.mulf %862, %864 : vector<32x128xf32>
    %866 = arith.addf %854, %865 : vector<32x128xf32>
    %c2_347 = arith.constant 2 : index
    %c0_348 = arith.constant 0 : index
    %c0_349 = arith.constant 0 : index
    %867 = vector.load %arg11[%c2_347, %c0_348, %c0_349] : memref<16x32x128xf32, #tpu.memory_space<vmem>>, vector<1x32x128xf32>
    %868 = vector.shape_cast %867 : vector<1x32x128xf32> to vector<32x128xf32>
    %869 = vector.extract_strided_slice %343 {offsets = [2, 0], sizes = [1, 128], strides = [1, 1]} : vector<16x128xf32> to vector<1x128xf32>
    %870 = vector.broadcast %869 : vector<1x128xf32> to vector<32x128xf32>
    %871 = arith.mulf %868, %870 : vector<32x128xf32>
    %872 = arith.addf %860, %871 : vector<32x128xf32>
    %c3_350 = arith.constant 3 : index
    %c0_351 = arith.constant 0 : index
    %c0_352 = arith.constant 0 : index
    %873 = vector.load %arg10[%c3_350, %c0_351, %c0_352] : memref<16x32x128xf32, #tpu.memory_space<vmem>>, vector<1x32x128xf32>
    %874 = vector.shape_cast %873 : vector<1x32x128xf32> to vector<32x128xf32>
    %875 = vector.extract_strided_slice %343 {offsets = [3, 0], sizes = [1, 128], strides = [1, 1]} : vector<16x128xf32> to vector<1x128xf32>
    %876 = vector.broadcast %875 : vector<1x128xf32> to vector<32x128xf32>
    %877 = arith.mulf %874, %876 : vector<32x128xf32>
    %878 = arith.addf %866, %877 : vector<32x128xf32>
    %c3_353 = arith.constant 3 : index
    %c0_354 = arith.constant 0 : index
    %c0_355 = arith.constant 0 : index
    %879 = vector.load %arg11[%c3_353, %c0_354, %c0_355] : memref<16x32x128xf32, #tpu.memory_space<vmem>>, vector<1x32x128xf32>
    %880 = vector.shape_cast %879 : vector<1x32x128xf32> to vector<32x128xf32>
    %881 = vector.extract_strided_slice %343 {offsets = [3, 0], sizes = [1, 128], strides = [1, 1]} : vector<16x128xf32> to vector<1x128xf32>
    %882 = vector.broadcast %881 : vector<1x128xf32> to vector<32x128xf32>
    %883 = arith.mulf %880, %882 : vector<32x128xf32>
    %884 = arith.addf %872, %883 : vector<32x128xf32>
    %c4_356 = arith.constant 4 : index
    %c0_357 = arith.constant 0 : index
    %c0_358 = arith.constant 0 : index
    %885 = vector.load %arg10[%c4_356, %c0_357, %c0_358] : memref<16x32x128xf32, #tpu.memory_space<vmem>>, vector<1x32x128xf32>
    %886 = vector.shape_cast %885 : vector<1x32x128xf32> to vector<32x128xf32>
    %887 = vector.extract_strided_slice %343 {offsets = [4, 0], sizes = [1, 128], strides = [1, 1]} : vector<16x128xf32> to vector<1x128xf32>
    %888 = vector.broadcast %887 : vector<1x128xf32> to vector<32x128xf32>
    %889 = arith.mulf %886, %888 : vector<32x128xf32>
    %890 = arith.addf %878, %889 : vector<32x128xf32>
    %c4_359 = arith.constant 4 : index
    %c0_360 = arith.constant 0 : index
    %c0_361 = arith.constant 0 : index
    %891 = vector.load %arg11[%c4_359, %c0_360, %c0_361] : memref<16x32x128xf32, #tpu.memory_space<vmem>>, vector<1x32x128xf32>
    %892 = vector.shape_cast %891 : vector<1x32x128xf32> to vector<32x128xf32>
    %893 = vector.extract_strided_slice %343 {offsets = [4, 0], sizes = [1, 128], strides = [1, 1]} : vector<16x128xf32> to vector<1x128xf32>
    %894 = vector.broadcast %893 : vector<1x128xf32> to vector<32x128xf32>
    %895 = arith.mulf %892, %894 : vector<32x128xf32>
    %896 = arith.addf %884, %895 : vector<32x128xf32>
    %c5_362 = arith.constant 5 : index
    %c0_363 = arith.constant 0 : index
    %c0_364 = arith.constant 0 : index
    %897 = vector.load %arg10[%c5_362, %c0_363, %c0_364] : memref<16x32x128xf32, #tpu.memory_space<vmem>>, vector<1x32x128xf32>
    %898 = vector.shape_cast %897 : vector<1x32x128xf32> to vector<32x128xf32>
    %899 = vector.extract_strided_slice %343 {offsets = [5, 0], sizes = [1, 128], strides = [1, 1]} : vector<16x128xf32> to vector<1x128xf32>
    %900 = vector.broadcast %899 : vector<1x128xf32> to vector<32x128xf32>
    %901 = arith.mulf %898, %900 : vector<32x128xf32>
    %902 = arith.addf %890, %901 : vector<32x128xf32>
    %c5_365 = arith.constant 5 : index
    %c0_366 = arith.constant 0 : index
    %c0_367 = arith.constant 0 : index
    %903 = vector.load %arg11[%c5_365, %c0_366, %c0_367] : memref<16x32x128xf32, #tpu.memory_space<vmem>>, vector<1x32x128xf32>
    %904 = vector.shape_cast %903 : vector<1x32x128xf32> to vector<32x128xf32>
    %905 = vector.extract_strided_slice %343 {offsets = [5, 0], sizes = [1, 128], strides = [1, 1]} : vector<16x128xf32> to vector<1x128xf32>
    %906 = vector.broadcast %905 : vector<1x128xf32> to vector<32x128xf32>
    %907 = arith.mulf %904, %906 : vector<32x128xf32>
    %908 = arith.addf %896, %907 : vector<32x128xf32>
    %c6_368 = arith.constant 6 : index
    %c0_369 = arith.constant 0 : index
    %c0_370 = arith.constant 0 : index
    %909 = vector.load %arg10[%c6_368, %c0_369, %c0_370] : memref<16x32x128xf32, #tpu.memory_space<vmem>>, vector<1x32x128xf32>
    %910 = vector.shape_cast %909 : vector<1x32x128xf32> to vector<32x128xf32>
    %911 = vector.extract_strided_slice %343 {offsets = [6, 0], sizes = [1, 128], strides = [1, 1]} : vector<16x128xf32> to vector<1x128xf32>
    %912 = vector.broadcast %911 : vector<1x128xf32> to vector<32x128xf32>
    %913 = arith.mulf %910, %912 : vector<32x128xf32>
    %914 = arith.addf %902, %913 : vector<32x128xf32>
    %c6_371 = arith.constant 6 : index
    %c0_372 = arith.constant 0 : index
    %c0_373 = arith.constant 0 : index
    %915 = vector.load %arg11[%c6_371, %c0_372, %c0_373] : memref<16x32x128xf32, #tpu.memory_space<vmem>>, vector<1x32x128xf32>
    %916 = vector.shape_cast %915 : vector<1x32x128xf32> to vector<32x128xf32>
    %917 = vector.extract_strided_slice %343 {offsets = [6, 0], sizes = [1, 128], strides = [1, 1]} : vector<16x128xf32> to vector<1x128xf32>
    %918 = vector.broadcast %917 : vector<1x128xf32> to vector<32x128xf32>
    %919 = arith.mulf %916, %918 : vector<32x128xf32>
    %920 = arith.addf %908, %919 : vector<32x128xf32>
    %c7_374 = arith.constant 7 : index
    %c0_375 = arith.constant 0 : index
    %c0_376 = arith.constant 0 : index
    %921 = vector.load %arg10[%c7_374, %c0_375, %c0_376] : memref<16x32x128xf32, #tpu.memory_space<vmem>>, vector<1x32x128xf32>
    %922 = vector.shape_cast %921 : vector<1x32x128xf32> to vector<32x128xf32>
    %923 = vector.extract_strided_slice %343 {offsets = [7, 0], sizes = [1, 128], strides = [1, 1]} : vector<16x128xf32> to vector<1x128xf32>
    %924 = vector.broadcast %923 : vector<1x128xf32> to vector<32x128xf32>
    %925 = arith.mulf %922, %924 : vector<32x128xf32>
    %926 = arith.addf %914, %925 : vector<32x128xf32>
    %c7_377 = arith.constant 7 : index
    %c0_378 = arith.constant 0 : index
    %c0_379 = arith.constant 0 : index
    %927 = vector.load %arg11[%c7_377, %c0_378, %c0_379] : memref<16x32x128xf32, #tpu.memory_space<vmem>>, vector<1x32x128xf32>
    %928 = vector.shape_cast %927 : vector<1x32x128xf32> to vector<32x128xf32>
    %929 = vector.extract_strided_slice %343 {offsets = [7, 0], sizes = [1, 128], strides = [1, 1]} : vector<16x128xf32> to vector<1x128xf32>
    %930 = vector.broadcast %929 : vector<1x128xf32> to vector<32x128xf32>
    %931 = arith.mulf %928, %930 : vector<32x128xf32>
    %932 = arith.addf %920, %931 : vector<32x128xf32>
    %c8_380 = arith.constant 8 : index
    %c0_381 = arith.constant 0 : index
    %c0_382 = arith.constant 0 : index
    %933 = vector.load %arg10[%c8_380, %c0_381, %c0_382] : memref<16x32x128xf32, #tpu.memory_space<vmem>>, vector<1x32x128xf32>
    %934 = vector.shape_cast %933 : vector<1x32x128xf32> to vector<32x128xf32>
    %935 = vector.extract_strided_slice %343 {offsets = [8, 0], sizes = [1, 128], strides = [1, 1]} : vector<16x128xf32> to vector<1x128xf32>
    %936 = vector.broadcast %935 : vector<1x128xf32> to vector<32x128xf32>
    %937 = arith.mulf %934, %936 : vector<32x128xf32>
    %938 = arith.addf %926, %937 : vector<32x128xf32>
    %c8_383 = arith.constant 8 : index
    %c0_384 = arith.constant 0 : index
    %c0_385 = arith.constant 0 : index
    %939 = vector.load %arg11[%c8_383, %c0_384, %c0_385] : memref<16x32x128xf32, #tpu.memory_space<vmem>>, vector<1x32x128xf32>
    %940 = vector.shape_cast %939 : vector<1x32x128xf32> to vector<32x128xf32>
    %941 = vector.extract_strided_slice %343 {offsets = [8, 0], sizes = [1, 128], strides = [1, 1]} : vector<16x128xf32> to vector<1x128xf32>
    %942 = vector.broadcast %941 : vector<1x128xf32> to vector<32x128xf32>
    %943 = arith.mulf %940, %942 : vector<32x128xf32>
    %944 = arith.addf %932, %943 : vector<32x128xf32>
    %c9_386 = arith.constant 9 : index
    %c0_387 = arith.constant 0 : index
    %c0_388 = arith.constant 0 : index
    %945 = vector.load %arg10[%c9_386, %c0_387, %c0_388] : memref<16x32x128xf32, #tpu.memory_space<vmem>>, vector<1x32x128xf32>
    %946 = vector.shape_cast %945 : vector<1x32x128xf32> to vector<32x128xf32>
    %947 = vector.extract_strided_slice %343 {offsets = [9, 0], sizes = [1, 128], strides = [1, 1]} : vector<16x128xf32> to vector<1x128xf32>
    %948 = vector.broadcast %947 : vector<1x128xf32> to vector<32x128xf32>
    %949 = arith.mulf %946, %948 : vector<32x128xf32>
    %950 = arith.addf %938, %949 : vector<32x128xf32>
    %c9_389 = arith.constant 9 : index
    %c0_390 = arith.constant 0 : index
    %c0_391 = arith.constant 0 : index
    %951 = vector.load %arg11[%c9_389, %c0_390, %c0_391] : memref<16x32x128xf32, #tpu.memory_space<vmem>>, vector<1x32x128xf32>
    %952 = vector.shape_cast %951 : vector<1x32x128xf32> to vector<32x128xf32>
    %953 = vector.extract_strided_slice %343 {offsets = [9, 0], sizes = [1, 128], strides = [1, 1]} : vector<16x128xf32> to vector<1x128xf32>
    %954 = vector.broadcast %953 : vector<1x128xf32> to vector<32x128xf32>
    %955 = arith.mulf %952, %954 : vector<32x128xf32>
    %956 = arith.addf %944, %955 : vector<32x128xf32>
    %c10_392 = arith.constant 10 : index
    %c0_393 = arith.constant 0 : index
    %c0_394 = arith.constant 0 : index
    %957 = vector.load %arg10[%c10_392, %c0_393, %c0_394] : memref<16x32x128xf32, #tpu.memory_space<vmem>>, vector<1x32x128xf32>
    %958 = vector.shape_cast %957 : vector<1x32x128xf32> to vector<32x128xf32>
    %959 = vector.extract_strided_slice %343 {offsets = [10, 0], sizes = [1, 128], strides = [1, 1]} : vector<16x128xf32> to vector<1x128xf32>
    %960 = vector.broadcast %959 : vector<1x128xf32> to vector<32x128xf32>
    %961 = arith.mulf %958, %960 : vector<32x128xf32>
    %962 = arith.addf %950, %961 : vector<32x128xf32>
    %c10_395 = arith.constant 10 : index
    %c0_396 = arith.constant 0 : index
    %c0_397 = arith.constant 0 : index
    %963 = vector.load %arg11[%c10_395, %c0_396, %c0_397] : memref<16x32x128xf32, #tpu.memory_space<vmem>>, vector<1x32x128xf32>
    %964 = vector.shape_cast %963 : vector<1x32x128xf32> to vector<32x128xf32>
    %965 = vector.extract_strided_slice %343 {offsets = [10, 0], sizes = [1, 128], strides = [1, 1]} : vector<16x128xf32> to vector<1x128xf32>
    %966 = vector.broadcast %965 : vector<1x128xf32> to vector<32x128xf32>
    %967 = arith.mulf %964, %966 : vector<32x128xf32>
    %968 = arith.addf %956, %967 : vector<32x128xf32>
    %c11_398 = arith.constant 11 : index
    %c0_399 = arith.constant 0 : index
    %c0_400 = arith.constant 0 : index
    %969 = vector.load %arg10[%c11_398, %c0_399, %c0_400] : memref<16x32x128xf32, #tpu.memory_space<vmem>>, vector<1x32x128xf32>
    %970 = vector.shape_cast %969 : vector<1x32x128xf32> to vector<32x128xf32>
    %971 = vector.extract_strided_slice %343 {offsets = [11, 0], sizes = [1, 128], strides = [1, 1]} : vector<16x128xf32> to vector<1x128xf32>
    %972 = vector.broadcast %971 : vector<1x128xf32> to vector<32x128xf32>
    %973 = arith.mulf %970, %972 : vector<32x128xf32>
    %974 = arith.addf %962, %973 : vector<32x128xf32>
    %c11_401 = arith.constant 11 : index
    %c0_402 = arith.constant 0 : index
    %c0_403 = arith.constant 0 : index
    %975 = vector.load %arg11[%c11_401, %c0_402, %c0_403] : memref<16x32x128xf32, #tpu.memory_space<vmem>>, vector<1x32x128xf32>
    %976 = vector.shape_cast %975 : vector<1x32x128xf32> to vector<32x128xf32>
    %977 = vector.extract_strided_slice %343 {offsets = [11, 0], sizes = [1, 128], strides = [1, 1]} : vector<16x128xf32> to vector<1x128xf32>
    %978 = vector.broadcast %977 : vector<1x128xf32> to vector<32x128xf32>
    %979 = arith.mulf %976, %978 : vector<32x128xf32>
    %980 = arith.addf %968, %979 : vector<32x128xf32>
    %c12_404 = arith.constant 12 : index
    %c0_405 = arith.constant 0 : index
    %c0_406 = arith.constant 0 : index
    %981 = vector.load %arg10[%c12_404, %c0_405, %c0_406] : memref<16x32x128xf32, #tpu.memory_space<vmem>>, vector<1x32x128xf32>
    %982 = vector.shape_cast %981 : vector<1x32x128xf32> to vector<32x128xf32>
    %983 = vector.extract_strided_slice %343 {offsets = [12, 0], sizes = [1, 128], strides = [1, 1]} : vector<16x128xf32> to vector<1x128xf32>
    %984 = vector.broadcast %983 : vector<1x128xf32> to vector<32x128xf32>
    %985 = arith.mulf %982, %984 : vector<32x128xf32>
    %986 = arith.addf %974, %985 : vector<32x128xf32>
    %c12_407 = arith.constant 12 : index
    %c0_408 = arith.constant 0 : index
    %c0_409 = arith.constant 0 : index
    %987 = vector.load %arg11[%c12_407, %c0_408, %c0_409] : memref<16x32x128xf32, #tpu.memory_space<vmem>>, vector<1x32x128xf32>
    %988 = vector.shape_cast %987 : vector<1x32x128xf32> to vector<32x128xf32>
    %989 = vector.extract_strided_slice %343 {offsets = [12, 0], sizes = [1, 128], strides = [1, 1]} : vector<16x128xf32> to vector<1x128xf32>
    %990 = vector.broadcast %989 : vector<1x128xf32> to vector<32x128xf32>
    %991 = arith.mulf %988, %990 : vector<32x128xf32>
    %992 = arith.addf %980, %991 : vector<32x128xf32>
    %c13_410 = arith.constant 13 : index
    %c0_411 = arith.constant 0 : index
    %c0_412 = arith.constant 0 : index
    %993 = vector.load %arg10[%c13_410, %c0_411, %c0_412] : memref<16x32x128xf32, #tpu.memory_space<vmem>>, vector<1x32x128xf32>
    %994 = vector.shape_cast %993 : vector<1x32x128xf32> to vector<32x128xf32>
    %995 = vector.extract_strided_slice %343 {offsets = [13, 0], sizes = [1, 128], strides = [1, 1]} : vector<16x128xf32> to vector<1x128xf32>
    %996 = vector.broadcast %995 : vector<1x128xf32> to vector<32x128xf32>
    %997 = arith.mulf %994, %996 : vector<32x128xf32>
    %998 = arith.addf %986, %997 : vector<32x128xf32>
    %c13_413 = arith.constant 13 : index
    %c0_414 = arith.constant 0 : index
    %c0_415 = arith.constant 0 : index
    %999 = vector.load %arg11[%c13_413, %c0_414, %c0_415] : memref<16x32x128xf32, #tpu.memory_space<vmem>>, vector<1x32x128xf32>
    %1000 = vector.shape_cast %999 : vector<1x32x128xf32> to vector<32x128xf32>
    %1001 = vector.extract_strided_slice %343 {offsets = [13, 0], sizes = [1, 128], strides = [1, 1]} : vector<16x128xf32> to vector<1x128xf32>
    %1002 = vector.broadcast %1001 : vector<1x128xf32> to vector<32x128xf32>
    %1003 = arith.mulf %1000, %1002 : vector<32x128xf32>
    %1004 = arith.addf %992, %1003 : vector<32x128xf32>
    %c14_416 = arith.constant 14 : index
    %c0_417 = arith.constant 0 : index
    %c0_418 = arith.constant 0 : index
    %1005 = vector.load %arg10[%c14_416, %c0_417, %c0_418] : memref<16x32x128xf32, #tpu.memory_space<vmem>>, vector<1x32x128xf32>
    %1006 = vector.shape_cast %1005 : vector<1x32x128xf32> to vector<32x128xf32>
    %1007 = vector.extract_strided_slice %343 {offsets = [14, 0], sizes = [1, 128], strides = [1, 1]} : vector<16x128xf32> to vector<1x128xf32>
    %1008 = vector.broadcast %1007 : vector<1x128xf32> to vector<32x128xf32>
    %1009 = arith.mulf %1006, %1008 : vector<32x128xf32>
    %1010 = arith.addf %998, %1009 : vector<32x128xf32>
    %c14_419 = arith.constant 14 : index
    %c0_420 = arith.constant 0 : index
    %c0_421 = arith.constant 0 : index
    %1011 = vector.load %arg11[%c14_419, %c0_420, %c0_421] : memref<16x32x128xf32, #tpu.memory_space<vmem>>, vector<1x32x128xf32>
    %1012 = vector.shape_cast %1011 : vector<1x32x128xf32> to vector<32x128xf32>
    %1013 = vector.extract_strided_slice %343 {offsets = [14, 0], sizes = [1, 128], strides = [1, 1]} : vector<16x128xf32> to vector<1x128xf32>
    %1014 = vector.broadcast %1013 : vector<1x128xf32> to vector<32x128xf32>
    %1015 = arith.mulf %1012, %1014 : vector<32x128xf32>
    %1016 = arith.addf %1004, %1015 : vector<32x128xf32>
    %c15_422 = arith.constant 15 : index
    %c0_423 = arith.constant 0 : index
    %c0_424 = arith.constant 0 : index
    %1017 = vector.load %arg10[%c15_422, %c0_423, %c0_424] : memref<16x32x128xf32, #tpu.memory_space<vmem>>, vector<1x32x128xf32>
    %1018 = vector.shape_cast %1017 : vector<1x32x128xf32> to vector<32x128xf32>
    %1019 = vector.extract_strided_slice %343 {offsets = [15, 0], sizes = [1, 128], strides = [1, 1]} : vector<16x128xf32> to vector<1x128xf32>
    %1020 = vector.broadcast %1019 : vector<1x128xf32> to vector<32x128xf32>
    %1021 = arith.mulf %1018, %1020 : vector<32x128xf32>
    %1022 = arith.addf %1010, %1021 : vector<32x128xf32>
    %c15_425 = arith.constant 15 : index
    %c0_426 = arith.constant 0 : index
    %c0_427 = arith.constant 0 : index
    %1023 = vector.load %arg11[%c15_425, %c0_426, %c0_427] : memref<16x32x128xf32, #tpu.memory_space<vmem>>, vector<1x32x128xf32>
    %1024 = vector.shape_cast %1023 : vector<1x32x128xf32> to vector<32x128xf32>
    %1025 = vector.extract_strided_slice %343 {offsets = [15, 0], sizes = [1, 128], strides = [1, 1]} : vector<16x128xf32> to vector<1x128xf32>
    %1026 = vector.broadcast %1025 : vector<1x128xf32> to vector<32x128xf32>
    %1027 = arith.mulf %1024, %1026 : vector<32x128xf32>
    %1028 = arith.addf %1016, %1027 : vector<32x128xf32>
    %c0_428 = arith.constant 0 : index
    %c0_429 = arith.constant 0 : index
    %1029 = vector.load %arg19[%c0_428, %c0_429] : memref<32x128xf32, #tpu.memory_space<vmem>>, vector<32x128xf32>
    tpu.vector_store %arg19[%c0_428, %c0_429], %1022 {strides = array<i32>} : memref<32x128xf32, #tpu.memory_space<vmem>>, vector<32x128xf32>,
    %c0_430 = arith.constant 0 : index
    %c0_431 = arith.constant 0 : index
    %1030 = vector.load %arg20[%c0_430, %c0_431] : memref<32x128xf32, #tpu.memory_space<vmem>>, vector<32x128xf32>
    tpu.vector_store %arg20[%c0_430, %c0_431], %1028 {strides = array<i32>} : memref<32x128xf32, #tpu.memory_space<vmem>>, vector<32x128xf32>,
    %c0_432 = arith.constant 0 : index
    %c0_433 = arith.constant 0 : index
    %1031 = vector.load %arg14[%c0_432, %c0_433] : memref<1x128xf32, #tpu.memory_space<vmem>>, vector<1x128xf32>
    %1032 = vector.broadcast %1031 : vector<1x128xf32> to vector<16x128xf32>
    %1033 = arith.mulf %1032, %343 : vector<16x128xf32>
    %1034 = arith.addf %826, %1033 : vector<16x128xf32>
    %1035 = arith.mulf %1034, %11 : vector<16x128xf32>
    %1036 = arith.truncf %1035 : vector<16x128xf32> to vector<16x128xbf16>
    %c0_434 = arith.constant 0 : index
    %c0_435 = arith.constant 0 : index
    %1037 = vector.load %arg15[%c0_434, %c0_435] : memref<128x128xbf16, #tpu.memory_space<vmem>>, vector<128x128xbf16>
    %cst_436 = arith.constant dense<0.000000e+00> : vector<16x128xf32>
    %1038 = tpu.matmul %1036, %1037, %cst_436 {dimension_numbers = #tpu.dot_dimension_numbers<[1], [0], [0], [1], [0, 0, 1, 1], [], []>} : vector<16x128xbf16>, vector<128x128xbf16>, vector<16x128xf32> -> vector<16x128xf32>
    %c0_437 = arith.constant 0 : index
    %c0_438 = arith.constant 0 : index
    %1039 = vector.load %arg16[%c0_437, %c0_438] : memref<1x128xf32, #tpu.memory_space<vmem>>, vector<1x128xf32>
    %1040 = vector.broadcast %1039 : vector<1x128xf32> to vector<16x128xf32>
    %1041 = arith.addf %1038, %1040 : vector<16x128xf32>
    %c0_439 = arith.constant 0 : index
    %c0_440 = arith.constant 0 : index
    %c0_441 = arith.constant 0 : index
    %1042 = vector.load %arg17[%c0_439, %c0_440, %c0_441] : memref<1x16x128xf32, #tpu.memory_space<vmem>>, vector<1x16x128xf32>
    %1043 = vector.shape_cast %1042 : vector<1x16x128xf32> to vector<16x128xf32>
    %1044 = vector.shape_cast %1041 : vector<16x128xf32> to vector<1x16x128xf32>
    tpu.vector_store %arg17[%c0_439, %c0_440, %c0_441], %1044 {strides = array<i32>} : memref<1x16x128xf32, #tpu.memory_space<vmem>>, vector<1x16x128xf32>,
    return
  }
  func.func @transform_0(%arg0: i32, %arg1: i32) -> (i32, i32, i32) {
    %c0_i32 = arith.constant 0 : i32
    %c0_i32_0 = arith.constant 0 : i32
    return %arg0, %arg1, %c0_i32 : i32, i32, i32
  }
  func.func @transform_1(%arg0: i32, %arg1: i32) -> (i32, i32) {
    %c0_i32 = arith.constant 0 : i32
    %c0_i32_0 = arith.constant 0 : i32
    %c0_i32_1 = arith.constant 0 : i32
    return %c0_i32, %c0_i32_0 : i32, i32
  }
  func.func @transform_2(%arg0: i32, %arg1: i32) -> (i32, i32) {
    %c0_i32 = arith.constant 0 : i32
    %c0_i32_0 = arith.constant 0 : i32
    %c0_i32_1 = arith.constant 0 : i32
    return %c0_i32, %c0_i32_0 : i32, i32
  }
  func.func @transform_3(%arg0: i32, %arg1: i32) -> (i32, i32) {
    %c0_i32 = arith.constant 0 : i32
    %c0_i32_0 = arith.constant 0 : i32
    %c0_i32_1 = arith.constant 0 : i32
    return %c0_i32, %c0_i32_0 : i32, i32
  }
  func.func @transform_4(%arg0: i32, %arg1: i32) -> (i32, i32) {
    %c0_i32 = arith.constant 0 : i32
    %c0_i32_0 = arith.constant 0 : i32
    %c0_i32_1 = arith.constant 0 : i32
    return %c0_i32, %c0_i32_0 : i32, i32
  }
  func.func @transform_5(%arg0: i32, %arg1: i32) -> (i32, i32, i32) {
    %c0_i32 = arith.constant 0 : i32
    %c0_i32_0 = arith.constant 0 : i32
    %c0_i32_1 = arith.constant 0 : i32
    %c0_i32_2 = arith.constant 0 : i32
    return %c0_i32, %c0_i32_0, %c0_i32_1 : i32, i32, i32
  }
  func.func @transform_6(%arg0: i32, %arg1: i32) -> (i32, i32, i32) {
    %c0_i32 = arith.constant 0 : i32
    %c0_i32_0 = arith.constant 0 : i32
    %c0_i32_1 = arith.constant 0 : i32
    %c0_i32_2 = arith.constant 0 : i32
    return %c0_i32, %c0_i32_0, %c0_i32_1 : i32, i32, i32
  }
  func.func @transform_7(%arg0: i32, %arg1: i32) -> (i32, i32, i32) {
    %c0_i32 = arith.constant 0 : i32
    %c0_i32_0 = arith.constant 0 : i32
    %c0_i32_1 = arith.constant 0 : i32
    %c0_i32_2 = arith.constant 0 : i32
    return %c0_i32, %c0_i32_0, %c0_i32_1 : i32, i32, i32
  }
  func.func @transform_8(%arg0: i32, %arg1: i32) -> (i32, i32, i32) {
    %c0_i32 = arith.constant 0 : i32
    %c0_i32_0 = arith.constant 0 : i32
    %c0_i32_1 = arith.constant 0 : i32
    %c0_i32_2 = arith.constant 0 : i32
    return %c0_i32, %c0_i32_0, %c0_i32_1 : i32, i32, i32
  }
  func.func @transform_9(%arg0: i32, %arg1: i32) -> (i32, i32, i32) {
    %c0_i32 = arith.constant 0 : i32
    %c0_i32_0 = arith.constant 0 : i32
    %c0_i32_1 = arith.constant 0 : i32
    %c0_i32_2 = arith.constant 0 : i32
    return %c0_i32, %c0_i32_0, %c0_i32_1 : i32, i32, i32
  }
  func.func @transform_10(%arg0: i32, %arg1: i32) -> (i32, i32) {
    %c0_i32 = arith.constant 0 : i32
    %c0_i32_0 = arith.constant 0 : i32
    %c0_i32_1 = arith.constant 0 : i32
    return %c0_i32, %c0_i32_0 : i32, i32
  }
  func.func @transform_11(%arg0: i32, %arg1: i32) -> (i32, i32) {
    %c0_i32 = arith.constant 0 : i32
    %c0_i32_0 = arith.constant 0 : i32
    %c0_i32_1 = arith.constant 0 : i32
    return %c0_i32, %c0_i32_0 : i32, i32
  }
  func.func @transform_12(%arg0: i32, %arg1: i32) -> (i32, i32) {
    %c0_i32 = arith.constant 0 : i32
    %c0_i32_0 = arith.constant 0 : i32
    %c0_i32_1 = arith.constant 0 : i32
    return %c0_i32, %c0_i32_0 : i32, i32
  }
  func.func @transform_13(%arg0: i32, %arg1: i32) -> (i32, i32) {
    %c0_i32 = arith.constant 0 : i32
    %c0_i32_0 = arith.constant 0 : i32
    %c0_i32_1 = arith.constant 0 : i32
    return %c0_i32, %c0_i32_0 : i32, i32
  }
  func.func @transform_14(%arg0: i32, %arg1: i32) -> (i32, i32) {
    %c0_i32 = arith.constant 0 : i32
    %c0_i32_0 = arith.constant 0 : i32
    %c0_i32_1 = arith.constant 0 : i32
    return %c0_i32, %c0_i32_0 : i32, i32
  }
  func.func @transform_15(%arg0: i32, %arg1: i32) -> (i32, i32, i32) {
    %c0_i32 = arith.constant 0 : i32
    %c0_i32_0 = arith.constant 0 : i32
    return %arg0, %arg1, %c0_i32 : i32, i32, i32
  }
}

</mosaic_0001>

<llo_original>
// kernel: tpu_custom_call.1
$region0: #{tpu_custom_call.1}
  #allocation0 [shape = 'u32[]', space=smem, size = 0x4, offset = 0x4, fixed_abs, tag = 'smem constant byte address 0x4 - core index']
  #allocation1 [shape = 'u32[144,128]{1,0:T(1,128)}', space=vmem, size = 0x12000, scoped, tag = 'internal scratch']
  #allocation2 [shape = 'f32[64,128]{1,0:T(8,128)}', space=vmem, size = 0x8000, scoped, tag = 'scratch operand']
  #allocation3 [shape = 'f32[32,128]{1,0:T(8,128)}', space=vmem, size = 0x4000, scoped, tag = 'scratch operand']
  #allocation4 [shape = 'f32[32,128]{1,0:T(8,128)}', space=vmem, size = 0x4000, scoped, tag = 'scratch operand']
  %s0 = inlined_call_operand.hbm [shape: f32[2,64,128], index: 0, kind: input, shape index: {}]
  %s1 = inlined_call_operand.hbm [shape: bf16[128,384], index: 1, kind: input, shape index: {}]
  %s2 = inlined_call_operand.vmem [shape: f32[1,384], index: 2, kind: input, shape index: {}]
  %s3 = inlined_call_operand.hbm [shape: f32[64,128], index: 3, kind: input, shape index: {}]
  %s4 = inlined_call_operand.vmem [shape: f32[1,128], index: 4, kind: input, shape index: {}]
  %s5 = inlined_call_operand.hbm [shape: f32[16,16,128], index: 5, kind: input, shape index: {}]
  %s6 = inlined_call_operand.hbm [shape: f32[32,16,128], index: 6, kind: input, shape index: {}]
  %s7 = inlined_call_operand.hbm [shape: f32[32,16,128], index: 7, kind: input, shape index: {}]
  %s8 = inlined_call_operand.hbm [shape: f32[16,32,128], index: 8, kind: input, shape index: {}]
  %s9 = inlined_call_operand.hbm [shape: f32[16,32,128], index: 9, kind: input, shape index: {}]
  %s10 = inlined_call_operand.vmem [shape: f32[32,128], index: 10, kind: input, shape index: {}]
  %s11 = inlined_call_operand.hbm [shape: f32[32,128], index: 11, kind: input, shape index: {}]
  %s12 = inlined_call_operand.vmem [shape: f32[1,128], index: 12, kind: input, shape index: {}]
  %s13 = inlined_call_operand.hbm [shape: bf16[128,128], index: 13, kind: input, shape index: {}]
  %s14 = inlined_call_operand.vmem [shape: f32[1,128], index: 14, kind: input, shape index: {}]
  %s15 = inlined_call_operand.hbm [shape: f32[2,64,128], index: 15, kind: output, shape index: {}]
  %s16 = sld [smem:[#allocation0]]
  $region137: #{tpu_custom_call.1} parent=0
    _
  %s18 = ssub.s32 1, %s16
  %s19 = scalar_select 0, %s18, %s16
  $region1: #{tpu_custom_call.1} parent=0
    #allocation5 [shape = 'u8[16384]{0}', space=vmem, size = 0x4000, scoped, tag = 'input window, operand 0']
    #allocation6 [shape = 's32[2]{0}', space=sflag, size = 0x8, scoped, tag = 'scoped memory for tpu_custom_call.1']
    #allocation7 [shape = 's32[2]{0}', space=sflag, size = 0x8, scoped, tag = 'scoped memory for tpu_custom_call.1']
    #allocation8 [shape = 'u8[98304]{0}', space=vmem, size = 0x18000, scoped, tag = 'input window, operand 1, single buffered']
    #allocation9 [shape = 's32[1]{0}', space=sflag, size = 0x4, scoped, tag = 'scoped memory for tpu_custom_call.1']
    #allocation10 [shape = 'u8[32768]{0}', space=vmem, size = 0x8000, scoped, tag = 'input window, operand 3, single buffered']
    #allocation11 [shape = 'u8[131072]{0}', space=vmem, size = 0x20000, scoped, tag = 'input window, operand 5, single buffered']
    #allocation12 [shape = 's32[1]{0}', space=sflag, size = 0x4, scoped, tag = 'scoped memory for tpu_custom_call.1']
    #allocation13 [shape = 'u8[262144]{0}', space=vmem, size = 0x40000, scoped, tag = 'input window, operand 6, single buffered']
    #allocation14 [shape = 'u8[262144]{0}', space=vmem, size = 0x40000, scoped, tag = 'input window, operand 7, single buffered']
    #allocation15 [shape = 's32[1]{0}', space=sflag, size = 0x4, scoped, tag = 'scoped memory for tpu_custom_call.1']
    #allocation16 [shape = 'u8[262144]{0}', space=vmem, size = 0x40000, scoped, tag = 'input window, operand 8, single buffered']
    #allocation17 [shape = 'u8[262144]{0}', space=vmem, size = 0x40000, scoped, tag = 'input window, operand 9, single buffered']
    #allocation18 [shape = 's32[1]{0}', space=sflag, size = 0x4, scoped, tag = 'scoped memory for tpu_custom_call.1']
    #allocation19 [shape = 'u8[16384]{0}', space=vmem, size = 0x4000, scoped, tag = 'input window, operand 11, single buffered']
    #allocation20 [shape = 'u8[32768]{0}', space=vmem, size = 0x8000, scoped, tag = 'input window, operand 13, single buffered']
    #allocation21 [shape = 's32[1]{0}', space=sflag, size = 0x4, scoped, tag = 'scoped memory for tpu_custom_call.1']
    #allocation22 [shape = 'u8[16384]{0}', space=vmem, size = 0x4000, scoped, tag = 'output window, operand 0']
    %20 = vsyncpa [#allocation6], 0
    %s21 = scalar_lea.sflag [#allocation6], 1
    %22 = vsyncpa %s21, 0
    %23 = vsyncpa [#allocation9], 0
    %24 = vsyncpa [#allocation12], 0
    %25 = vsyncpa [#allocation15], 0
    %26 = vsyncpa [#allocation18], 0
    %27 = vsyncpa [#allocation21], 0
    %28 = vsyncpa [#allocation7], 0
    %s29 = scalar_lea.sflag [#allocation7], 1
    %30 = vsyncpa %s29, 0
    loop: start=0, step=1, limit=10
    $region2: #{tpu_custom_call.1} parent=1 // loop_pre_header
      _
    $region3: #{tpu_custom_call.1} parent=1 // loop_header
      %s32 = sphi 0, %s36
      %p33 = scmp.ge.s32.totalorder %s32, 10
      %s39 = sphi 0, %s51
      %s40 = sphi 0, %s47
      %s41 = sphi 0, %s39
      %s42 = sphi 0, %s40
      %s43 = sphi 0, %s41
      %s44 = sphi 0, %s42
      %s56 = sphi 0, %s58
      %s59 = sphi 0, %s56
      %s60 = sphi 0, %s59
      %s76 = sphi 0, %s60
      %s80 = sphi 0, %s80
      %s82 = sphi 0, %s80
      %s83 = sphi 0, %s82
      %s97 = sphi 0, %s83
      %s101 = sphi 0, %s101
      %s103 = sphi 0, %s101
      %s104 = sphi 0, %s103
      %s118 = sphi 0, %s104
      %s122 = sphi 0, %s122
      %s124 = sphi 0, %s122
      %s125 = sphi 0, %s124
      %s139 = sphi 0, %s125
      %s143 = sphi 0, %s143
      %s145 = sphi 0, %s143
      %s146 = sphi 0, %s145
      %s160 = sphi 0, %s146
      %s164 = sphi 0, %s164
      %s166 = sphi 0, %s164
      %s167 = sphi 0, %s166
      %s181 = sphi 0, %s167
      %s185 = sphi 0, %s185
      %s187 = sphi 0, %s185
      %s188 = sphi 0, %s187
      %s202 = sphi 0, %s188
      %s206 = sphi 0, %s206
      %s208 = sphi 0, %s206
      %s209 = sphi 0, %s208
      %s223 = sphi 0, %s209
      %s227 = sphi 0, %s227
      %s229 = sphi 0, %s227
      %s230 = sphi 0, %s229
      %s244 = sphi 0, %s230
      %s248 = sphi 0, %s248
      %s250 = sphi 0, %s248
      %s251 = sphi 0, %s250
      %s265 = sphi 0, %s251
      %s269 = sphi 0, %s269
      %s271 = sphi 0, %s269
      %s272 = sphi 0, %s271
      %s286 = sphi 0, %s272
      %s290 = sphi 0, %s290
      %s292 = sphi 0, %s290
      %s293 = sphi 0, %s292
      %s307 = sphi 0, %s293
      %s311 = sphi 0, %s311
      %s313 = sphi 0, %s311
      %s314 = sphi 0, %s313
      %s328 = sphi 0, %s314
      %s332 = sphi 0, %s332
      %s334 = sphi 0, %s332
      %s335 = sphi 0, %s334
      %s349 = sphi 0, %s335
      %s353 = sphi 0, %s353
      %s355 = sphi 0, %s353
      %s356 = sphi 0, %s355
      %s370 = sphi 0, %s356
      %s378 = sphi 0, %s380
      %s381 = sphi 0, %s378
      %s382 = sphi 0, %s381
      %s398 = sphi 0, %s382
    $region4: #{tpu_custom_call.1} parent=1 // loop_header_branch
      %35 = sbr.rel (%p33) target = $region8
    $region5: #{tpu_custom_call.1} parent=1 // loop_body
      %s37 = ssub.s32 %s32, 1
      %s38 = ssub.s32 %s32, 2
      %s45 = sadd.s32 1, %s40
      %p46 = scmp.ge.s32.totalorder %s45, 4
      %s47 = scalar_select %p46, 0, %s45
      %s48 = sadd.s32 1, %s39
      %s49 = scalar_select %p46, %s48, %s39
      %p50 = scmp.ge.s32.totalorder %s49, 2
      %s51 = scalar_select %p50, 0, %s49
      %s52 = ssub.s32 %s39, %s51
      %s53 = ssub.s32 %s40, %s47
      %s54 = sor.u32 %s52, %s53
      %p55 = scmp.eq.s32.totalorder %s54, 0
      %s57 = sadd.s32 %s56, 1
      %s58 = scalar_select %p55, %s56, %s57
      %p61 = pneg %p55
      %p62 = scmp.eq.s32.totalorder %s32, 7
      %p63 = por %p61, %p62
      %p64 = scmp.ne.s32.totalorder %s56, %s59
      %p65 = scmp.eq.s32.totalorder %s32, 0
      %p66 = por %p64, %p65
      %p67 = scmp.ne.s32.totalorder %s56, %s59
      %p68 = scmp.eq.s32.totalorder %s37, 7
      %p69 = por %p67, %p68
      %p70 = scmp.ne.s32.totalorder %s59, %s60
      %p71 = scmp.eq.s32.totalorder %s37, 0
      %p72 = por %p70, %p71
      %p73 = scmp.ne.s32.totalorder %s59, %s60
      %p74 = scmp.eq.s32.totalorder %s38, 7
      %p75 = por %p73, %p74
      %p77 = scmp.ne.s32.totalorder %s60, %s76
      %p78 = scmp.eq.s32.totalorder %s38, 0
      %p79 = por %p77, %p78
      %s81 = sadd.s32 %s80, 1
      %p84 = scmp.eq.s32.totalorder %s32, 7
      %p85 = scmp.ne.s32.totalorder %s80, %s82
      %p86 = scmp.eq.s32.totalorder %s32, 0
      %p87 = por %p85, %p86
      %p88 = scmp.ne.s32.totalorder %s80, %s82
      %p89 = scmp.eq.s32.totalorder %s37, 7
      %p90 = por %p88, %p89
      %p91 = scmp.ne.s32.totalorder %s82, %s83
      %p92 = scmp.eq.s32.totalorder %s37, 0
      %p93 = por %p91, %p92
      %p94 = scmp.ne.s32.totalorder %s82, %s83
      %p95 = scmp.eq.s32.totalorder %s38, 7
      %p96 = por %p94, %p95
      %p98 = scmp.ne.s32.totalorder %s83, %s97
      %p99 = scmp.eq.s32.totalorder %s38, 0
      %p100 = por %p98, %p99
      %s102 = sadd.s32 %s101, 1
      %p105 = scmp.eq.s32.totalorder %s32, 7
      %p106 = scmp.ne.s32.totalorder %s101, %s103
      %p107 = scmp.eq.s32.totalorder %s32, 0
      %p108 = por %p106, %p107
      %p109 = scmp.ne.s32.totalorder %s101, %s103
      %p110 = scmp.eq.s32.totalorder %s37, 7
      %p111 = por %p109, %p110
      %p112 = scmp.ne.s32.totalorder %s103, %s104
      %p113 = scmp.eq.s32.totalorder %s37, 0
      %p114 = por %p112, %p113
      %p115 = scmp.ne.s32.totalorder %s103, %s104
      %p116 = scmp.eq.s32.totalorder %s38, 7
      %p117 = por %p115, %p116
      %p119 = scmp.ne.s32.totalorder %s104, %s118
      %p120 = scmp.eq.s32.totalorder %s38, 0
      %p121 = por %p119, %p120
      %s123 = sadd.s32 %s122, 1
      %p126 = scmp.eq.s32.totalorder %s32, 7
      %p127 = scmp.ne.s32.totalorder %s122, %s124
      %p128 = scmp.eq.s32.totalorder %s32, 0
      %p129 = por %p127, %p128
      %p130 = scmp.ne.s32.totalorder %s122, %s124
      %p131 = scmp.eq.s32.totalorder %s37, 7
      %p132 = por %p130, %p131
      %p133 = scmp.ne.s32.totalorder %s124, %s125
      %p134 = scmp.eq.s32.totalorder %s37, 0
      %p135 = por %p133, %p134
      %p136 = scmp.ne.s32.totalorder %s124, %s125
      %p137 = scmp.eq.s32.totalorder %s38, 7
      %p138 = por %p136, %p137
      %p140 = scmp.ne.s32.totalorder %s125, %s139
      %p141 = scmp.eq.s32.totalorder %s38, 0
      %p142 = por %p140, %p141
      %s144 = sadd.s32 %s143, 1
      %p147 = scmp.eq.s32.totalorder %s32, 7
      %p148 = scmp.ne.s32.totalorder %s143, %s145
      %p149 = scmp.eq.s32.totalorder %s32, 0
      %p150 = por %p148, %p149
      %p151 = scmp.ne.s32.totalorder %s143, %s145
      %p152 = scmp.eq.s32.totalorder %s37, 7
      %p153 = por %p151, %p152
      %p154 = scmp.ne.s32.totalorder %s145, %s146
      %p155 = scmp.eq.s32.totalorder %s37, 0
      %p156 = por %p154, %p155
      %p157 = scmp.ne.s32.totalorder %s145, %s146
      %p158 = scmp.eq.s32.totalorder %s38, 7
      %p159 = por %p157, %p158
      %p161 = scmp.ne.s32.totalorder %s146, %s160
      %p162 = scmp.eq.s32.totalorder %s38, 0
      %p163 = por %p161, %p162
      %s165 = sadd.s32 %s164, 1
      %p168 = scmp.eq.s32.totalorder %s32, 7
      %p169 = scmp.ne.s32.totalorder %s164, %s166
      %p170 = scmp.eq.s32.totalorder %s32, 0
      %p171 = por %p169, %p170
      %p172 = scmp.ne.s32.totalorder %s164, %s166
      %p173 = scmp.eq.s32.totalorder %s37, 7
      %p174 = por %p172, %p173
      %p175 = scmp.ne.s32.totalorder %s166, %s167
      %p176 = scmp.eq.s32.totalorder %s37, 0
      %p177 = por %p175, %p176
      %p178 = scmp.ne.s32.totalorder %s166, %s167
      %p179 = scmp.eq.s32.totalorder %s38, 7
      %p180 = por %p178, %p179
      %p182 = scmp.ne.s32.totalorder %s167, %s181
      %p183 = scmp.eq.s32.totalorder %s38, 0
      %p184 = por %p182, %p183
      %s186 = sadd.s32 %s185, 1
      %p189 = scmp.eq.s32.totalorder %s32, 7
      %p190 = scmp.ne.s32.totalorder %s185, %s187
      %p191 = scmp.eq.s32.totalorder %s32, 0
      %p192 = por %p190, %p191
      %p193 = scmp.ne.s32.totalorder %s185, %s187
      %p194 = scmp.eq.s32.totalorder %s37, 7
      %p195 = por %p193, %p194
      %p196 = scmp.ne.s32.totalorder %s187, %s188
      %p197 = scmp.eq.s32.totalorder %s37, 0
      %p198 = por %p196, %p197
      %p199 = scmp.ne.s32.totalorder %s187, %s188
      %p200 = scmp.eq.s32.totalorder %s38, 7
      %p201 = por %p199, %p200
      %p203 = scmp.ne.s32.totalorder %s188, %s202
      %p204 = scmp.eq.s32.totalorder %s38, 0
      %p205 = por %p203, %p204
      %s207 = sadd.s32 %s206, 1
      %p210 = scmp.eq.s32.totalorder %s32, 7
      %p211 = scmp.ne.s32.totalorder %s206, %s208
      %p212 = scmp.eq.s32.totalorder %s32, 0
      %p213 = por %p211, %p212
      %p214 = scmp.ne.s32.totalorder %s206, %s208
      %p215 = scmp.eq.s32.totalorder %s37, 7
      %p216 = por %p214, %p215
      %p217 = scmp.ne.s32.totalorder %s208, %s209
      %p218 = scmp.eq.s32.totalorder %s37, 0
      %p219 = por %p217, %p218
      %p220 = scmp.ne.s32.totalorder %s208, %s209
      %p221 = scmp.eq.s32.totalorder %s38, 7
      %p222 = por %p220, %p221
      %p224 = scmp.ne.s32.totalorder %s209, %s223
      %p225 = scmp.eq.s32.totalorder %s38, 0
      %p226 = por %p224, %p225
      %s228 = sadd.s32 %s227, 1
      %p231 = scmp.eq.s32.totalorder %s32, 7
      %p232 = scmp.ne.s32.totalorder %s227, %s229
      %p233 = scmp.eq.s32.totalorder %s32, 0
      %p234 = por %p232, %p233
      %p235 = scmp.ne.s32.totalorder %s227, %s229
      %p236 = scmp.eq.s32.totalorder %s37, 7
      %p237 = por %p235, %p236
      %p238 = scmp.ne.s32.totalorder %s229, %s230
      %p239 = scmp.eq.s32.totalorder %s37, 0
      %p240 = por %p238, %p239
      %p241 = scmp.ne.s32.totalorder %s229, %s230
      %p242 = scmp.eq.s32.totalorder %s38, 7
      %p243 = por %p241, %p242
      %p245 = scmp.ne.s32.totalorder %s230, %s244
      %p246 = scmp.eq.s32.totalorder %s38, 0
      %p247 = por %p245, %p246
      %s249 = sadd.s32 %s248, 1
      %p252 = scmp.eq.s32.totalorder %s32, 7
      %p253 = scmp.ne.s32.totalorder %s248, %s250
      %p254 = scmp.eq.s32.totalorder %s32, 0
      %p255 = por %p253, %p254
      %p256 = scmp.ne.s32.totalorder %s248, %s250
      %p257 = scmp.eq.s32.totalorder %s37, 7
      %p258 = por %p256, %p257
      %p259 = scmp.ne.s32.totalorder %s250, %s251
      %p260 = scmp.eq.s32.totalorder %s37, 0
      %p261 = por %p259, %p260
      %p262 = scmp.ne.s32.totalorder %s250, %s251
      %p263 = scmp.eq.s32.totalorder %s38, 7
      %p264 = por %p262, %p263
      %p266 = scmp.ne.s32.totalorder %s251, %s265
      %p267 = scmp.eq.s32.totalorder %s38, 0
      %p268 = por %p266, %p267
      %s270 = sadd.s32 %s269, 1
      %p273 = scmp.eq.s32.totalorder %s32, 7
      %p274 = scmp.ne.s32.totalorder %s269, %s271
      %p275 = scmp.eq.s32.totalorder %s32, 0
      %p276 = por %p274, %p275
      %p277 = scmp.ne.s32.totalorder %s269, %s271
      %p278 = scmp.eq.s32.totalorder %s37, 7
      %p279 = por %p277, %p278
      %p280 = scmp.ne.s32.totalorder %s271, %s272
      %p281 = scmp.eq.s32.totalorder %s37, 0
      %p282 = por %p280, %p281
      %p283 = scmp.ne.s32.totalorder %s271, %s272
      %p284 = scmp.eq.s32.totalorder %s38, 7
      %p285 = por %p283, %p284
      %p287 = scmp.ne.s32.totalorder %s272, %s286
      %p288 = scmp.eq.s32.totalorder %s38, 0
      %p289 = por %p287, %p288
      %s291 = sadd.s32 %s290, 1
      %p294 = scmp.eq.s32.totalorder %s32, 7
      %p295 = scmp.ne.s32.totalorder %s290, %s292
      %p296 = scmp.eq.s32.totalorder %s32, 0
      %p297 = por %p295, %p296
      %p298 = scmp.ne.s32.totalorder %s290, %s292
      %p299 = scmp.eq.s32.totalorder %s37, 7
      %p300 = por %p298, %p299
      %p301 = scmp.ne.s32.totalorder %s292, %s293
      %p302 = scmp.eq.s32.totalorder %s37, 0
      %p303 = por %p301, %p302
      %p304 = scmp.ne.s32.totalorder %s292, %s293
      %p305 = scmp.eq.s32.totalorder %s38, 7
      %p306 = por %p304, %p305
      %p308 = scmp.ne.s32.totalorder %s293, %s307
      %p309 = scmp.eq.s32.totalorder %s38, 0
      %p310 = por %p308, %p309
      %s312 = sadd.s32 %s311, 1
      %p315 = scmp.eq.s32.totalorder %s32, 7
      %p316 = scmp.ne.s32.totalorder %s311, %s313
      %p317 = scmp.eq.s32.totalorder %s32, 0
      %p318 = por %p316, %p317
      %p319 = scmp.ne.s32.totalorder %s311, %s313
      %p320 = scmp.eq.s32.totalorder %s37, 7
      %p321 = por %p319, %p320
      %p322 = scmp.ne.s32.totalorder %s313, %s314
      %p323 = scmp.eq.s32.totalorder %s37, 0
      %p324 = por %p322, %p323
      %p325 = scmp.ne.s32.totalorder %s313, %s314
      %p326 = scmp.eq.s32.totalorder %s38, 7
      %p327 = por %p325, %p326
      %p329 = scmp.ne.s32.totalorder %s314, %s328
      %p330 = scmp.eq.s32.totalorder %s38, 0
      %p331 = por %p329, %p330
      %s333 = sadd.s32 %s332, 1
      %p336 = scmp.eq.s32.totalorder %s32, 7
      %p337 = scmp.ne.s32.totalorder %s332, %s334
      %p338 = scmp.eq.s32.totalorder %s32, 0
      %p339 = por %p337, %p338
      %p340 = scmp.ne.s32.totalorder %s332, %s334
      %p341 = scmp.eq.s32.totalorder %s37, 7
      %p342 = por %p340, %p341
      %p343 = scmp.ne.s32.totalorder %s334, %s335
      %p344 = scmp.eq.s32.totalorder %s37, 0
      %p345 = por %p343, %p344
      %p346 = scmp.ne.s32.totalorder %s334, %s335
      %p347 = scmp.eq.s32.totalorder %s38, 7
      %p348 = por %p346, %p347
      %p350 = scmp.ne.s32.totalorder %s335, %s349
      %p351 = scmp.eq.s32.totalorder %s38, 0
      %p352 = por %p350, %p351
      %s354 = sadd.s32 %s353, 1
      %p357 = scmp.eq.s32.totalorder %s32, 7
      %p358 = scmp.ne.s32.totalorder %s353, %s355
      %p359 = scmp.eq.s32.totalorder %s32, 0
      %p360 = por %p358, %p359
      %p361 = scmp.ne.s32.totalorder %s353, %s355
      %p362 = scmp.eq.s32.totalorder %s37, 7
      %p363 = por %p361, %p362
      %p364 = scmp.ne.s32.totalorder %s355, %s356
      %p365 = scmp.eq.s32.totalorder %s37, 0
      %p366 = por %p364, %p365
      %p367 = scmp.ne.s32.totalorder %s355, %s356
      %p368 = scmp.eq.s32.totalorder %s38, 7
      %p369 = por %p367, %p368
      %p371 = scmp.ne.s32.totalorder %s356, %s370
      %p372 = scmp.eq.s32.totalorder %s38, 0
      %p373 = por %p371, %p372
      %s374 = ssub.s32 %s39, %s51
      %s375 = ssub.s32 %s40, %s47
      %s376 = sor.u32 %s374, %s375
      %p377 = scmp.eq.s32.totalorder %s376, 0
      %s379 = sadd.s32 %s378, 1
      %s380 = scalar_select %p377, %s378, %s379
      %p383 = pneg %p377
      %p384 = scmp.eq.s32.totalorder %s32, 7
      %p385 = por %p383, %p384
      %p386 = scmp.ne.s32.totalorder %s378, %s381
      %p387 = scmp.eq.s32.totalorder %s32, 0
      %p388 = por %p386, %p387
      %p389 = scmp.ne.s32.totalorder %s378, %s381
      %p390 = scmp.eq.s32.totalorder %s37, 7
      %p391 = por %p389, %p390
      %p392 = scmp.ne.s32.totalorder %s381, %s382
      %p393 = scmp.eq.s32.totalorder %s37, 0
      %p394 = por %p392, %p393
      %p395 = scmp.ne.s32.totalorder %s381, %s382
      %p396 = scmp.eq.s32.totalorder %s38, 7
      %p397 = por %p395, %p396
      %p399 = scmp.ne.s32.totalorder %s382, %s398
      %p400 = scmp.eq.s32.totalorder %s38, 0
      %p401 = por %p399, %p400
      %p402 = scmp.le.s32.totalorder 1, %s32
      %p403 = scmp.lt.s32.totalorder %s32, 9
      %p404 = pnand %p402, %p403
      %p405 = pneg %p404
      // Predicated region
      $region9: #{tpu_custom_call.1} parent=5 // pred_check
        _
      $region10: #{tpu_custom_call.1} parent=5 // pred_check_branch
        %407 = sbr.rel (%p404) target = $region12
      $region11: #{tpu_custom_call.1} parent=5 // pred_region
        %s408 = ssub.s32 %s32, 1
        // Predicated region
        $region13: #{tpu_custom_call.1} parent=11 // pred_check
          %p409 = pneg %p93
        $region14: #{tpu_custom_call.1} parent=11 // pred_check_branch
          %411 = sbr.rel (%p409) target = $region16
        $region15: #{tpu_custom_call.1} parent=11 // pred_region
          %s413 = ssub.s32 3072, 3072
          %414 = vsyncadd [#allocation9], %s413
          %s415 = sshll.u32 [#allocation8], 4
          %s416 = int_to_ptr.vmem [resolvable:$true] %s415
          %421 = dma.hbm_to_vmem [thread:$0]  %s1, 3072, %s416, [#allocation9], 192, 192, 12
        $region16: #{tpu_custom_call.1} parent=11 // pred_fallthru
          _
        // Predicated region
        $region17: #{tpu_custom_call.1} parent=11 // pred_check
          %p422 = pneg %p114
        $region18: #{tpu_custom_call.1} parent=11 // pred_check_branch
          %424 = sbr.rel (%p422) target = $region20
        $region19: #{tpu_custom_call.1} parent=11 // pred_region
          _
        $region20: #{tpu_custom_call.1} parent=11 // pred_fallthru
          _
        // Predicated region
        $region21: #{tpu_custom_call.1} parent=11 // pred_check
          %p425 = pneg %p135
        $region22: #{tpu_custom_call.1} parent=11 // pred_check_branch
          %427 = sbr.rel (%p425) target = $region24
        $region23: #{tpu_custom_call.1} parent=11 // pred_region
          %s429 = ssub.s32 1024, 1024
          %430 = vsyncadd [#allocation9], %s429
          %s431 = sshll.u32 [#allocation10], 4
          %s432 = int_to_ptr.vmem [resolvable:$true] %s431
          %437 = dma.hbm_to_vmem [thread:$0]  %s3, 1024, %s432, [#allocation9], 128, 128, 8
        $region24: #{tpu_custom_call.1} parent=11 // pred_fallthru
          _
        // Predicated region
        $region25: #{tpu_custom_call.1} parent=11 // pred_check
          %p438 = pneg %p156
        $region26: #{tpu_custom_call.1} parent=11 // pred_check_branch
          %440 = sbr.rel (%p438) target = $region28
        $region27: #{tpu_custom_call.1} parent=11 // pred_region
          _
        $region28: #{tpu_custom_call.1} parent=11 // pred_fallthru
          _
        // Predicated region
        $region29: #{tpu_custom_call.1} parent=11 // pred_check
          %p441 = pneg %p177
        $region30: #{tpu_custom_call.1} parent=11 // pred_check_branch
          %443 = sbr.rel (%p441) target = $region32
        $region31: #{tpu_custom_call.1} parent=11 // pred_region
          %s445 = ssub.s32 4096, 4096
          %446 = vsyncadd [#allocation12], %s445
          %s447 = sshll.u32 [#allocation11], 4
          %s448 = int_to_ptr.vmem [resolvable:$true] %s447
          %453 = dma.hbm_to_vmem [thread:$0]  %s5, 4096, %s448, [#allocation12], 128, 128, 8
        $region32: #{tpu_custom_call.1} parent=11 // pred_fallthru
          _
        // Predicated region
        $region33: #{tpu_custom_call.1} parent=11 // pred_check
          %p454 = pneg %p198
        $region34: #{tpu_custom_call.1} parent=11 // pred_check_branch
          %456 = sbr.rel (%p454) target = $region36
        $region35: #{tpu_custom_call.1} parent=11 // pred_region
          %s458 = ssub.s32 8192, 8192
          %459 = vsyncadd [#allocation12], %s458
          %s460 = sshll.u32 [#allocation13], 4
          %s461 = int_to_ptr.vmem [resolvable:$true] %s460
          %466 = dma.hbm_to_vmem [thread:$0]  %s6, 8192, %s461, [#allocation12], 128, 128, 8
        $region36: #{tpu_custom_call.1} parent=11 // pred_fallthru
          _
        // Predicated region
        $region37: #{tpu_custom_call.1} parent=11 // pred_check
          %p467 = pneg %p219
        $region38: #{tpu_custom_call.1} parent=11 // pred_check_branch
          %469 = sbr.rel (%p467) target = $region40
        $region39: #{tpu_custom_call.1} parent=11 // pred_region
          %s471 = ssub.s32 8192, 8192
          %472 = vsyncadd [#allocation15], %s471
          %s473 = sshll.u32 [#allocation14], 4
          %s474 = int_to_ptr.vmem [resolvable:$true] %s473
          %479 = dma.hbm_to_vmem [thread:$0]  %s7, 8192, %s474, [#allocation15], 128, 128, 8
        $region40: #{tpu_custom_call.1} parent=11 // pred_fallthru
          _
        // Predicated region
        $region41: #{tpu_custom_call.1} parent=11 // pred_check
          %p480 = pneg %p240
        $region42: #{tpu_custom_call.1} parent=11 // pred_check_branch
          %482 = sbr.rel (%p480) target = $region44
        $region43: #{tpu_custom_call.1} parent=11 // pred_region
          %s484 = ssub.s32 8192, 8192
          %485 = vsyncadd [#allocation15], %s484
          %s486 = sshll.u32 [#allocation16], 4
          %s487 = int_to_ptr.vmem [resolvable:$true] %s486
          %492 = dma.hbm_to_vmem [thread:$0]  %s8, 8192, %s487, [#allocation15], 128, 128, 8
        $region44: #{tpu_custom_call.1} parent=11 // pred_fallthru
          _
        // Predicated region
        $region45: #{tpu_custom_call.1} parent=11 // pred_check
          %p493 = pneg %p261
        $region46: #{tpu_custom_call.1} parent=11 // pred_check_branch
          %495 = sbr.rel (%p493) target = $region48
        $region47: #{tpu_custom_call.1} parent=11 // pred_region
          %s497 = ssub.s32 8192, 8192
          %498 = vsyncadd [#allocation18], %s497
          %s499 = sshll.u32 [#allocation17], 4
          %s500 = int_to_ptr.vmem [resolvable:$true] %s499
          %505 = dma.hbm_to_vmem [thread:$0]  %s9, 8192, %s500, [#allocation18], 128, 128, 8
        $region48: #{tpu_custom_call.1} parent=11 // pred_fallthru
          _
        // Predicated region
        $region49: #{tpu_custom_call.1} parent=11 // pred_check
          %p506 = pneg %p282
        $region50: #{tpu_custom_call.1} parent=11 // pred_check_branch
          %508 = sbr.rel (%p506) target = $region52
        $region51: #{tpu_custom_call.1} parent=11 // pred_region
          _
        $region52: #{tpu_custom_call.1} parent=11 // pred_fallthru
          _
        // Predicated region
        $region53: #{tpu_custom_call.1} parent=11 // pred_check
          %p509 = pneg %p303
        $region54: #{tpu_custom_call.1} parent=11 // pred_check_branch
          %511 = sbr.rel (%p509) target = $region56
        $region55: #{tpu_custom_call.1} parent=11 // pred_region
          %s513 = ssub.s32 512, 512
          %514 = vsyncadd [#allocation18], %s513
          %s515 = sshll.u32 [#allocation19], 4
          %s516 = int_to_ptr.vmem [resolvable:$true] %s515
          %521 = dma.hbm_to_vmem [thread:$0]  %s11, 512, %s516, [#allocation18], 128, 128, 8
        $region56: #{tpu_custom_call.1} parent=11 // pred_fallthru
          _
        // Predicated region
        $region57: #{tpu_custom_call.1} parent=11 // pred_check
          %p522 = pneg %p324
        $region58: #{tpu_custom_call.1} parent=11 // pred_check_branch
          %524 = sbr.rel (%p522) target = $region60
        $region59: #{tpu_custom_call.1} parent=11 // pred_region
          _
        $region60: #{tpu_custom_call.1} parent=11 // pred_fallthru
          _
        // Predicated region
        $region61: #{tpu_custom_call.1} parent=11 // pred_check
          %p525 = pneg %p345
        $region62: #{tpu_custom_call.1} parent=11 // pred_check_branch
          %527 = sbr.rel (%p525) target = $region64
        $region63: #{tpu_custom_call.1} parent=11 // pred_region
          %s529 = ssub.s32 1024, 1024
          %530 = vsyncadd [#allocation21], %s529
          %s531 = sshll.u32 [#allocation20], 4
          %s532 = int_to_ptr.vmem [resolvable:$true] %s531
          %537 = dma.hbm_to_vmem [thread:$0]  %s13, 1024, %s532, [#allocation21], 64, 64, 4
        $region64: #{tpu_custom_call.1} parent=11 // pred_fallthru
          _
        // Predicated region
        $region65: #{tpu_custom_call.1} parent=11 // pred_check
          %p538 = pneg %p366
        $region66: #{tpu_custom_call.1} parent=11 // pred_check_branch
          %540 = sbr.rel (%p538) target = $region68
        $region67: #{tpu_custom_call.1} parent=11 // pred_region
          _
        $region68: #{tpu_custom_call.1} parent=11 // pred_fallthru
          _
      $region12: #{tpu_custom_call.1} parent=5 // pred_fallthru
        _
      %p541 = scmp.lt.s32.totalorder %s32, 8
      // Predicated region
      $region69: #{tpu_custom_call.1} parent=5 // pred_check
        %p542 = pneg %p541
      $region70: #{tpu_custom_call.1} parent=5 // pred_check_branch
        %544 = sbr.rel (%p542) target = $region72
      $region71: #{tpu_custom_call.1} parent=5 // pred_region
        // Predicated region
        $region73: #{tpu_custom_call.1} parent=71 // pred_check
          %p545 = pneg %p66
        $region74: #{tpu_custom_call.1} parent=71 // pred_check_branch
          %547 = sbr.rel (%p545) target = $region76
        $region75: #{tpu_custom_call.1} parent=71 // pred_region
          %s548 = sand.u32 %s56, 1
          %s549 = scalar_lea.sflag [#allocation6], %s548
          %s550 = sand.u32 %s56, 1
          %s551 = smul.addr %s550, 16
          %s552 = scalar_lea.vmem [#allocation5], %s551
          %s553 = smul.u32 2, %s40
          %s555 = ssub.s32 256, 256
          %556 = vsyncadd %s549, %s555
          %s557 = smul.addr %s39, 8
          %s558 = sadd.s32 %s553, %s557
          %s559 = smul.addr %s558, 128
          %s560 = scalar_lea.hbm %s0, %s559
          %s561 = sshll.u32 %s552, 4
          %s562 = int_to_ptr.vmem [resolvable:$true] %s561
          %567 = dma.hbm_to_vmem [thread:$0]  %s560, 256, %s562, %s549, 128, 128, 8
        $region76: #{tpu_custom_call.1} parent=71 // pred_fallthru
          _
      $region72: #{tpu_custom_call.1} parent=5 // pred_fallthru
        _
      %p568 = scmp.le.s32.totalorder 1, %s32
      %p569 = scmp.lt.s32.totalorder %s32, 9
      %p570 = pnand %p568, %p569
      %p571 = pneg %p570
      // Predicated region
      $region77: #{tpu_custom_call.1} parent=5 // pred_check
        _
      $region78: #{tpu_custom_call.1} parent=5 // pred_check_branch
        %573 = sbr.rel (%p570) target = $region80
      $region79: #{tpu_custom_call.1} parent=5 // pred_region
        %s574 = ssub.s32 %s32, 1
        %s575 = sand.u32 %s59, 1
        %s576 = scalar_lea.sflag [#allocation6], %s575
        %s577 = sand.u32 %s59, 1
        %s578 = smul.addr %s577, 16
        %s579 = scalar_lea.vmem [#allocation5], %s578
        // Predicated region
        $region81: #{tpu_custom_call.1} parent=79 // pred_check
          %p580 = pneg %p72
        $region82: #{tpu_custom_call.1} parent=79 // pred_check_branch
          %582 = sbr.rel (%p580) target = $region84
        $region83: #{tpu_custom_call.1} parent=79 // pred_region
          %583 = dma.done %s576, 256
        $region84: #{tpu_custom_call.1} parent=79 // pred_fallthru
          _
        // Predicated region
        $region85: #{tpu_custom_call.1} parent=79 // pred_check
          %p584 = pneg %p93
        $region86: #{tpu_custom_call.1} parent=79 // pred_check_branch
          %586 = sbr.rel (%p584) target = $region88
        $region87: #{tpu_custom_call.1} parent=79 // pred_region
          %587 = dma.done [#allocation9], 3072
        $region88: #{tpu_custom_call.1} parent=79 // pred_fallthru
          _
        // Predicated region
        $region89: #{tpu_custom_call.1} parent=79 // pred_check
          %p588 = pneg %p135
        $region90: #{tpu_custom_call.1} parent=79 // pred_check_branch
          %590 = sbr.rel (%p588) target = $region92
        $region91: #{tpu_custom_call.1} parent=79 // pred_region
          %591 = dma.done [#allocation9], 1024
        $region92: #{tpu_custom_call.1} parent=79 // pred_fallthru
          _
        // Predicated region
        $region93: #{tpu_custom_call.1} parent=79 // pred_check
          %p592 = pneg %p177
        $region94: #{tpu_custom_call.1} parent=79 // pred_check_branch
          %594 = sbr.rel (%p592) target = $region96
        $region95: #{tpu_custom_call.1} parent=79 // pred_region
          %595 = dma.done [#allocation12], 4096
        $region96: #{tpu_custom_call.1} parent=79 // pred_fallthru
          _
        // Predicated region
        $region97: #{tpu_custom_call.1} parent=79 // pred_check
          %p596 = pneg %p198
        $region98: #{tpu_custom_call.1} parent=79 // pred_check_branch
          %598 = sbr.rel (%p596) target = $region100
        $region99: #{tpu_custom_call.1} parent=79 // pred_region
          %599 = dma.done [#allocation12], 8192
        $region100: #{tpu_custom_call.1} parent=79 // pred_fallthru
          _
        // Predicated region
        $region101: #{tpu_custom_call.1} parent=79 // pred_check
          %p600 = pneg %p219
        $region102: #{tpu_custom_call.1} parent=79 // pred_check_branch
          %602 = sbr.rel (%p600) target = $region104
        $region103: #{tpu_custom_call.1} parent=79 // pred_region
          %603 = dma.done [#allocation15], 8192
        $region104: #{tpu_custom_call.1} parent=79 // pred_fallthru
          _
        // Predicated region
        $region105: #{tpu_custom_call.1} parent=79 // pred_check
          %p604 = pneg %p240
        $region106: #{tpu_custom_call.1} parent=79 // pred_check_branch
          %606 = sbr.rel (%p604) target = $region108
        $region107: #{tpu_custom_call.1} parent=79 // pred_region
          %607 = dma.done [#allocation15], 8192
        $region108: #{tpu_custom_call.1} parent=79 // pred_fallthru
          _
        // Predicated region
        $region109: #{tpu_custom_call.1} parent=79 // pred_check
          %p608 = pneg %p261
        $region110: #{tpu_custom_call.1} parent=79 // pred_check_branch
          %610 = sbr.rel (%p608) target = $region112
        $region111: #{tpu_custom_call.1} parent=79 // pred_region
          %611 = dma.done [#allocation18], 8192
        $region112: #{tpu_custom_call.1} parent=79 // pred_fallthru
          _
        // Predicated region
        $region113: #{tpu_custom_call.1} parent=79 // pred_check
          %p612 = pneg %p303
        $region114: #{tpu_custom_call.1} parent=79 // pred_check_branch
          %614 = sbr.rel (%p612) target = $region116
        $region115: #{tpu_custom_call.1} parent=79 // pred_region
          %615 = dma.done [#allocation18], 512
        $region116: #{tpu_custom_call.1} parent=79 // pred_fallthru
          _
        // Predicated region
        $region117: #{tpu_custom_call.1} parent=79 // pred_check
          %p616 = pneg %p345
        $region118: #{tpu_custom_call.1} parent=79 // pred_check_branch
          %618 = sbr.rel (%p616) target = $region120
        $region119: #{tpu_custom_call.1} parent=79 // pred_region
          %619 = dma.done [#allocation21], 1024
        $region120: #{tpu_custom_call.1} parent=79 // pred_fallthru
          _
        %s620 = sand.u32 %s59, 1
        %s621 = scalar_lea.sflag [#allocation6], %s620
        %s622 = sand.u32 %s59, 1
        %s623 = smul.addr %s622, 16
        %s624 = scalar_lea.vmem [#allocation5], %s623
        %p625 = pneg %p72
        %p626 = pneg %p69
        %p627 = pneg %p93
        %p628 = pneg %p90
        %p629 = pneg %p114
        %p630 = pneg %p111
        %p631 = pneg %p135
        %p632 = pneg %p132
        %p633 = pneg %p156
        %p634 = pneg %p153
        %p635 = pneg %p177
        %p636 = pneg %p174
        %p637 = pneg %p198
        %p638 = pneg %p195
        %p639 = pneg %p219
        %p640 = pneg %p216
        %p641 = pneg %p240
        %p642 = pneg %p237
        %p643 = pneg %p261
        %p644 = pneg %p258
        %p645 = pneg %p282
        %p646 = pneg %p279
        %p647 = pneg %p303
        %p648 = pneg %p300
        %p649 = pneg %p324
        %p650 = pneg %p321
        %p651 = pneg %p345
        %p652 = pneg %p342
        %p653 = pneg %p366
        %p654 = pneg %p363
        %p655 = pneg %p394
        %p656 = pneg %p391
        %s657 = sand.u32 %s381, 1
        %s658 = scalar_lea.sflag [#allocation7], %s657
        %s659 = sand.u32 %s381, 1
        %s660 = smul.addr %s659, 16
        %s661 = scalar_lea.vmem [#allocation22], %s660
        %s662 = smul.u32 2, %s42
        %s663 = smul.u32 2, %s42
        %p665 = scmp.eq.s32.totalorder %s42, 0
        // Predicated region
        $region121: #{tpu_custom_call.1} parent=79 // pred_check
          %p666 = pneg %p665
        $region122: #{tpu_custom_call.1} parent=79 // pred_check_branch
          %668 = sbr.rel (%p666) target = $region124
        $region123: #{tpu_custom_call.1} parent=79 // pred_region
          %669 = vst [vmem:[#allocation2] sm:$0xff] 0.0
          %670 = vst [vmem:[#allocation2 + $0x8] sm:$0xff] 0.0
          %671 = vst [vmem:[#allocation2 + $0x10] sm:$0xff] 0.0
          %672 = vst [vmem:[#allocation2 + $0x18] sm:$0xff] 0.0
          %673 = vst [vmem:[#allocation2 + $0x20] sm:$0xff] 0.0
          %674 = vst [vmem:[#allocation2 + $0x28] sm:$0xff] 0.0
          %675 = vst [vmem:[#allocation2 + $0x30] sm:$0xff] 0.0
          %676 = vst [vmem:[#allocation2 + $0x38] sm:$0xff] 0.0
          %677 = vst [vmem:[#allocation3] sm:$0xff] 0.0
          %678 = vst [vmem:[#allocation3 + $0x8] sm:$0xff] 0.0
          %679 = vst [vmem:[#allocation3 + $0x10] sm:$0xff] 0.0
          %680 = vst [vmem:[#allocation3 + $0x18] sm:$0xff] 0.0
          %681 = vst [vmem:[#allocation4] sm:$0xff] 0.0
          %682 = vst [vmem:[#allocation4 + $0x8] sm:$0xff] 0.0
          %683 = vst [vmem:[#allocation4 + $0x10] sm:$0xff] 0.0
          %684 = vst [vmem:[#allocation4 + $0x18] sm:$0xff] 0.0
        $region124: #{tpu_custom_call.1} parent=79 // pred_fallthru
          _
        %v685 = vld [vmem:[%s579] sm:$0xff]
        %v686 = vld [vmem:[%s579 + $0x8] sm:$0xff]
        %v687 = vpack.c.bf16 %v686, %v685
        %v688 = vld [vmem:[#allocation8] sm:$0xff]
        %v689 = vld [vmem:[#allocation8 + $0x8] sm:$0xf]
        %v690 = vld [vmem:[#allocation8 + $0xc] sm:$0xff]
        %v691 = vld [vmem:[#allocation8 + $0x14] sm:$0xf]
        %v692 = vld [vmem:[#allocation8 + $0x18] sm:$0xff]
        %v693 = vld [vmem:[#allocation8 + $0x20] sm:$0xf]
        %v694 = vld [vmem:[#allocation8 + $0x24] sm:$0xff]
        %v695 = vld [vmem:[#allocation8 + $0x2c] sm:$0xf]
        %v696 = vld [vmem:[#allocation8 + $0x30] sm:$0xff]
        %v697 = vld [vmem:[#allocation8 + $0x38] sm:$0xf]
        %v698 = vld [vmem:[#allocation8 + $0x3c] sm:$0xff]
        %v699 = vld [vmem:[#allocation8 + $0x44] sm:$0xf]
        %v700 = vld [vmem:[#allocation8 + $0x48] sm:$0xff]
        %v701 = vld [vmem:[#allocation8 + $0x50] sm:$0xf]
        %v702 = vld [vmem:[#allocation8 + $0x54] sm:$0xff]
        %v703 = vld [vmem:[#allocation8 + $0x5c] sm:$0xf]
        %v704 = vld [vmem:[#allocation8 + $0x60] sm:$0xff]
        %v705 = vld [vmem:[#allocation8 + $0x68] sm:$0xf]
        %v706 = vld [vmem:[#allocation8 + $0x6c] sm:$0xff]
        %v707 = vld [vmem:[#allocation8 + $0x74] sm:$0xf]
        %v708 = vld [vmem:[#allocation8 + $0x78] sm:$0xff]
        %v709 = vld [vmem:[#allocation8 + $0x80] sm:$0xf]
        %v710 = vld [vmem:[#allocation8 + $0x84] sm:$0xff]
        %v711 = vld [vmem:[#allocation8 + $0x8c] sm:$0xf]
        %v712 = vld [vmem:[#allocation8 + $0x90] sm:$0xff]
        %v713 = vld [vmem:[#allocation8 + $0x98] sm:$0xf]
        %v714 = vld [vmem:[#allocation8 + $0x9c] sm:$0xff]
        %v715 = vld [vmem:[#allocation8 + $0xa4] sm:$0xf]
        %v716 = vld [vmem:[#allocation8 + $0xa8] sm:$0xff]
        %v717 = vld [vmem:[#allocation8 + $0xb0] sm:$0xf]
        %v718 = vld [vmem:[#allocation8 + $0xb4] sm:$0xff]
        %v719 = vld [vmem:[#allocation8 + $0xbc] sm:$0xf]
        %v720 = vld [vmem:[%s2] sm:$0x7]
        %v722 = vlaneseq
        %v723 = vshrl.u32 %v722, 7
        %v724 = vsub.s32 0, %v723
        %v725 = vrot.slane %v720, %v724
        %v726 = vlaneseq
        %v727 = vshrl.u32 %v726, 7
        %v728 = vsub.s32 1, %v727
        %v729 = vrot.slane %v720, %v728
        %v730 = vlaneseq
        %v731 = vshrl.u32 %v730, 7
        %v732 = vsub.s32 2, %v731
        %v733 = vrot.slane %v720, %v732
        %v769 = vunpack.c.l.b16 %v688
        %v770 = vunpack.c.h.b16 %v688
        %v771 = vunpack.c.l.b16 %v689
        %v772 = vunpack.c.l.b16 %v690
        %v773 = vunpack.c.h.b16 %v690
        %v774 = vunpack.c.l.b16 %v691
        %v775 = vunpack.c.l.b16 %v692
        %v776 = vunpack.c.h.b16 %v692
        %v777 = vunpack.c.l.b16 %v693
        %v778 = vunpack.c.l.b16 %v694
        %v779 = vunpack.c.h.b16 %v694
        %v780 = vunpack.c.l.b16 %v695
        %v781 = vunpack.c.l.b16 %v696
        %v782 = vunpack.c.h.b16 %v696
        %v783 = vunpack.c.l.b16 %v697
        %v784 = vunpack.c.l.b16 %v698
        %v785 = vunpack.c.h.b16 %v698
        %v786 = vunpack.c.l.b16 %v699
        %v787 = vunpack.c.l.b16 %v700
        %v788 = vunpack.c.h.b16 %v700
        %v789 = vunpack.c.l.b16 %v701
        %v790 = vunpack.c.l.b16 %v702
        %v791 = vunpack.c.h.b16 %v702
        %v792 = vunpack.c.l.b16 %v703
        %v793 = vunpack.c.l.b16 %v704
        %v794 = vunpack.c.h.b16 %v704
        %v795 = vunpack.c.l.b16 %v705
        %v796 = vunpack.c.l.b16 %v706
        %v797 = vunpack.c.h.b16 %v706
        %v798 = vunpack.c.l.b16 %v707
        %v799 = vunpack.c.l.b16 %v708
        %v800 = vunpack.c.h.b16 %v708
        %v801 = vunpack.c.l.b16 %v709
        %v802 = vunpack.c.l.b16 %v710
        %v803 = vunpack.c.h.b16 %v710
        %v804 = vunpack.c.l.b16 %v711
        %v805 = vunpack.c.l.b16 %v712
        %v806 = vunpack.c.h.b16 %v712
        %v807 = vunpack.c.l.b16 %v713
        %v808 = vunpack.c.l.b16 %v714
        %v809 = vunpack.c.h.b16 %v714
        %v810 = vunpack.c.l.b16 %v715
        %v811 = vunpack.c.l.b16 %v716
        %v812 = vunpack.c.h.b16 %v716
        %v813 = vunpack.c.l.b16 %v717
        %v814 = vunpack.c.l.b16 %v718
        %v815 = vunpack.c.h.b16 %v718
        %v816 = vunpack.c.l.b16 %v719
        %v817 = vpack.c.b16 %v772, %v769
        %v818 = vpack.c.b16 %v773, %v770
        %v819 = vpack.c.b16 %v774, %v771
        %v820 = vpack.c.b16 %v778, %v775
        %v821 = vpack.c.b16 %v779, %v776
        %v822 = vpack.c.b16 %v780, %v777
        %v823 = vpack.c.b16 %v784, %v781
        %v824 = vpack.c.b16 %v785, %v782
        %v825 = vpack.c.b16 %v786, %v783
        %v826 = vpack.c.b16 %v790, %v787
        %v827 = vpack.c.b16 %v791, %v788
        %v828 = vpack.c.b16 %v792, %v789
        %v829 = vpack.c.b16 %v796, %v793
        %v830 = vpack.c.b16 %v797, %v794
        %v831 = vpack.c.b16 %v798, %v795
        %v832 = vpack.c.b16 %v802, %v799
        %v833 = vpack.c.b16 %v803, %v800
        %v834 = vpack.c.b16 %v804, %v801
        %v835 = vpack.c.b16 %v808, %v805
        %v836 = vpack.c.b16 %v809, %v806
        %v837 = vpack.c.b16 %v810, %v807
        %v838 = vpack.c.b16 %v814, %v811
        %v839 = vpack.c.b16 %v815, %v812
        %v840 = vpack.c.b16 %v816, %v813
        %865 = vmatprep.subr.bf16.mxu0 %v818
        %866 = vmatpush1.bf16.msra.mxu0 %v817
        %867 = vmatprep.subr.bf16.mxu0 %v821
        %868 = vmatpush1.bf16.msra.mxu0 %v820
        %869 = vmatprep.subr.bf16.mxu0 %v824
        %870 = vmatpush1.bf16.msra.mxu0 %v823
        %871 = vmatprep.subr.bf16.mxu0 %v827
        %872 = vmatpush1.bf16.msra.mxu0 %v826
        %873 = vmatprep.subr.bf16.mxu0 %v830
        %874 = vmatpush1.bf16.msra.mxu0 %v829
        %875 = vmatprep.subr.bf16.mxu0 %v833
        %876 = vmatpush1.bf16.msra.mxu0 %v832
        %877 = vmatprep.subr.bf16.mxu0 %v836
        %878 = vmatpush1.bf16.msra.mxu0 %v835
        %879 = vmatprep.subr.bf16.mxu0 %v839
        %880 = vmatpush1.bf16.msra.mxu0 %v838
        %881 = vmatprep.subr.bf16.mxu0 0
        %882 = vmatpush1.bf16.msra.mxu0 0
        %883 = vmatprep.subr.bf16.mxu0 0
        %884 = vmatpush1.bf16.msra.mxu0 0
        %885 = vmatprep.subr.bf16.mxu0 0
        %886 = vmatpush1.bf16.msra.mxu0 0
        %887 = vmatprep.subr.bf16.mxu0 0
        %888 = vmatpush1.bf16.msra.mxu0 0
        %889 = vmatprep.subr.bf16.mxu0 0
        %890 = vmatpush1.bf16.msra.mxu0 0
        %891 = vmatprep.subr.bf16.mxu0 0
        %892 = vmatpush1.bf16.msra.mxu0 0
        %893 = vmatprep.subr.bf16.mxu0 0
        %894 = vmatpush1.bf16.msra.mxu0 0
        %895 = vmatprep.subr.bf16.mxu0 0
        %896 = vmatpush1.bf16.msra.mxu0 0
        %897 = vmatprep.mubr.bf16.mxu0 0
        %898 = vmatmul.mubr.bf16.gmra.mrb[0].mxu0 %v687
        %v899 = vpop.f32.mrb[0].mxu0
        %v900 = vadd.f32 %v725, %v899
        %v901 = vpop.f32.mrb[0].mxu0
        %v902 = vadd.f32 %v729, %v901
        %v903 = vpop.f32.mrb[0].mxu0
        %v904 = vadd.f32 %v725, %v903
        %v905 = vpop.f32.mrb[0].mxu0
        %v906 = vadd.f32 %v729, %v905
        %907 = vdwg.mxu0
        %908 = vmatprep.subr.bf16.mxu0 0
        %909 = vmatpush1.bf16.msra.mxu0 %v819
        %910 = vmatprep.subr.bf16.mxu0 0
        %911 = vmatpush1.bf16.msra.mxu0 %v822
        %912 = vmatprep.subr.bf16.mxu0 0
        %913 = vmatpush1.bf16.msra.mxu0 %v825
        %914 = vmatprep.subr.bf16.mxu0 0
        %915 = vmatpush1.bf16.msra.mxu0 %v828
        %916 = vmatprep.subr.bf16.mxu0 0
        %917 = vmatpush1.bf16.msra.mxu0 %v831
        %918 = vmatprep.subr.bf16.mxu0 0
        %919 = vmatpush1.bf16.msra.mxu0 %v834
        %920 = vmatprep.subr.bf16.mxu0 0
        %921 = vmatpush1.bf16.msra.mxu0 %v837
        %922 = vmatprep.subr.bf16.mxu0 0
        %923 = vmatpush1.bf16.msra.mxu0 %v840
        %924 = vmatprep.subr.bf16.mxu0 0
        %925 = vmatpush1.bf16.msra.mxu0 0
        %926 = vmatprep.subr.bf16.mxu0 0
        %927 = vmatpush1.bf16.msra.mxu0 0
        %928 = vmatprep.subr.bf16.mxu0 0
        %929 = vmatpush1.bf16.msra.mxu0 0
        %930 = vmatprep.subr.bf16.mxu0 0
        %931 = vmatpush1.bf16.msra.mxu0 0
        %932 = vmatprep.subr.bf16.mxu0 0
        %933 = vmatpush1.bf16.msra.mxu0 0
        %934 = vmatprep.subr.bf16.mxu0 0
        %935 = vmatpush1.bf16.msra.mxu0 0
        %936 = vmatprep.subr.bf16.mxu0 0
        %937 = vmatpush1.bf16.msra.mxu0 0
        %938 = vmatprep.subr.bf16.mxu0 0
        %939 = vmatpush1.bf16.msra.mxu0 0
        %940 = vmatprep.mubr.bf16.mxu0 0
        %941 = vmatmul.mubr.bf16.gmra.mrb[0].mxu0 %v687
        %v942 = vpop.f32.mrb[0].mxu0
        %v943 = vadd.f32 %v733, %v942
        %v944 = vpop.f32.mrb[0].mxu0
        %v945 = vpop.f32.mrb[0].mxu0
        %v946 = vadd.f32 %v733, %v945
        %v947 = vpop.f32.mrb[0].mxu0
        %948 = vdwg.mxu0
        %v949 = vld [vmem:[#allocation2] sm:$0xff]
        %v950 = vld [vmem:[#allocation2 + $0x8] sm:$0xff]
        %v951 = vld [vmem:[#allocation2 + $0x10] sm:$0xff]
        %v952 = vld [vmem:[#allocation2 + $0x18] sm:$0xff]
        %v953 = vld [vmem:[#allocation2 + $0x20] sm:$0xff]
        %v954 = vld [vmem:[#allocation2 + $0x28] sm:$0xff]
        %v955 = vld [vmem:[#allocation2 + $0x30] sm:$0xff]
        %v956 = vld [vmem:[#allocation2 + $0x38] sm:$0xff]
        %v957 = vld [vmem:[#allocation10] sm:$0x1]
        %v958 = vlaneseq
        %v959 = vshrl.u32 %v958, 7
        %v960 = vsub.s32 0, %v959
        %v961 = vrot.slane %v957, %v960
        %v962 = vmul.f32 %v961, %v902
        %v963 = vmul.f32 %v961, %v906
        %v964 = vadd.f32 %v962, 0.0
        %v965 = vadd.f32 %v963, 0.0
        %v966 = vld [vmem:[#allocation10 + $0x1] sm:$0x1]
        %v967 = vlaneseq
        %v968 = vshrl.u32 %v967, 7
        %v969 = vsub.s32 0, %v968
        %v970 = vrot.slane %v966, %v969
        %v971 = vmul.f32 %v970, %v956
        %v972 = vmul.f32 %v970, %v902
        %v973 = vmul.f32 %v970, %v906
        %vm977 = vcmask 1040384
        %v978 = vrot.slane %v971, 7
        %v979 = vrot.slane %v972, 7
        %v980 = vsel %vm977, %v978, %v979
        %v981 = vrot.slane %v973, 7
        %v982 = vsel %vm977, %v979, %v981
        %v985 = vadd.f32 %v964, %v980
        %v986 = vadd.f32 %v965, %v982
        %v987 = vld [vmem:[#allocation10 + $0x2] sm:$0x1]
        %v988 = vlaneseq
        %v989 = vshrl.u32 %v988, 7
        %v990 = vsub.s32 0, %v989
        %v991 = vrot.slane %v987, %v990
        %v992 = vmul.f32 %v991, %v956
        %v993 = vmul.f32 %v991, %v902
        %v994 = vmul.f32 %v991, %v906
        %vm998 = vcmask 1041408
        %v999 = vrot.slane %v992, 6
        %v1000 = vrot.slane %v993, 6
        %v1001 = vsel %vm998, %v999, %v1000
        %v1002 = vrot.slane %v994, 6
        %v1003 = vsel %vm998, %v1000, %v1002
        %v1006 = vadd.f32 %v985, %v1001
        %v1007 = vadd.f32 %v986, %v1003
        %v1008 = vld [vmem:[#allocation10 + $0x3] sm:$0x1]
        %v1009 = vlaneseq
        %v1010 = vshrl.u32 %v1009, 7
        %v1011 = vsub.s32 0, %v1010
        %v1012 = vrot.slane %v1008, %v1011
        %v1013 = vmul.f32 %v1012, %v956
        %v1014 = vmul.f32 %v1012, %v902
        %v1015 = vmul.f32 %v1012, %v906
        %vm1019 = vcmask 1042432
        %v1020 = vrot.slane %v1013, 5
        %v1021 = vrot.slane %v1014, 5
        %v1022 = vsel %vm1019, %v1020, %v1021
        %v1023 = vrot.slane %v1015, 5
        %v1024 = vsel %vm1019, %v1021, %v1023
        %v1027 = vadd.f32 %v1006, %v1022
        %v1028 = vadd.f32 %v1007, %v1024
        %v1029 = vld [vmem:[#allocation10 + $0x4] sm:$0x1]
        %v1030 = vlaneseq
        %v1031 = vshrl.u32 %v1030, 7
        %v1032 = vsub.s32 0, %v1031
        %v1033 = vrot.slane %v1029, %v1032
        %v1034 = vmul.f32 %v1033, %v956
        %v1035 = vmul.f32 %v1033, %v902
        %v1036 = vmul.f32 %v1033, %v906
        %vm1040 = vcmask 1043456
        %v1041 = vrot.slane %v1034, 4
        %v1042 = vrot.slane %v1035, 4
        %v1043 = vsel %vm1040, %v1041, %v1042
        %v1044 = vrot.slane %v1036, 4
        %v1045 = vsel %vm1040, %v1042, %v1044
        %v1048 = vadd.f32 %v1027, %v1043
        %v1049 = vadd.f32 %v1028, %v1045
        %v1050 = vld [vmem:[#allocation10 + $0x5] sm:$0x1]
        %v1051 = vlaneseq
        %v1052 = vshrl.u32 %v1051, 7
        %v1053 = vsub.s32 0, %v1052
        %v1054 = vrot.slane %v1050, %v1053
        %v1055 = vmul.f32 %v1054, %v956
        %v1056 = vmul.f32 %v1054, %v902
        %v1057 = vmul.f32 %v1054, %v906
        %vm1061 = vcmask 1044480
        %v1062 = vrot.slane %v1055, 3
        %v1063 = vrot.slane %v1056, 3
        %v1064 = vsel %vm1061, %v1062, %v1063
        %v1065 = vrot.slane %v1057, 3
        %v1066 = vsel %vm1061, %v1063, %v1065
        %v1069 = vadd.f32 %v1048, %v1064
        %v1070 = vadd.f32 %v1049, %v1066
        %v1071 = vld [vmem:[#allocation10 + $0x6] sm:$0x1]
        %v1072 = vlaneseq
        %v1073 = vshrl.u32 %v1072, 7
        %v1074 = vsub.s32 0, %v1073
        %v1075 = vrot.slane %v1071, %v1074
        %v1076 = vmul.f32 %v1075, %v956
        %v1077 = vmul.f32 %v1075, %v902
        %v1078 = vmul.f32 %v1075, %v906
        %vm1082 = vcmask 1045504
        %v1083 = vrot.slane %v1076, 2
        %v1084 = vrot.slane %v1077, 2
        %v1085 = vsel %vm1082, %v1083, %v1084
        %v1086 = vrot.slane %v1078, 2
        %v1087 = vsel %vm1082, %v1084, %v1086
        %v1090 = vadd.f32 %v1069, %v1085
        %v1091 = vadd.f32 %v1070, %v1087
        %v1092 = vld [vmem:[#allocation10 + $0x7] sm:$0x1]
        %v1093 = vlaneseq
        %v1094 = vshrl.u32 %v1093, 7
        %v1095 = vsub.s32 0, %v1094
        %v1096 = vrot.slane %v1092, %v1095
        %v1097 = vmul.f32 %v1096, %v956
        %v1098 = vmul.f32 %v1096, %v902
        %v1099 = vmul.f32 %v1096, %v906
        %vm1103 = vcmask 1046528
        %v1104 = vrot.slane %v1097, 1
        %v1105 = vrot.slane %v1098, 1
        %v1106 = vsel %vm1103, %v1104, %v1105
        %v1107 = vrot.slane %v1099, 1
        %v1108 = vsel %vm1103, %v1105, %v1107
        %v1111 = vadd.f32 %v1090, %v1106
        %v1112 = vadd.f32 %v1091, %v1108
        %v1113 = vld [vmem:[#allocation10 + $0x8] sm:$0x1]
        %v1114 = vlaneseq
        %v1115 = vshrl.u32 %v1114, 7
        %v1116 = vsub.s32 0, %v1115
        %v1117 = vrot.slane %v1113, %v1116
        %v1118 = vmul.f32 %v1117, %v956
        %v1119 = vmul.f32 %v1117, %v902
        %v1120 = vadd.f32 %v1111, %v1118
        %v1121 = vadd.f32 %v1112, %v1119
        %v1122 = vld [vmem:[#allocation10 + $0x9] sm:$0x1]
        %v1123 = vlaneseq
        %v1124 = vshrl.u32 %v1123, 7
        %v1125 = vsub.s32 0, %v1124
        %v1126 = vrot.slane %v1122, %v1125
        %v1127 = vmul.f32 %v1126, %v955
        %v1128 = vmul.f32 %v1126, %v956
        %v1129 = vmul.f32 %v1126, %v902
        %v1133 = vrot.slane %v1127, 7
        %v1134 = vrot.slane %v1128, 7
        %v1135 = vsel %vm977, %v1133, %v1134
        %v1136 = vrot.slane %v1129, 7
        %v1137 = vsel %vm977, %v1134, %v1136
        %v1140 = vadd.f32 %v1120, %v1135
        %v1141 = vadd.f32 %v1121, %v1137
        %v1142 = vld [vmem:[#allocation10 + $0xa] sm:$0x1]
        %v1143 = vlaneseq
        %v1144 = vshrl.u32 %v1143, 7
        %v1145 = vsub.s32 0, %v1144
        %v1146 = vrot.slane %v1142, %v1145
        %v1147 = vmul.f32 %v1146, %v955
        %v1148 = vmul.f32 %v1146, %v956
        %v1149 = vmul.f32 %v1146, %v902
        %v1153 = vrot.slane %v1147, 6
        %v1154 = vrot.slane %v1148, 6
        %v1155 = vsel %vm998, %v1153, %v1154
        %v1156 = vrot.slane %v1149, 6
        %v1157 = vsel %vm998, %v1154, %v1156
        %v1160 = vadd.f32 %v1140, %v1155
        %v1161 = vadd.f32 %v1141, %v1157
        %v1162 = vld [vmem:[#allocation10 + $0xb] sm:$0x1]
        %v1163 = vlaneseq
        %v1164 = vshrl.u32 %v1163, 7
        %v1165 = vsub.s32 0, %v1164
        %v1166 = vrot.slane %v1162, %v1165
        %v1167 = vmul.f32 %v1166, %v955
        %v1168 = vmul.f32 %v1166, %v956
        %v1169 = vmul.f32 %v1166, %v902
        %v1173 = vrot.slane %v1167, 5
        %v1174 = vrot.slane %v1168, 5
        %v1175 = vsel %vm1019, %v1173, %v1174
        %v1176 = vrot.slane %v1169, 5
        %v1177 = vsel %vm1019, %v1174, %v1176
        %v1180 = vadd.f32 %v1160, %v1175
        %v1181 = vadd.f32 %v1161, %v1177
        %v1182 = vld [vmem:[#allocation10 + $0xc] sm:$0x1]
        %v1183 = vlaneseq
        %v1184 = vshrl.u32 %v1183, 7
        %v1185 = vsub.s32 0, %v1184
        %v1186 = vrot.slane %v1182, %v1185
        %v1187 = vmul.f32 %v1186, %v955
        %v1188 = vmul.f32 %v1186, %v956
        %v1189 = vmul.f32 %v1186, %v902
        %v1193 = vrot.slane %v1187, 4
        %v1194 = vrot.slane %v1188, 4
        %v1195 = vsel %vm1040, %v1193, %v1194
        %v1196 = vrot.slane %v1189, 4
        %v1197 = vsel %vm1040, %v1194, %v1196
        %v1200 = vadd.f32 %v1180, %v1195
        %v1201 = vadd.f32 %v1181, %v1197
        %v1202 = vld [vmem:[#allocation10 + $0xd] sm:$0x1]
        %v1203 = vlaneseq
        %v1204 = vshrl.u32 %v1203, 7
        %v1205 = vsub.s32 0, %v1204
        %v1206 = vrot.slane %v1202, %v1205
        %v1207 = vmul.f32 %v1206, %v955
        %v1208 = vmul.f32 %v1206, %v956
        %v1209 = vmul.f32 %v1206, %v902
        %v1213 = vrot.slane %v1207, 3
        %v1214 = vrot.slane %v1208, 3
        %v1215 = vsel %vm1061, %v1213, %v1214
        %v1216 = vrot.slane %v1209, 3
        %v1217 = vsel %vm1061, %v1214, %v1216
        %v1220 = vadd.f32 %v1200, %v1215
        %v1221 = vadd.f32 %v1201, %v1217
        %v1222 = vld [vmem:[#allocation10 + $0xe] sm:$0x1]
        %v1223 = vlaneseq
        %v1224 = vshrl.u32 %v1223, 7
        %v1225 = vsub.s32 0, %v1224
        %v1226 = vrot.slane %v1222, %v1225
        %v1227 = vmul.f32 %v1226, %v955
        %v1228 = vmul.f32 %v1226, %v956
        %v1229 = vmul.f32 %v1226, %v902
        %v1233 = vrot.slane %v1227, 2
        %v1234 = vrot.slane %v1228, 2
        %v1235 = vsel %vm1082, %v1233, %v1234
        %v1236 = vrot.slane %v1229, 2
        %v1237 = vsel %vm1082, %v1234, %v1236
        %v1240 = vadd.f32 %v1220, %v1235
        %v1241 = vadd.f32 %v1221, %v1237
        %v1242 = vld [vmem:[#allocation10 + $0xf] sm:$0x1]
        %v1243 = vlaneseq
        %v1244 = vshrl.u32 %v1243, 7
        %v1245 = vsub.s32 0, %v1244
        %v1246 = vrot.slane %v1242, %v1245
        %v1247 = vmul.f32 %v1246, %v955
        %v1248 = vmul.f32 %v1246, %v956
        %v1249 = vmul.f32 %v1246, %v902
        %v1253 = vrot.slane %v1247, 1
        %v1254 = vrot.slane %v1248, 1
        %v1255 = vsel %vm1103, %v1253, %v1254
        %v1256 = vrot.slane %v1249, 1
        %v1257 = vsel %vm1103, %v1254, %v1256
        %v1260 = vadd.f32 %v1240, %v1255
        %v1261 = vadd.f32 %v1241, %v1257
        %v1262 = vld [vmem:[#allocation10 + $0x10] sm:$0x1]
        %v1263 = vlaneseq
        %v1264 = vshrl.u32 %v1263, 7
        %v1265 = vsub.s32 0, %v1264
        %v1266 = vrot.slane %v1262, %v1265
        %v1267 = vmul.f32 %v1266, %v955
        %v1268 = vmul.f32 %v1266, %v956
        %v1269 = vadd.f32 %v1260, %v1267
        %v1270 = vadd.f32 %v1261, %v1268
        %v1271 = vld [vmem:[#allocation10 + $0x11] sm:$0x1]
        %v1272 = vlaneseq
        %v1273 = vshrl.u32 %v1272, 7
        %v1274 = vsub.s32 0, %v1273
        %v1275 = vrot.slane %v1271, %v1274
        %v1276 = vmul.f32 %v1275, %v954
        %v1277 = vmul.f32 %v1275, %v955
        %v1278 = vmul.f32 %v1275, %v956
        %v1282 = vrot.slane %v1276, 7
        %v1283 = vrot.slane %v1277, 7
        %v1284 = vsel %vm977, %v1282, %v1283
        %v1285 = vrot.slane %v1278, 7
        %v1286 = vsel %vm977, %v1283, %v1285
        %v1289 = vadd.f32 %v1269, %v1284
        %v1290 = vadd.f32 %v1270, %v1286
        %v1291 = vld [vmem:[#allocation10 + $0x12] sm:$0x1]
        %v1292 = vlaneseq
        %v1293 = vshrl.u32 %v1292, 7
        %v1294 = vsub.s32 0, %v1293
        %v1295 = vrot.slane %v1291, %v1294
        %v1296 = vmul.f32 %v1295, %v954
        %v1297 = vmul.f32 %v1295, %v955
        %v1298 = vmul.f32 %v1295, %v956
        %v1302 = vrot.slane %v1296, 6
        %v1303 = vrot.slane %v1297, 6
        %v1304 = vsel %vm998, %v1302, %v1303
        %v1305 = vrot.slane %v1298, 6
        %v1306 = vsel %vm998, %v1303, %v1305
        %v1309 = vadd.f32 %v1289, %v1304
        %v1310 = vadd.f32 %v1290, %v1306
        %v1311 = vld [vmem:[#allocation10 + $0x13] sm:$0x1]
        %v1312 = vlaneseq
        %v1313 = vshrl.u32 %v1312, 7
        %v1314 = vsub.s32 0, %v1313
        %v1315 = vrot.slane %v1311, %v1314
        %v1316 = vmul.f32 %v1315, %v954
        %v1317 = vmul.f32 %v1315, %v955
        %v1318 = vmul.f32 %v1315, %v956
        %v1322 = vrot.slane %v1316, 5
        %v1323 = vrot.slane %v1317, 5
        %v1324 = vsel %vm1019, %v1322, %v1323
        %v1325 = vrot.slane %v1318, 5
        %v1326 = vsel %vm1019, %v1323, %v1325
        %v1329 = vadd.f32 %v1309, %v1324
        %v1330 = vadd.f32 %v1310, %v1326
        %v1331 = vld [vmem:[#allocation10 + $0x14] sm:$0x1]
        %v1332 = vlaneseq
        %v1333 = vshrl.u32 %v1332, 7
        %v1334 = vsub.s32 0, %v1333
        %v1335 = vrot.slane %v1331, %v1334
        %v1336 = vmul.f32 %v1335, %v954
        %v1337 = vmul.f32 %v1335, %v955
        %v1338 = vmul.f32 %v1335, %v956
        %v1342 = vrot.slane %v1336, 4
        %v1343 = vrot.slane %v1337, 4
        %v1344 = vsel %vm1040, %v1342, %v1343
        %v1345 = vrot.slane %v1338, 4
        %v1346 = vsel %vm1040, %v1343, %v1345
        %v1349 = vadd.f32 %v1329, %v1344
        %v1350 = vadd.f32 %v1330, %v1346
        %v1351 = vld [vmem:[#allocation10 + $0x15] sm:$0x1]
        %v1352 = vlaneseq
        %v1353 = vshrl.u32 %v1352, 7
        %v1354 = vsub.s32 0, %v1353
        %v1355 = vrot.slane %v1351, %v1354
        %v1356 = vmul.f32 %v1355, %v954
        %v1357 = vmul.f32 %v1355, %v955
        %v1358 = vmul.f32 %v1355, %v956
        %v1362 = vrot.slane %v1356, 3
        %v1363 = vrot.slane %v1357, 3
        %v1364 = vsel %vm1061, %v1362, %v1363
        %v1365 = vrot.slane %v1358, 3
        %v1366 = vsel %vm1061, %v1363, %v1365
        %v1369 = vadd.f32 %v1349, %v1364
        %v1370 = vadd.f32 %v1350, %v1366
        %v1371 = vld [vmem:[#allocation10 + $0x16] sm:$0x1]
        %v1372 = vlaneseq
        %v1373 = vshrl.u32 %v1372, 7
        %v1374 = vsub.s32 0, %v1373
        %v1375 = vrot.slane %v1371, %v1374
        %v1376 = vmul.f32 %v1375, %v954
        %v1377 = vmul.f32 %v1375, %v955
        %v1378 = vmul.f32 %v1375, %v956
        %v1382 = vrot.slane %v1376, 2
        %v1383 = vrot.slane %v1377, 2
        %v1384 = vsel %vm1082, %v1382, %v1383
        %v1385 = vrot.slane %v1378, 2
        %v1386 = vsel %vm1082, %v1383, %v1385
        %v1389 = vadd.f32 %v1369, %v1384
        %v1390 = vadd.f32 %v1370, %v1386
        %v1391 = vld [vmem:[#allocation10 + $0x17] sm:$0x1]
        %v1392 = vlaneseq
        %v1393 = vshrl.u32 %v1392, 7
        %v1394 = vsub.s32 0, %v1393
        %v1395 = vrot.slane %v1391, %v1394
        %v1396 = vmul.f32 %v1395, %v954
        %v1397 = vmul.f32 %v1395, %v955
        %v1398 = vmul.f32 %v1395, %v956
        %v1402 = vrot.slane %v1396, 1
        %v1403 = vrot.slane %v1397, 1
        %v1404 = vsel %vm1103, %v1402, %v1403
        %v1405 = vrot.slane %v1398, 1
        %v1406 = vsel %vm1103, %v1403, %v1405
        %v1409 = vadd.f32 %v1389, %v1404
        %v1410 = vadd.f32 %v1390, %v1406
        %v1411 = vld [vmem:[#allocation10 + $0x18] sm:$0x1]
        %v1412 = vlaneseq
        %v1413 = vshrl.u32 %v1412, 7
        %v1414 = vsub.s32 0, %v1413
        %v1415 = vrot.slane %v1411, %v1414
        %v1416 = vmul.f32 %v1415, %v954
        %v1417 = vmul.f32 %v1415, %v955
        %v1418 = vadd.f32 %v1409, %v1416
        %v1419 = vadd.f32 %v1410, %v1417
        %v1420 = vld [vmem:[#allocation10 + $0x19] sm:$0x1]
        %v1421 = vlaneseq
        %v1422 = vshrl.u32 %v1421, 7
        %v1423 = vsub.s32 0, %v1422
        %v1424 = vrot.slane %v1420, %v1423
        %v1425 = vmul.f32 %v1424, %v953
        %v1426 = vmul.f32 %v1424, %v954
        %v1427 = vmul.f32 %v1424, %v955
        %v1431 = vrot.slane %v1425, 7
        %v1432 = vrot.slane %v1426, 7
        %v1433 = vsel %vm977, %v1431, %v1432
        %v1434 = vrot.slane %v1427, 7
        %v1435 = vsel %vm977, %v1432, %v1434
        %v1438 = vadd.f32 %v1418, %v1433
        %v1439 = vadd.f32 %v1419, %v1435
        %v1440 = vld [vmem:[#allocation10 + $0x1a] sm:$0x1]
        %v1441 = vlaneseq
        %v1442 = vshrl.u32 %v1441, 7
        %v1443 = vsub.s32 0, %v1442
        %v1444 = vrot.slane %v1440, %v1443
        %v1445 = vmul.f32 %v1444, %v953
        %v1446 = vmul.f32 %v1444, %v954
        %v1447 = vmul.f32 %v1444, %v955
        %v1451 = vrot.slane %v1445, 6
        %v1452 = vrot.slane %v1446, 6
        %v1453 = vsel %vm998, %v1451, %v1452
        %v1454 = vrot.slane %v1447, 6
        %v1455 = vsel %vm998, %v1452, %v1454
        %v1458 = vadd.f32 %v1438, %v1453
        %v1459 = vadd.f32 %v1439, %v1455
        %v1460 = vld [vmem:[#allocation10 + $0x1b] sm:$0x1]
        %v1461 = vlaneseq
        %v1462 = vshrl.u32 %v1461, 7
        %v1463 = vsub.s32 0, %v1462
        %v1464 = vrot.slane %v1460, %v1463
        %v1465 = vmul.f32 %v1464, %v953
        %v1466 = vmul.f32 %v1464, %v954
        %v1467 = vmul.f32 %v1464, %v955
        %v1471 = vrot.slane %v1465, 5
        %v1472 = vrot.slane %v1466, 5
        %v1473 = vsel %vm1019, %v1471, %v1472
        %v1474 = vrot.slane %v1467, 5
        %v1475 = vsel %vm1019, %v1472, %v1474
        %v1478 = vadd.f32 %v1458, %v1473
        %v1479 = vadd.f32 %v1459, %v1475
        %v1480 = vld [vmem:[#allocation10 + $0x1c] sm:$0x1]
        %v1481 = vlaneseq
        %v1482 = vshrl.u32 %v1481, 7
        %v1483 = vsub.s32 0, %v1482
        %v1484 = vrot.slane %v1480, %v1483
        %v1485 = vmul.f32 %v1484, %v953
        %v1486 = vmul.f32 %v1484, %v954
        %v1487 = vmul.f32 %v1484, %v955
        %v1491 = vrot.slane %v1485, 4
        %v1492 = vrot.slane %v1486, 4
        %v1493 = vsel %vm1040, %v1491, %v1492
        %v1494 = vrot.slane %v1487, 4
        %v1495 = vsel %vm1040, %v1492, %v1494
        %v1498 = vadd.f32 %v1478, %v1493
        %v1499 = vadd.f32 %v1479, %v1495
        %v1500 = vld [vmem:[#allocation10 + $0x1d] sm:$0x1]
        %v1501 = vlaneseq
        %v1502 = vshrl.u32 %v1501, 7
        %v1503 = vsub.s32 0, %v1502
        %v1504 = vrot.slane %v1500, %v1503
        %v1505 = vmul.f32 %v1504, %v953
        %v1506 = vmul.f32 %v1504, %v954
        %v1507 = vmul.f32 %v1504, %v955
        %v1511 = vrot.slane %v1505, 3
        %v1512 = vrot.slane %v1506, 3
        %v1513 = vsel %vm1061, %v1511, %v1512
        %v1514 = vrot.slane %v1507, 3
        %v1515 = vsel %vm1061, %v1512, %v1514
        %v1518 = vadd.f32 %v1498, %v1513
        %v1519 = vadd.f32 %v1499, %v1515
        %v1520 = vld [vmem:[#allocation10 + $0x1e] sm:$0x1]
        %v1521 = vlaneseq
        %v1522 = vshrl.u32 %v1521, 7
        %v1523 = vsub.s32 0, %v1522
        %v1524 = vrot.slane %v1520, %v1523
        %v1525 = vmul.f32 %v1524, %v953
        %v1526 = vmul.f32 %v1524, %v954
        %v1527 = vmul.f32 %v1524, %v955
        %v1531 = vrot.slane %v1525, 2
        %v1532 = vrot.slane %v1526, 2
        %v1533 = vsel %vm1082, %v1531, %v1532
        %v1534 = vrot.slane %v1527, 2
        %v1535 = vsel %vm1082, %v1532, %v1534
        %v1538 = vadd.f32 %v1518, %v1533
        %v1539 = vadd.f32 %v1519, %v1535
        %v1540 = vld [vmem:[#allocation10 + $0x1f] sm:$0x1]
        %v1541 = vlaneseq
        %v1542 = vshrl.u32 %v1541, 7
        %v1543 = vsub.s32 0, %v1542
        %v1544 = vrot.slane %v1540, %v1543
        %v1545 = vmul.f32 %v1544, %v953
        %v1546 = vmul.f32 %v1544, %v954
        %v1547 = vmul.f32 %v1544, %v955
        %v1551 = vrot.slane %v1545, 1
        %v1552 = vrot.slane %v1546, 1
        %v1553 = vsel %vm1103, %v1551, %v1552
        %v1554 = vrot.slane %v1547, 1
        %v1555 = vsel %vm1103, %v1552, %v1554
        %v1558 = vadd.f32 %v1538, %v1553
        %v1559 = vadd.f32 %v1539, %v1555
        %v1560 = vld [vmem:[#allocation10 + $0x20] sm:$0x1]
        %v1561 = vlaneseq
        %v1562 = vshrl.u32 %v1561, 7
        %v1563 = vsub.s32 0, %v1562
        %v1564 = vrot.slane %v1560, %v1563
        %v1565 = vmul.f32 %v1564, %v953
        %v1566 = vmul.f32 %v1564, %v954
        %v1567 = vadd.f32 %v1558, %v1565
        %v1568 = vadd.f32 %v1559, %v1566
        %v1569 = vld [vmem:[#allocation10 + $0x21] sm:$0x1]
        %v1570 = vlaneseq
        %v1571 = vshrl.u32 %v1570, 7
        %v1572 = vsub.s32 0, %v1571
        %v1573 = vrot.slane %v1569, %v1572
        %v1574 = vmul.f32 %v1573, %v952
        %v1575 = vmul.f32 %v1573, %v953
        %v1576 = vmul.f32 %v1573, %v954
        %v1580 = vrot.slane %v1574, 7
        %v1581 = vrot.slane %v1575, 7
        %v1582 = vsel %vm977, %v1580, %v1581
        %v1583 = vrot.slane %v1576, 7
        %v1584 = vsel %vm977, %v1581, %v1583
        %v1587 = vadd.f32 %v1567, %v1582
        %v1588 = vadd.f32 %v1568, %v1584
        %v1589 = vld [vmem:[#allocation10 + $0x22] sm:$0x1]
        %v1590 = vlaneseq
        %v1591 = vshrl.u32 %v1590, 7
        %v1592 = vsub.s32 0, %v1591
        %v1593 = vrot.slane %v1589, %v1592
        %v1594 = vmul.f32 %v1593, %v952
        %v1595 = vmul.f32 %v1593, %v953
        %v1596 = vmul.f32 %v1593, %v954
        %v1600 = vrot.slane %v1594, 6
        %v1601 = vrot.slane %v1595, 6
        %v1602 = vsel %vm998, %v1600, %v1601
        %v1603 = vrot.slane %v1596, 6
        %v1604 = vsel %vm998, %v1601, %v1603
        %v1607 = vadd.f32 %v1587, %v1602
        %v1608 = vadd.f32 %v1588, %v1604
        %v1609 = vld [vmem:[#allocation10 + $0x23] sm:$0x1]
        %v1610 = vlaneseq
        %v1611 = vshrl.u32 %v1610, 7
        %v1612 = vsub.s32 0, %v1611
        %v1613 = vrot.slane %v1609, %v1612
        %v1614 = vmul.f32 %v1613, %v952
        %v1615 = vmul.f32 %v1613, %v953
        %v1616 = vmul.f32 %v1613, %v954
        %v1620 = vrot.slane %v1614, 5
        %v1621 = vrot.slane %v1615, 5
        %v1622 = vsel %vm1019, %v1620, %v1621
        %v1623 = vrot.slane %v1616, 5
        %v1624 = vsel %vm1019, %v1621, %v1623
        %v1627 = vadd.f32 %v1607, %v1622
        %v1628 = vadd.f32 %v1608, %v1624
        %v1629 = vld [vmem:[#allocation10 + $0x24] sm:$0x1]
        %v1630 = vlaneseq
        %v1631 = vshrl.u32 %v1630, 7
        %v1632 = vsub.s32 0, %v1631
        %v1633 = vrot.slane %v1629, %v1632
        %v1634 = vmul.f32 %v1633, %v952
        %v1635 = vmul.f32 %v1633, %v953
        %v1636 = vmul.f32 %v1633, %v954
        %v1640 = vrot.slane %v1634, 4
        %v1641 = vrot.slane %v1635, 4
        %v1642 = vsel %vm1040, %v1640, %v1641
        %v1643 = vrot.slane %v1636, 4
        %v1644 = vsel %vm1040, %v1641, %v1643
        %v1647 = vadd.f32 %v1627, %v1642
        %v1648 = vadd.f32 %v1628, %v1644
        %v1649 = vld [vmem:[#allocation10 + $0x25] sm:$0x1]
        %v1650 = vlaneseq
        %v1651 = vshrl.u32 %v1650, 7
        %v1652 = vsub.s32 0, %v1651
        %v1653 = vrot.slane %v1649, %v1652
        %v1654 = vmul.f32 %v1653, %v952
        %v1655 = vmul.f32 %v1653, %v953
        %v1656 = vmul.f32 %v1653, %v954
        %v1660 = vrot.slane %v1654, 3
        %v1661 = vrot.slane %v1655, 3
        %v1662 = vsel %vm1061, %v1660, %v1661
        %v1663 = vrot.slane %v1656, 3
        %v1664 = vsel %vm1061, %v1661, %v1663
        %v1667 = vadd.f32 %v1647, %v1662
        %v1668 = vadd.f32 %v1648, %v1664
        %v1669 = vld [vmem:[#allocation10 + $0x26] sm:$0x1]
        %v1670 = vlaneseq
        %v1671 = vshrl.u32 %v1670, 7
        %v1672 = vsub.s32 0, %v1671
        %v1673 = vrot.slane %v1669, %v1672
        %v1674 = vmul.f32 %v1673, %v952
        %v1675 = vmul.f32 %v1673, %v953
        %v1676 = vmul.f32 %v1673, %v954
        %v1680 = vrot.slane %v1674, 2
        %v1681 = vrot.slane %v1675, 2
        %v1682 = vsel %vm1082, %v1680, %v1681
        %v1683 = vrot.slane %v1676, 2
        %v1684 = vsel %vm1082, %v1681, %v1683
        %v1687 = vadd.f32 %v1667, %v1682
        %v1688 = vadd.f32 %v1668, %v1684
        %v1689 = vld [vmem:[#allocation10 + $0x27] sm:$0x1]
        %v1690 = vlaneseq
        %v1691 = vshrl.u32 %v1690, 7
        %v1692 = vsub.s32 0, %v1691
        %v1693 = vrot.slane %v1689, %v1692
        %v1694 = vmul.f32 %v1693, %v952
        %v1695 = vmul.f32 %v1693, %v953
        %v1696 = vmul.f32 %v1693, %v954
        %v1700 = vrot.slane %v1694, 1
        %v1701 = vrot.slane %v1695, 1
        %v1702 = vsel %vm1103, %v1700, %v1701
        %v1703 = vrot.slane %v1696, 1
        %v1704 = vsel %vm1103, %v1701, %v1703
        %v1707 = vadd.f32 %v1687, %v1702
        %v1708 = vadd.f32 %v1688, %v1704
        %v1709 = vld [vmem:[#allocation10 + $0x28] sm:$0x1]
        %v1710 = vlaneseq
        %v1711 = vshrl.u32 %v1710, 7
        %v1712 = vsub.s32 0, %v1711
        %v1713 = vrot.slane %v1709, %v1712
        %v1714 = vmul.f32 %v1713, %v952
        %v1715 = vmul.f32 %v1713, %v953
        %v1716 = vadd.f32 %v1707, %v1714
        %v1717 = vadd.f32 %v1708, %v1715
        %v1718 = vld [vmem:[#allocation10 + $0x29] sm:$0x1]
        %v1719 = vlaneseq
        %v1720 = vshrl.u32 %v1719, 7
        %v1721 = vsub.s32 0, %v1720
        %v1722 = vrot.slane %v1718, %v1721
        %v1723 = vmul.f32 %v1722, %v951
        %v1724 = vmul.f32 %v1722, %v952
        %v1725 = vmul.f32 %v1722, %v953
        %v1729 = vrot.slane %v1723, 7
        %v1730 = vrot.slane %v1724, 7
        %v1731 = vsel %vm977, %v1729, %v1730
        %v1732 = vrot.slane %v1725, 7
        %v1733 = vsel %vm977, %v1730, %v1732
        %v1736 = vadd.f32 %v1716, %v1731
        %v1737 = vadd.f32 %v1717, %v1733
        %v1738 = vld [vmem:[#allocation10 + $0x2a] sm:$0x1]
        %v1739 = vlaneseq
        %v1740 = vshrl.u32 %v1739, 7
        %v1741 = vsub.s32 0, %v1740
        %v1742 = vrot.slane %v1738, %v1741
        %v1743 = vmul.f32 %v1742, %v951
        %v1744 = vmul.f32 %v1742, %v952
        %v1745 = vmul.f32 %v1742, %v953
        %v1749 = vrot.slane %v1743, 6
        %v1750 = vrot.slane %v1744, 6
        %v1751 = vsel %vm998, %v1749, %v1750
        %v1752 = vrot.slane %v1745, 6
        %v1753 = vsel %vm998, %v1750, %v1752
        %v1756 = vadd.f32 %v1736, %v1751
        %v1757 = vadd.f32 %v1737, %v1753
        %v1758 = vld [vmem:[#allocation10 + $0x2b] sm:$0x1]
        %v1759 = vlaneseq
        %v1760 = vshrl.u32 %v1759, 7
        %v1761 = vsub.s32 0, %v1760
        %v1762 = vrot.slane %v1758, %v1761
        %v1763 = vmul.f32 %v1762, %v951
        %v1764 = vmul.f32 %v1762, %v952
        %v1765 = vmul.f32 %v1762, %v953
        %v1769 = vrot.slane %v1763, 5
        %v1770 = vrot.slane %v1764, 5
        %v1771 = vsel %vm1019, %v1769, %v1770
        %v1772 = vrot.slane %v1765, 5
        %v1773 = vsel %vm1019, %v1770, %v1772
        %v1776 = vadd.f32 %v1756, %v1771
        %v1777 = vadd.f32 %v1757, %v1773
        %v1778 = vld [vmem:[#allocation10 + $0x2c] sm:$0x1]
        %v1779 = vlaneseq
        %v1780 = vshrl.u32 %v1779, 7
        %v1781 = vsub.s32 0, %v1780
        %v1782 = vrot.slane %v1778, %v1781
        %v1783 = vmul.f32 %v1782, %v951
        %v1784 = vmul.f32 %v1782, %v952
        %v1785 = vmul.f32 %v1782, %v953
        %v1789 = vrot.slane %v1783, 4
        %v1790 = vrot.slane %v1784, 4
        %v1791 = vsel %vm1040, %v1789, %v1790
        %v1792 = vrot.slane %v1785, 4
        %v1793 = vsel %vm1040, %v1790, %v1792
        %v1796 = vadd.f32 %v1776, %v1791
        %v1797 = vadd.f32 %v1777, %v1793
        %v1798 = vld [vmem:[#allocation10 + $0x2d] sm:$0x1]
        %v1799 = vlaneseq
        %v1800 = vshrl.u32 %v1799, 7
        %v1801 = vsub.s32 0, %v1800
        %v1802 = vrot.slane %v1798, %v1801
        %v1803 = vmul.f32 %v1802, %v951
        %v1804 = vmul.f32 %v1802, %v952
        %v1805 = vmul.f32 %v1802, %v953
        %v1809 = vrot.slane %v1803, 3
        %v1810 = vrot.slane %v1804, 3
        %v1811 = vsel %vm1061, %v1809, %v1810
        %v1812 = vrot.slane %v1805, 3
        %v1813 = vsel %vm1061, %v1810, %v1812
        %v1816 = vadd.f32 %v1796, %v1811
        %v1817 = vadd.f32 %v1797, %v1813
        %v1818 = vld [vmem:[#allocation10 + $0x2e] sm:$0x1]
        %v1819 = vlaneseq
        %v1820 = vshrl.u32 %v1819, 7
        %v1821 = vsub.s32 0, %v1820
        %v1822 = vrot.slane %v1818, %v1821
        %v1823 = vmul.f32 %v1822, %v951
        %v1824 = vmul.f32 %v1822, %v952
        %v1825 = vmul.f32 %v1822, %v953
        %v1829 = vrot.slane %v1823, 2
        %v1830 = vrot.slane %v1824, 2
        %v1831 = vsel %vm1082, %v1829, %v1830
        %v1832 = vrot.slane %v1825, 2
        %v1833 = vsel %vm1082, %v1830, %v1832
        %v1836 = vadd.f32 %v1816, %v1831
        %v1837 = vadd.f32 %v1817, %v1833
        %v1838 = vld [vmem:[#allocation10 + $0x2f] sm:$0x1]
        %v1839 = vlaneseq
        %v1840 = vshrl.u32 %v1839, 7
        %v1841 = vsub.s32 0, %v1840
        %v1842 = vrot.slane %v1838, %v1841
        %v1843 = vmul.f32 %v1842, %v951
        %v1844 = vmul.f32 %v1842, %v952
        %v1845 = vmul.f32 %v1842, %v953
        %v1849 = vrot.slane %v1843, 1
        %v1850 = vrot.slane %v1844, 1
        %v1851 = vsel %vm1103, %v1849, %v1850
        %v1852 = vrot.slane %v1845, 1
        %v1853 = vsel %vm1103, %v1850, %v1852
        %v1856 = vadd.f32 %v1836, %v1851
        %v1857 = vadd.f32 %v1837, %v1853
        %v1858 = vld [vmem:[#allocation10 + $0x30] sm:$0x1]
        %v1859 = vlaneseq
        %v1860 = vshrl.u32 %v1859, 7
        %v1861 = vsub.s32 0, %v1860
        %v1862 = vrot.slane %v1858, %v1861
        %v1863 = vmul.f32 %v1862, %v951
        %v1864 = vmul.f32 %v1862, %v952
        %v1865 = vadd.f32 %v1856, %v1863
        %v1866 = vadd.f32 %v1857, %v1864
        %v1867 = vld [vmem:[#allocation10 + $0x31] sm:$0x1]
        %v1868 = vlaneseq
        %v1869 = vshrl.u32 %v1868, 7
        %v1870 = vsub.s32 0, %v1869
        %v1871 = vrot.slane %v1867, %v1870
        %v1872 = vmul.f32 %v1871, %v950
        %v1873 = vmul.f32 %v1871, %v951
        %v1874 = vmul.f32 %v1871, %v952
        %v1878 = vrot.slane %v1872, 7
        %v1879 = vrot.slane %v1873, 7
        %v1880 = vsel %vm977, %v1878, %v1879
        %v1881 = vrot.slane %v1874, 7
        %v1882 = vsel %vm977, %v1879, %v1881
        %v1885 = vadd.f32 %v1865, %v1880
        %v1886 = vadd.f32 %v1866, %v1882
        %v1887 = vld [vmem:[#allocation10 + $0x32] sm:$0x1]
        %v1888 = vlaneseq
        %v1889 = vshrl.u32 %v1888, 7
        %v1890 = vsub.s32 0, %v1889
        %v1891 = vrot.slane %v1887, %v1890
        %v1892 = vmul.f32 %v1891, %v950
        %v1893 = vmul.f32 %v1891, %v951
        %v1894 = vmul.f32 %v1891, %v952
        %v1898 = vrot.slane %v1892, 6
        %v1899 = vrot.slane %v1893, 6
        %v1900 = vsel %vm998, %v1898, %v1899
        %v1901 = vrot.slane %v1894, 6
        %v1902 = vsel %vm998, %v1899, %v1901
        %v1905 = vadd.f32 %v1885, %v1900
        %v1906 = vadd.f32 %v1886, %v1902
        %v1907 = vld [vmem:[#allocation10 + $0x33] sm:$0x1]
        %v1908 = vlaneseq
        %v1909 = vshrl.u32 %v1908, 7
        %v1910 = vsub.s32 0, %v1909
        %v1911 = vrot.slane %v1907, %v1910
        %v1912 = vmul.f32 %v1911, %v950
        %v1913 = vmul.f32 %v1911, %v951
        %v1914 = vmul.f32 %v1911, %v952
        %v1918 = vrot.slane %v1912, 5
        %v1919 = vrot.slane %v1913, 5
        %v1920 = vsel %vm1019, %v1918, %v1919
        %v1921 = vrot.slane %v1914, 5
        %v1922 = vsel %vm1019, %v1919, %v1921
        %v1925 = vadd.f32 %v1905, %v1920
        %v1926 = vadd.f32 %v1906, %v1922
        %v1927 = vld [vmem:[#allocation10 + $0x34] sm:$0x1]
        %v1928 = vlaneseq
        %v1929 = vshrl.u32 %v1928, 7
        %v1930 = vsub.s32 0, %v1929
        %v1931 = vrot.slane %v1927, %v1930
        %v1932 = vmul.f32 %v1931, %v950
        %v1933 = vmul.f32 %v1931, %v951
        %v1934 = vmul.f32 %v1931, %v952
        %v1938 = vrot.slane %v1932, 4
        %v1939 = vrot.slane %v1933, 4
        %v1940 = vsel %vm1040, %v1938, %v1939
        %v1941 = vrot.slane %v1934, 4
        %v1942 = vsel %vm1040, %v1939, %v1941
        %v1945 = vadd.f32 %v1925, %v1940
        %v1946 = vadd.f32 %v1926, %v1942
        %v1947 = vld [vmem:[#allocation10 + $0x35] sm:$0x1]
        %v1948 = vlaneseq
        %v1949 = vshrl.u32 %v1948, 7
        %v1950 = vsub.s32 0, %v1949
        %v1951 = vrot.slane %v1947, %v1950
        %v1952 = vmul.f32 %v1951, %v950
        %v1953 = vmul.f32 %v1951, %v951
        %v1954 = vmul.f32 %v1951, %v952
        %v1958 = vrot.slane %v1952, 3
        %v1959 = vrot.slane %v1953, 3
        %v1960 = vsel %vm1061, %v1958, %v1959
        %v1961 = vrot.slane %v1954, 3
        %v1962 = vsel %vm1061, %v1959, %v1961
        %v1965 = vadd.f32 %v1945, %v1960
        %v1966 = vadd.f32 %v1946, %v1962
        %v1967 = vld [vmem:[#allocation10 + $0x36] sm:$0x1]
        %v1968 = vlaneseq
        %v1969 = vshrl.u32 %v1968, 7
        %v1970 = vsub.s32 0, %v1969
        %v1971 = vrot.slane %v1967, %v1970
        %v1972 = vmul.f32 %v1971, %v950
        %v1973 = vmul.f32 %v1971, %v951
        %v1974 = vmul.f32 %v1971, %v952
        %v1978 = vrot.slane %v1972, 2
        %v1979 = vrot.slane %v1973, 2
        %v1980 = vsel %vm1082, %v1978, %v1979
        %v1981 = vrot.slane %v1974, 2
        %v1982 = vsel %vm1082, %v1979, %v1981
        %v1985 = vadd.f32 %v1965, %v1980
        %v1986 = vadd.f32 %v1966, %v1982
        %v1987 = vld [vmem:[#allocation10 + $0x37] sm:$0x1]
        %v1988 = vlaneseq
        %v1989 = vshrl.u32 %v1988, 7
        %v1990 = vsub.s32 0, %v1989
        %v1991 = vrot.slane %v1987, %v1990
        %v1992 = vmul.f32 %v1991, %v950
        %v1993 = vmul.f32 %v1991, %v951
        %v1994 = vmul.f32 %v1991, %v952
        %v1998 = vrot.slane %v1992, 1
        %v1999 = vrot.slane %v1993, 1
        %v2000 = vsel %vm1103, %v1998, %v1999
        %v2001 = vrot.slane %v1994, 1
        %v2002 = vsel %vm1103, %v1999, %v2001
        %v2005 = vadd.f32 %v1985, %v2000
        %v2006 = vadd.f32 %v1986, %v2002
        %v2007 = vld [vmem:[#allocation10 + $0x38] sm:$0x1]
        %v2008 = vlaneseq
        %v2009 = vshrl.u32 %v2008, 7
        %v2010 = vsub.s32 0, %v2009
        %v2011 = vrot.slane %v2007, %v2010
        %v2012 = vmul.f32 %v2011, %v950
        %v2013 = vmul.f32 %v2011, %v951
        %v2014 = vadd.f32 %v2005, %v2012
        %v2015 = vadd.f32 %v2006, %v2013
        %v2016 = vld [vmem:[#allocation10 + $0x39] sm:$0x1]
        %v2017 = vlaneseq
        %v2018 = vshrl.u32 %v2017, 7
        %v2019 = vsub.s32 0, %v2018
        %v2020 = vrot.slane %v2016, %v2019
        %v2021 = vmul.f32 %v2020, %v949
        %v2022 = vmul.f32 %v2020, %v950
        %v2023 = vmul.f32 %v2020, %v951
        %v2027 = vrot.slane %v2021, 7
        %v2028 = vrot.slane %v2022, 7
        %v2029 = vsel %vm977, %v2027, %v2028
        %v2030 = vrot.slane %v2023, 7
        %v2031 = vsel %vm977, %v2028, %v2030
        %v2034 = vadd.f32 %v2014, %v2029
        %v2035 = vadd.f32 %v2015, %v2031
        %v2036 = vld [vmem:[#allocation10 + $0x3a] sm:$0x1]
        %v2037 = vlaneseq
        %v2038 = vshrl.u32 %v2037, 7
        %v2039 = vsub.s32 0, %v2038
        %v2040 = vrot.slane %v2036, %v2039
        %v2041 = vmul.f32 %v2040, %v949
        %v2042 = vmul.f32 %v2040, %v950
        %v2043 = vmul.f32 %v2040, %v951
        %v2047 = vrot.slane %v2041, 6
        %v2048 = vrot.slane %v2042, 6
        %v2049 = vsel %vm998, %v2047, %v2048
        %v2050 = vrot.slane %v2043, 6
        %v2051 = vsel %vm998, %v2048, %v2050
        %v2054 = vadd.f32 %v2034, %v2049
        %v2055 = vadd.f32 %v2035, %v2051
        %v2056 = vld [vmem:[#allocation10 + $0x3b] sm:$0x1]
        %v2057 = vlaneseq
        %v2058 = vshrl.u32 %v2057, 7
        %v2059 = vsub.s32 0, %v2058
        %v2060 = vrot.slane %v2056, %v2059
        %v2061 = vmul.f32 %v2060, %v949
        %v2062 = vmul.f32 %v2060, %v950
        %v2063 = vmul.f32 %v2060, %v951
        %v2067 = vrot.slane %v2061, 5
        %v2068 = vrot.slane %v2062, 5
        %v2069 = vsel %vm1019, %v2067, %v2068
        %v2070 = vrot.slane %v2063, 5
        %v2071 = vsel %vm1019, %v2068, %v2070
        %v2074 = vadd.f32 %v2054, %v2069
        %v2075 = vadd.f32 %v2055, %v2071
        %v2076 = vld [vmem:[#allocation10 + $0x3c] sm:$0x1]
        %v2077 = vlaneseq
        %v2078 = vshrl.u32 %v2077, 7
        %v2079 = vsub.s32 0, %v2078
        %v2080 = vrot.slane %v2076, %v2079
        %v2081 = vmul.f32 %v2080, %v949
        %v2082 = vmul.f32 %v2080, %v950
        %v2083 = vmul.f32 %v2080, %v951
        %v2087 = vrot.slane %v2081, 4
        %v2088 = vrot.slane %v2082, 4
        %v2089 = vsel %vm1040, %v2087, %v2088
        %v2090 = vrot.slane %v2083, 4
        %v2091 = vsel %vm1040, %v2088, %v2090
        %v2094 = vadd.f32 %v2074, %v2089
        %v2095 = vadd.f32 %v2075, %v2091
        %v2096 = vld [vmem:[#allocation10 + $0x3d] sm:$0x1]
        %v2097 = vlaneseq
        %v2098 = vshrl.u32 %v2097, 7
        %v2099 = vsub.s32 0, %v2098
        %v2100 = vrot.slane %v2096, %v2099
        %v2101 = vmul.f32 %v2100, %v949
        %v2102 = vmul.f32 %v2100, %v950
        %v2103 = vmul.f32 %v2100, %v951
        %v2107 = vrot.slane %v2101, 3
        %v2108 = vrot.slane %v2102, 3
        %v2109 = vsel %vm1061, %v2107, %v2108
        %v2110 = vrot.slane %v2103, 3
        %v2111 = vsel %vm1061, %v2108, %v2110
        %v2114 = vadd.f32 %v2094, %v2109
        %v2115 = vadd.f32 %v2095, %v2111
        %v2116 = vld [vmem:[#allocation10 + $0x3e] sm:$0x1]
        %v2117 = vlaneseq
        %v2118 = vshrl.u32 %v2117, 7
        %v2119 = vsub.s32 0, %v2118
        %v2120 = vrot.slane %v2116, %v2119
        %v2121 = vmul.f32 %v2120, %v949
        %v2122 = vmul.f32 %v2120, %v950
        %v2123 = vmul.f32 %v2120, %v951
        %v2127 = vrot.slane %v2121, 2
        %v2128 = vrot.slane %v2122, 2
        %v2129 = vsel %vm1082, %v2127, %v2128
        %v2130 = vrot.slane %v2123, 2
        %v2131 = vsel %vm1082, %v2128, %v2130
        %v2134 = vadd.f32 %v2114, %v2129
        %v2135 = vadd.f32 %v2115, %v2131
        %v2136 = vld [vmem:[#allocation10 + $0x3f] sm:$0x1]
        %v2137 = vlaneseq
        %v2138 = vshrl.u32 %v2137, 7
        %v2139 = vsub.s32 0, %v2138
        %v2140 = vrot.slane %v2136, %v2139
        %v2141 = vmul.f32 %v2140, %v949
        %v2142 = vmul.f32 %v2140, %v950
        %v2143 = vmul.f32 %v2140, %v951
        %v2147 = vrot.slane %v2141, 1
        %v2148 = vrot.slane %v2142, 1
        %v2149 = vsel %vm1103, %v2147, %v2148
        %v2150 = vrot.slane %v2143, 1
        %v2151 = vsel %vm1103, %v2148, %v2150
        %v2154 = vadd.f32 %v2134, %v2149
        %v2155 = vadd.f32 %v2135, %v2151
        %2156 = vst [vmem:[#allocation2] sm:$0xff] %v951
        %2157 = vst [vmem:[#allocation2 + $0x8] sm:$0xff] %v952
        %2158 = vst [vmem:[#allocation2 + $0x10] sm:$0xff] %v953
        %2159 = vst [vmem:[#allocation2 + $0x18] sm:$0xff] %v954
        %2160 = vst [vmem:[#allocation2 + $0x20] sm:$0xff] %v955
        %2161 = vst [vmem:[#allocation2 + $0x28] sm:$0xff] %v956
        %2162 = vst [vmem:[#allocation2 + $0x30] sm:$0xff] %v902
        %2163 = vst [vmem:[#allocation2 + $0x38] sm:$0xff] %v906
        %v2164 = vld [vmem:[%s4] sm:$0x1]
        %v2166 = vlaneseq
        %v2167 = vshrl.u32 %v2166, 7
        %v2168 = vsub.s32 0, %v2167
        %v2169 = vrot.slane %v2164, %v2168
        %v2171 = vmul.f32 %v2169, %v902
        %v2172 = vmul.f32 %v2169, %v906
        %v2173 = vadd.f32 %v2154, %v2171
        %v2174 = vadd.f32 %v2155, %v2172
        %v2175 = vmul.f32 %v2173, %v943
        %v2176 = vmul.f32 %v2174, %v946
        %v2177 = vld [vmem:[#allocation3] sm:$0xff]
        %v2178 = vld [vmem:[#allocation3 + $0x8] sm:$0xff]
        %v2179 = vld [vmem:[#allocation3 + $0x10] sm:$0xff]
        %v2180 = vld [vmem:[#allocation3 + $0x18] sm:$0xff]
        %v2181 = vld [vmem:[#allocation4] sm:$0xff]
        %v2182 = vld [vmem:[#allocation4 + $0x8] sm:$0xff]
        %v2183 = vld [vmem:[#allocation4 + $0x10] sm:$0xff]
        %v2184 = vld [vmem:[#allocation4 + $0x18] sm:$0xff]
        %v2185 = vld [vmem:[#allocation11] sm:$0xff]
        %v2186 = vld [vmem:[#allocation11 + $0x8] sm:$0xff]
        %v2187 = vlaneseq
        %v2188 = vshrl.u32 %v2187, 7
        %v2189 = vsub.s32 0, %v2188
        %v2190 = vrot.slane %v2175, %v2189
        %v2191 = vmul.f32 %v2185, %v2190
        %v2192 = vmul.f32 %v2186, %v2190
        %v2193 = vadd.f32 %v2191, 0.0
        %v2194 = vadd.f32 %v2192, 0.0
        %s2195 = scalar_lea.vmem [#allocation11], 16
        %v2196 = vld [vmem:[%s2195] sm:$0xff]
        %v2197 = vld [vmem:[%s2195 + $0x8] sm:$0xff]
        %v2198 = vlaneseq
        %v2199 = vshrl.u32 %v2198, 7
        %v2200 = vsub.s32 1, %v2199
        %v2201 = vrot.slane %v2175, %v2200
        %v2202 = vmul.f32 %v2196, %v2201
        %v2203 = vmul.f32 %v2197, %v2201
        %v2204 = vadd.f32 %v2193, %v2202
        %v2205 = vadd.f32 %v2194, %v2203
        %s2206 = scalar_lea.vmem [#allocation11], 32
        %v2207 = vld [vmem:[%s2206] sm:$0xff]
        %v2208 = vld [vmem:[%s2206 + $0x8] sm:$0xff]
        %v2209 = vlaneseq
        %v2210 = vshrl.u32 %v2209, 7
        %v2211 = vsub.s32 2, %v2210
        %v2212 = vrot.slane %v2175, %v2211
        %v2213 = vmul.f32 %v2207, %v2212
        %v2214 = vmul.f32 %v2208, %v2212
        %v2215 = vadd.f32 %v2204, %v2213
        %v2216 = vadd.f32 %v2205, %v2214
        %s2217 = scalar_lea.vmem [#allocation11], 48
        %v2218 = vld [vmem:[%s2217] sm:$0xff]
        %v2219 = vld [vmem:[%s2217 + $0x8] sm:$0xff]
        %v2220 = vlaneseq
        %v2221 = vshrl.u32 %v2220, 7
        %v2222 = vsub.s32 3, %v2221
        %v2223 = vrot.slane %v2175, %v2222
        %v2224 = vmul.f32 %v2218, %v2223
        %v2225 = vmul.f32 %v2219, %v2223
        %v2226 = vadd.f32 %v2215, %v2224
        %v2227 = vadd.f32 %v2216, %v2225
        %s2228 = scalar_lea.vmem [#allocation11], 64
        %v2229 = vld [vmem:[%s2228] sm:$0xff]
        %v2230 = vld [vmem:[%s2228 + $0x8] sm:$0xff]
        %v2231 = vlaneseq
        %v2232 = vshrl.u32 %v2231, 7
        %v2233 = vsub.s32 4, %v2232
        %v2234 = vrot.slane %v2175, %v2233
        %v2235 = vmul.f32 %v2229, %v2234
        %v2236 = vmul.f32 %v2230, %v2234
        %v2237 = vadd.f32 %v2226, %v2235
        %v2238 = vadd.f32 %v2227, %v2236
        %s2239 = scalar_lea.vmem [#allocation11], 80
        %v2240 = vld [vmem:[%s2239] sm:$0xff]
        %v2241 = vld [vmem:[%s2239 + $0x8] sm:$0xff]
        %v2242 = vlaneseq
        %v2243 = vshrl.u32 %v2242, 7
        %v2244 = vsub.s32 5, %v2243
        %v2245 = vrot.slane %v2175, %v2244
        %v2246 = vmul.f32 %v2240, %v2245
        %v2247 = vmul.f32 %v2241, %v2245
        %v2248 = vadd.f32 %v2237, %v2246
        %v2249 = vadd.f32 %v2238, %v2247
        %s2250 = scalar_lea.vmem [#allocation11], 96
        %v2251 = vld [vmem:[%s2250] sm:$0xff]
        %v2252 = vld [vmem:[%s2250 + $0x8] sm:$0xff]
        %v2253 = vlaneseq
        %v2254 = vshrl.u32 %v2253, 7
        %v2255 = vsub.s32 6, %v2254
        %v2256 = vrot.slane %v2175, %v2255
        %v2257 = vmul.f32 %v2251, %v2256
        %v2258 = vmul.f32 %v2252, %v2256
        %v2259 = vadd.f32 %v2248, %v2257
        %v2260 = vadd.f32 %v2249, %v2258
        %s2261 = scalar_lea.vmem [#allocation11], 112
        %v2262 = vld [vmem:[%s2261] sm:$0xff]
        %v2263 = vld [vmem:[%s2261 + $0x8] sm:$0xff]
        %v2264 = vlaneseq
        %v2265 = vshrl.u32 %v2264, 7
        %v2266 = vsub.s32 7, %v2265
        %v2267 = vrot.slane %v2175, %v2266
        %v2268 = vmul.f32 %v2262, %v2267
        %v2269 = vmul.f32 %v2263, %v2267
        %v2270 = vadd.f32 %v2259, %v2268
        %v2271 = vadd.f32 %v2260, %v2269
        %s2272 = scalar_lea.vmem [#allocation11], 128
        %v2273 = vld [vmem:[%s2272] sm:$0xff]
        %v2274 = vld [vmem:[%s2272 + $0x8] sm:$0xff]
        %v2275 = vlaneseq
        %v2276 = vshrl.u32 %v2275, 7
        %v2277 = vsub.s32 0, %v2276
        %v2278 = vrot.slane %v2176, %v2277
        %v2279 = vmul.f32 %v2273, %v2278
        %v2280 = vmul.f32 %v2274, %v2278
        %v2281 = vadd.f32 %v2270, %v2279
        %v2282 = vadd.f32 %v2271, %v2280
        %s2283 = scalar_lea.vmem [#allocation11], 144
        %v2284 = vld [vmem:[%s2283] sm:$0xff]
        %v2285 = vld [vmem:[%s2283 + $0x8] sm:$0xff]
        %v2286 = vlaneseq
        %v2287 = vshrl.u32 %v2286, 7
        %v2288 = vsub.s32 1, %v2287
        %v2289 = vrot.slane %v2176, %v2288
        %v2290 = vmul.f32 %v2284, %v2289
        %v2291 = vmul.f32 %v2285, %v2289
        %v2292 = vadd.f32 %v2281, %v2290
        %v2293 = vadd.f32 %v2282, %v2291
        %s2294 = scalar_lea.vmem [#allocation11], 160
        %v2295 = vld [vmem:[%s2294] sm:$0xff]
        %v2296 = vld [vmem:[%s2294 + $0x8] sm:$0xff]
        %v2297 = vlaneseq
        %v2298 = vshrl.u32 %v2297, 7
        %v2299 = vsub.s32 2, %v2298
        %v2300 = vrot.slane %v2176, %v2299
        %v2301 = vmul.f32 %v2295, %v2300
        %v2302 = vmul.f32 %v2296, %v2300
        %v2303 = vadd.f32 %v2292, %v2301
        %v2304 = vadd.f32 %v2293, %v2302
        %s2305 = scalar_lea.vmem [#allocation11], 176
        %v2306 = vld [vmem:[%s2305] sm:$0xff]
        %v2307 = vld [vmem:[%s2305 + $0x8] sm:$0xff]
        %v2308 = vlaneseq
        %v2309 = vshrl.u32 %v2308, 7
        %v2310 = vsub.s32 3, %v2309
        %v2311 = vrot.slane %v2176, %v2310
        %v2312 = vmul.f32 %v2306, %v2311
        %v2313 = vmul.f32 %v2307, %v2311
        %v2314 = vadd.f32 %v2303, %v2312
        %v2315 = vadd.f32 %v2304, %v2313
        %s2316 = scalar_lea.vmem [#allocation11], 192
        %v2317 = vld [vmem:[%s2316] sm:$0xff]
        %v2318 = vld [vmem:[%s2316 + $0x8] sm:$0xff]
        %v2319 = vlaneseq
        %v2320 = vshrl.u32 %v2319, 7
        %v2321 = vsub.s32 4, %v2320
        %v2322 = vrot.slane %v2176, %v2321
        %v2323 = vmul.f32 %v2317, %v2322
        %v2324 = vmul.f32 %v2318, %v2322
        %v2325 = vadd.f32 %v2314, %v2323
        %v2326 = vadd.f32 %v2315, %v2324
        %s2327 = scalar_lea.vmem [#allocation11], 208
        %v2328 = vld [vmem:[%s2327] sm:$0xff]
        %v2329 = vld [vmem:[%s2327 + $0x8] sm:$0xff]
        %v2330 = vlaneseq
        %v2331 = vshrl.u32 %v2330, 7
        %v2332 = vsub.s32 5, %v2331
        %v2333 = vrot.slane %v2176, %v2332
        %v2334 = vmul.f32 %v2328, %v2333
        %v2335 = vmul.f32 %v2329, %v2333
        %v2336 = vadd.f32 %v2325, %v2334
        %v2337 = vadd.f32 %v2326, %v2335
        %s2338 = scalar_lea.vmem [#allocation11], 224
        %v2339 = vld [vmem:[%s2338] sm:$0xff]
        %v2340 = vld [vmem:[%s2338 + $0x8] sm:$0xff]
        %v2341 = vlaneseq
        %v2342 = vshrl.u32 %v2341, 7
        %v2343 = vsub.s32 6, %v2342
        %v2344 = vrot.slane %v2176, %v2343
        %v2345 = vmul.f32 %v2339, %v2344
        %v2346 = vmul.f32 %v2340, %v2344
        %v2347 = vadd.f32 %v2336, %v2345
        %v2348 = vadd.f32 %v2337, %v2346
        %s2349 = scalar_lea.vmem [#allocation11], 240
        %v2350 = vld [vmem:[%s2349] sm:$0xff]
        %v2351 = vld [vmem:[%s2349 + $0x8] sm:$0xff]
        %v2352 = vlaneseq
        %v2353 = vshrl.u32 %v2352, 7
        %v2354 = vsub.s32 7, %v2353
        %v2355 = vrot.slane %v2176, %v2354
        %v2356 = vmul.f32 %v2350, %v2355
        %v2357 = vmul.f32 %v2351, %v2355
        %v2358 = vadd.f32 %v2347, %v2356
        %v2359 = vadd.f32 %v2348, %v2357
        %v2360 = vld [vmem:[#allocation13] sm:$0xff]
        %v2361 = vld [vmem:[#allocation13 + $0x8] sm:$0xff]
        %v2362 = vlaneseq
        %v2363 = vshrl.u32 %v2362, 7
        %v2364 = vsub.s32 0, %v2363
        %v2365 = vrot.slane %v2177, %v2364
        %v2366 = vmul.f32 %v2360, %v2365
        %v2367 = vmul.f32 %v2361, %v2365
        %v2368 = vld [vmem:[#allocation14] sm:$0xff]
        %v2369 = vld [vmem:[#allocation14 + $0x8] sm:$0xff]
        %v2370 = vlaneseq
        %v2371 = vshrl.u32 %v2370, 7
        %v2372 = vsub.s32 0, %v2371
        %v2373 = vrot.slane %v2181, %v2372
        %v2374 = vmul.f32 %v2368, %v2373
        %v2375 = vmul.f32 %v2369, %v2373
        %v2376 = vsub.f32 %v2366, %v2374
        %v2377 = vsub.f32 %v2367, %v2375
        %v2378 = vadd.f32 %v2358, %v2376
        %v2379 = vadd.f32 %v2359, %v2377
        %s2380 = scalar_lea.vmem [#allocation13], 16
        %v2381 = vld [vmem:[%s2380] sm:$0xff]
        %v2382 = vld [vmem:[%s2380 + $0x8] sm:$0xff]
        %v2383 = vlaneseq
        %v2384 = vshrl.u32 %v2383, 7
        %v2385 = vsub.s32 1, %v2384
        %v2386 = vrot.slane %v2177, %v2385
        %v2387 = vmul.f32 %v2381, %v2386
        %v2388 = vmul.f32 %v2382, %v2386
        %s2389 = scalar_lea.vmem [#allocation14], 16
        %v2390 = vld [vmem:[%s2389] sm:$0xff]
        %v2391 = vld [vmem:[%s2389 + $0x8] sm:$0xff]
        %v2392 = vlaneseq
        %v2393 = vshrl.u32 %v2392, 7
        %v2394 = vsub.s32 1, %v2393
        %v2395 = vrot.slane %v2181, %v2394
        %v2396 = vmul.f32 %v2390, %v2395
        %v2397 = vmul.f32 %v2391, %v2395
        %v2398 = vsub.f32 %v2387, %v2396
        %v2399 = vsub.f32 %v2388, %v2397
        %v2400 = vadd.f32 %v2378, %v2398
        %v2401 = vadd.f32 %v2379, %v2399
        %s2402 = scalar_lea.vmem [#allocation13], 32
        %v2403 = vld [vmem:[%s2402] sm:$0xff]
        %v2404 = vld [vmem:[%s2402 + $0x8] sm:$0xff]
        %v2405 = vlaneseq
        %v2406 = vshrl.u32 %v2405, 7
        %v2407 = vsub.s32 2, %v2406
        %v2408 = vrot.slane %v2177, %v2407
        %v2409 = vmul.f32 %v2403, %v2408
        %v2410 = vmul.f32 %v2404, %v2408
        %s2411 = scalar_lea.vmem [#allocation14], 32
        %v2412 = vld [vmem:[%s2411] sm:$0xff]
        %v2413 = vld [vmem:[%s2411 + $0x8] sm:$0xff]
        %v2414 = vlaneseq
        %v2415 = vshrl.u32 %v2414, 7
        %v2416 = vsub.s32 2, %v2415
        %v2417 = vrot.slane %v2181, %v2416
        %v2418 = vmul.f32 %v2412, %v2417
        %v2419 = vmul.f32 %v2413, %v2417
        %v2420 = vsub.f32 %v2409, %v2418
        %v2421 = vsub.f32 %v2410, %v2419
        %v2422 = vadd.f32 %v2400, %v2420
        %v2423 = vadd.f32 %v2401, %v2421
        %s2424 = scalar_lea.vmem [#allocation13], 48
        %v2425 = vld [vmem:[%s2424] sm:$0xff]
        %v2426 = vld [vmem:[%s2424 + $0x8] sm:$0xff]
        %v2427 = vlaneseq
        %v2428 = vshrl.u32 %v2427, 7
        %v2429 = vsub.s32 3, %v2428
        %v2430 = vrot.slane %v2177, %v2429
        %v2431 = vmul.f32 %v2425, %v2430
        %v2432 = vmul.f32 %v2426, %v2430
        %s2433 = scalar_lea.vmem [#allocation14], 48
        %v2434 = vld [vmem:[%s2433] sm:$0xff]
        %v2435 = vld [vmem:[%s2433 + $0x8] sm:$0xff]
        %v2436 = vlaneseq
        %v2437 = vshrl.u32 %v2436, 7
        %v2438 = vsub.s32 3, %v2437
        %v2439 = vrot.slane %v2181, %v2438
        %v2440 = vmul.f32 %v2434, %v2439
        %v2441 = vmul.f32 %v2435, %v2439
        %v2442 = vsub.f32 %v2431, %v2440
        %v2443 = vsub.f32 %v2432, %v2441
        %v2444 = vadd.f32 %v2422, %v2442
        %v2445 = vadd.f32 %v2423, %v2443
        %s2446 = scalar_lea.vmem [#allocation13], 64
        %v2447 = vld [vmem:[%s2446] sm:$0xff]
        %v2448 = vld [vmem:[%s2446 + $0x8] sm:$0xff]
        %v2449 = vlaneseq
        %v2450 = vshrl.u32 %v2449, 7
        %v2451 = vsub.s32 4, %v2450
        %v2452 = vrot.slane %v2177, %v2451
        %v2453 = vmul.f32 %v2447, %v2452
        %v2454 = vmul.f32 %v2448, %v2452
        %s2455 = scalar_lea.vmem [#allocation14], 64
        %v2456 = vld [vmem:[%s2455] sm:$0xff]
        %v2457 = vld [vmem:[%s2455 + $0x8] sm:$0xff]
        %v2458 = vlaneseq
        %v2459 = vshrl.u32 %v2458, 7
        %v2460 = vsub.s32 4, %v2459
        %v2461 = vrot.slane %v2181, %v2460
        %v2462 = vmul.f32 %v2456, %v2461
        %v2463 = vmul.f32 %v2457, %v2461
        %v2464 = vsub.f32 %v2453, %v2462
        %v2465 = vsub.f32 %v2454, %v2463
        %v2466 = vadd.f32 %v2444, %v2464
        %v2467 = vadd.f32 %v2445, %v2465
        %s2468 = scalar_lea.vmem [#allocation13], 80
        %v2469 = vld [vmem:[%s2468] sm:$0xff]
        %v2470 = vld [vmem:[%s2468 + $0x8] sm:$0xff]
        %v2471 = vlaneseq
        %v2472 = vshrl.u32 %v2471, 7
        %v2473 = vsub.s32 5, %v2472
        %v2474 = vrot.slane %v2177, %v2473
        %v2475 = vmul.f32 %v2469, %v2474
        %v2476 = vmul.f32 %v2470, %v2474
        %s2477 = scalar_lea.vmem [#allocation14], 80
        %v2478 = vld [vmem:[%s2477] sm:$0xff]
        %v2479 = vld [vmem:[%s2477 + $0x8] sm:$0xff]
        %v2480 = vlaneseq
        %v2481 = vshrl.u32 %v2480, 7
        %v2482 = vsub.s32 5, %v2481
        %v2483 = vrot.slane %v2181, %v2482
        %v2484 = vmul.f32 %v2478, %v2483
        %v2485 = vmul.f32 %v2479, %v2483
        %v2486 = vsub.f32 %v2475, %v2484
        %v2487 = vsub.f32 %v2476, %v2485
        %v2488 = vadd.f32 %v2466, %v2486
        %v2489 = vadd.f32 %v2467, %v2487
        %s2490 = scalar_lea.vmem [#allocation13], 96
        %v2491 = vld [vmem:[%s2490] sm:$0xff]
        %v2492 = vld [vmem:[%s2490 + $0x8] sm:$0xff]
        %v2493 = vlaneseq
        %v2494 = vshrl.u32 %v2493, 7
        %v2495 = vsub.s32 6, %v2494
        %v2496 = vrot.slane %v2177, %v2495
        %v2497 = vmul.f32 %v2491, %v2496
        %v2498 = vmul.f32 %v2492, %v2496
        %s2499 = scalar_lea.vmem [#allocation14], 96
        %v2500 = vld [vmem:[%s2499] sm:$0xff]
        %v2501 = vld [vmem:[%s2499 + $0x8] sm:$0xff]
        %v2502 = vlaneseq
        %v2503 = vshrl.u32 %v2502, 7
        %v2504 = vsub.s32 6, %v2503
        %v2505 = vrot.slane %v2181, %v2504
        %v2506 = vmul.f32 %v2500, %v2505
        %v2507 = vmul.f32 %v2501, %v2505
        %v2508 = vsub.f32 %v2497, %v2506
        %v2509 = vsub.f32 %v2498, %v2507
        %v2510 = vadd.f32 %v2488, %v2508
        %v2511 = vadd.f32 %v2489, %v2509
        %s2512 = scalar_lea.vmem [#allocation13], 112
        %v2513 = vld [vmem:[%s2512] sm:$0xff]
        %v2514 = vld [vmem:[%s2512 + $0x8] sm:$0xff]
        %v2515 = vlaneseq
        %v2516 = vshrl.u32 %v2515, 7
        %v2517 = vsub.s32 7, %v2516
        %v2518 = vrot.slane %v2177, %v2517
        %v2519 = vmul.f32 %v2513, %v2518
        %v2520 = vmul.f32 %v2514, %v2518
        %s2521 = scalar_lea.vmem [#allocation14], 112
        %v2522 = vld [vmem:[%s2521] sm:$0xff]
        %v2523 = vld [vmem:[%s2521 + $0x8] sm:$0xff]
        %v2524 = vlaneseq
        %v2525 = vshrl.u32 %v2524, 7
        %v2526 = vsub.s32 7, %v2525
        %v2527 = vrot.slane %v2181, %v2526
        %v2528 = vmul.f32 %v2522, %v2527
        %v2529 = vmul.f32 %v2523, %v2527
        %v2530 = vsub.f32 %v2519, %v2528
        %v2531 = vsub.f32 %v2520, %v2529
        %v2532 = vadd.f32 %v2510, %v2530
        %v2533 = vadd.f32 %v2511, %v2531
        %s2534 = scalar_lea.vmem [#allocation13], 128
        %v2535 = vld [vmem:[%s2534] sm:$0xff]
        %v2536 = vld [vmem:[%s2534 + $0x8] sm:$0xff]
        %v2537 = vlaneseq
        %v2538 = vshrl.u32 %v2537, 7
        %v2539 = vsub.s32 0, %v2538
        %v2540 = vrot.slane %v2178, %v2539
        %v2541 = vmul.f32 %v2535, %v2540
        %v2542 = vmul.f32 %v2536, %v2540
        %s2543 = scalar_lea.vmem [#allocation14], 128
        %v2544 = vld [vmem:[%s2543] sm:$0xff]
        %v2545 = vld [vmem:[%s2543 + $0x8] sm:$0xff]
        %v2546 = vlaneseq
        %v2547 = vshrl.u32 %v2546, 7
        %v2548 = vsub.s32 0, %v2547
        %v2549 = vrot.slane %v2182, %v2548
        %v2550 = vmul.f32 %v2544, %v2549
        %v2551 = vmul.f32 %v2545, %v2549
        %v2552 = vsub.f32 %v2541, %v2550
        %v2553 = vsub.f32 %v2542, %v2551
        %v2554 = vadd.f32 %v2532, %v2552
        %v2555 = vadd.f32 %v2533, %v2553
        %s2556 = scalar_lea.vmem [#allocation13], 144
        %v2557 = vld [vmem:[%s2556] sm:$0xff]
        %v2558 = vld [vmem:[%s2556 + $0x8] sm:$0xff]
        %v2559 = vlaneseq
        %v2560 = vshrl.u32 %v2559, 7
        %v2561 = vsub.s32 1, %v2560
        %v2562 = vrot.slane %v2178, %v2561
        %v2563 = vmul.f32 %v2557, %v2562
        %v2564 = vmul.f32 %v2558, %v2562
        %s2565 = scalar_lea.vmem [#allocation14], 144
        %v2566 = vld [vmem:[%s2565] sm:$0xff]
        %v2567 = vld [vmem:[%s2565 + $0x8] sm:$0xff]
        %v2568 = vlaneseq
        %v2569 = vshrl.u32 %v2568, 7
        %v2570 = vsub.s32 1, %v2569
        %v2571 = vrot.slane %v2182, %v2570
        %v2572 = vmul.f32 %v2566, %v2571
        %v2573 = vmul.f32 %v2567, %v2571
        %v2574 = vsub.f32 %v2563, %v2572
        %v2575 = vsub.f32 %v2564, %v2573
        %v2576 = vadd.f32 %v2554, %v2574
        %v2577 = vadd.f32 %v2555, %v2575
        %s2578 = scalar_lea.vmem [#allocation13], 160
        %v2579 = vld [vmem:[%s2578] sm:$0xff]
        %v2580 = vld [vmem:[%s2578 + $0x8] sm:$0xff]
        %v2581 = vlaneseq
        %v2582 = vshrl.u32 %v2581, 7
        %v2583 = vsub.s32 2, %v2582
        %v2584 = vrot.slane %v2178, %v2583
        %v2585 = vmul.f32 %v2579, %v2584
        %v2586 = vmul.f32 %v2580, %v2584
        %s2587 = scalar_lea.vmem [#allocation14], 160
        %v2588 = vld [vmem:[%s2587] sm:$0xff]
        %v2589 = vld [vmem:[%s2587 + $0x8] sm:$0xff]
        %v2590 = vlaneseq
        %v2591 = vshrl.u32 %v2590, 7
        %v2592 = vsub.s32 2, %v2591
        %v2593 = vrot.slane %v2182, %v2592
        %v2594 = vmul.f32 %v2588, %v2593
        %v2595 = vmul.f32 %v2589, %v2593
        %v2596 = vsub.f32 %v2585, %v2594
        %v2597 = vsub.f32 %v2586, %v2595
        %v2598 = vadd.f32 %v2576, %v2596
        %v2599 = vadd.f32 %v2577, %v2597
        %s2600 = scalar_lea.vmem [#allocation13], 176
        %v2601 = vld [vmem:[%s2600] sm:$0xff]
        %v2602 = vld [vmem:[%s2600 + $0x8] sm:$0xff]
        %v2603 = vlaneseq
        %v2604 = vshrl.u32 %v2603, 7
        %v2605 = vsub.s32 3, %v2604
        %v2606 = vrot.slane %v2178, %v2605
        %v2607 = vmul.f32 %v2601, %v2606
        %v2608 = vmul.f32 %v2602, %v2606
        %s2609 = scalar_lea.vmem [#allocation14], 176
        %v2610 = vld [vmem:[%s2609] sm:$0xff]
        %v2611 = vld [vmem:[%s2609 + $0x8] sm:$0xff]
        %v2612 = vlaneseq
        %v2613 = vshrl.u32 %v2612, 7
        %v2614 = vsub.s32 3, %v2613
        %v2615 = vrot.slane %v2182, %v2614
        %v2616 = vmul.f32 %v2610, %v2615
        %v2617 = vmul.f32 %v2611, %v2615
        %v2618 = vsub.f32 %v2607, %v2616
        %v2619 = vsub.f32 %v2608, %v2617
        %v2620 = vadd.f32 %v2598, %v2618
        %v2621 = vadd.f32 %v2599, %v2619
        %s2622 = scalar_lea.vmem [#allocation13], 192
        %v2623 = vld [vmem:[%s2622] sm:$0xff]
        %v2624 = vld [vmem:[%s2622 + $0x8] sm:$0xff]
        %v2625 = vlaneseq
        %v2626 = vshrl.u32 %v2625, 7
        %v2627 = vsub.s32 4, %v2626
        %v2628 = vrot.slane %v2178, %v2627
        %v2629 = vmul.f32 %v2623, %v2628
        %v2630 = vmul.f32 %v2624, %v2628
        %s2631 = scalar_lea.vmem [#allocation14], 192
        %v2632 = vld [vmem:[%s2631] sm:$0xff]
        %v2633 = vld [vmem:[%s2631 + $0x8] sm:$0xff]
        %v2634 = vlaneseq
        %v2635 = vshrl.u32 %v2634, 7
        %v2636 = vsub.s32 4, %v2635
        %v2637 = vrot.slane %v2182, %v2636
        %v2638 = vmul.f32 %v2632, %v2637
        %v2639 = vmul.f32 %v2633, %v2637
        %v2640 = vsub.f32 %v2629, %v2638
        %v2641 = vsub.f32 %v2630, %v2639
        %v2642 = vadd.f32 %v2620, %v2640
        %v2643 = vadd.f32 %v2621, %v2641
        %s2644 = scalar_lea.vmem [#allocation13], 208
        %v2645 = vld [vmem:[%s2644] sm:$0xff]
        %v2646 = vld [vmem:[%s2644 + $0x8] sm:$0xff]
        %v2647 = vlaneseq
        %v2648 = vshrl.u32 %v2647, 7
        %v2649 = vsub.s32 5, %v2648
        %v2650 = vrot.slane %v2178, %v2649
        %v2651 = vmul.f32 %v2645, %v2650
        %v2652 = vmul.f32 %v2646, %v2650
        %s2653 = scalar_lea.vmem [#allocation14], 208
        %v2654 = vld [vmem:[%s2653] sm:$0xff]
        %v2655 = vld [vmem:[%s2653 + $0x8] sm:$0xff]
        %v2656 = vlaneseq
        %v2657 = vshrl.u32 %v2656, 7
        %v2658 = vsub.s32 5, %v2657
        %v2659 = vrot.slane %v2182, %v2658
        %v2660 = vmul.f32 %v2654, %v2659
        %v2661 = vmul.f32 %v2655, %v2659
        %v2662 = vsub.f32 %v2651, %v2660
        %v2663 = vsub.f32 %v2652, %v2661
        %v2664 = vadd.f32 %v2642, %v2662
        %v2665 = vadd.f32 %v2643, %v2663
        %s2666 = scalar_lea.vmem [#allocation13], 224
        %v2667 = vld [vmem:[%s2666] sm:$0xff]
        %v2668 = vld [vmem:[%s2666 + $0x8] sm:$0xff]
        %v2669 = vlaneseq
        %v2670 = vshrl.u32 %v2669, 7
        %v2671 = vsub.s32 6, %v2670
        %v2672 = vrot.slane %v2178, %v2671
        %v2673 = vmul.f32 %v2667, %v2672
        %v2674 = vmul.f32 %v2668, %v2672
        %s2675 = scalar_lea.vmem [#allocation14], 224
        %v2676 = vld [vmem:[%s2675] sm:$0xff]
        %v2677 = vld [vmem:[%s2675 + $0x8] sm:$0xff]
        %v2678 = vlaneseq
        %v2679 = vshrl.u32 %v2678, 7
        %v2680 = vsub.s32 6, %v2679
        %v2681 = vrot.slane %v2182, %v2680
        %v2682 = vmul.f32 %v2676, %v2681
        %v2683 = vmul.f32 %v2677, %v2681
        %v2684 = vsub.f32 %v2673, %v2682
        %v2685 = vsub.f32 %v2674, %v2683
        %v2686 = vadd.f32 %v2664, %v2684
        %v2687 = vadd.f32 %v2665, %v2685
        %s2688 = scalar_lea.vmem [#allocation13], 240
        %v2689 = vld [vmem:[%s2688] sm:$0xff]
        %v2690 = vld [vmem:[%s2688 + $0x8] sm:$0xff]
        %v2691 = vlaneseq
        %v2692 = vshrl.u32 %v2691, 7
        %v2693 = vsub.s32 7, %v2692
        %v2694 = vrot.slane %v2178, %v2693
        %v2695 = vmul.f32 %v2689, %v2694
        %v2696 = vmul.f32 %v2690, %v2694
        %s2697 = scalar_lea.vmem [#allocation14], 240
        %v2698 = vld [vmem:[%s2697] sm:$0xff]
        %v2699 = vld [vmem:[%s2697 + $0x8] sm:$0xff]
        %v2700 = vlaneseq
        %v2701 = vshrl.u32 %v2700, 7
        %v2702 = vsub.s32 7, %v2701
        %v2703 = vrot.slane %v2182, %v2702
        %v2704 = vmul.f32 %v2698, %v2703
        %v2705 = vmul.f32 %v2699, %v2703
        %v2706 = vsub.f32 %v2695, %v2704
        %v2707 = vsub.f32 %v2696, %v2705
        %v2708 = vadd.f32 %v2686, %v2706
        %v2709 = vadd.f32 %v2687, %v2707
        %s2710 = scalar_lea.vmem [#allocation13], 256
        %v2711 = vld [vmem:[%s2710] sm:$0xff]
        %v2712 = vld [vmem:[%s2710 + $0x8] sm:$0xff]
        %v2713 = vlaneseq
        %v2714 = vshrl.u32 %v2713, 7
        %v2715 = vsub.s32 0, %v2714
        %v2716 = vrot.slane %v2179, %v2715
        %v2717 = vmul.f32 %v2711, %v2716
        %v2718 = vmul.f32 %v2712, %v2716
        %s2719 = scalar_lea.vmem [#allocation14], 256
        %v2720 = vld [vmem:[%s2719] sm:$0xff]
        %v2721 = vld [vmem:[%s2719 + $0x8] sm:$0xff]
        %v2722 = vlaneseq
        %v2723 = vshrl.u32 %v2722, 7
        %v2724 = vsub.s32 0, %v2723
        %v2725 = vrot.slane %v2183, %v2724
        %v2726 = vmul.f32 %v2720, %v2725
        %v2727 = vmul.f32 %v2721, %v2725
        %v2728 = vsub.f32 %v2717, %v2726
        %v2729 = vsub.f32 %v2718, %v2727
        %v2730 = vadd.f32 %v2708, %v2728
        %v2731 = vadd.f32 %v2709, %v2729
        %s2732 = scalar_lea.vmem [#allocation13], 272
        %v2733 = vld [vmem:[%s2732] sm:$0xff]
        %v2734 = vld [vmem:[%s2732 + $0x8] sm:$0xff]
        %v2735 = vlaneseq
        %v2736 = vshrl.u32 %v2735, 7
        %v2737 = vsub.s32 1, %v2736
        %v2738 = vrot.slane %v2179, %v2737
        %v2739 = vmul.f32 %v2733, %v2738
        %v2740 = vmul.f32 %v2734, %v2738
        %s2741 = scalar_lea.vmem [#allocation14], 272
        %v2742 = vld [vmem:[%s2741] sm:$0xff]
        %v2743 = vld [vmem:[%s2741 + $0x8] sm:$0xff]
        %v2744 = vlaneseq
        %v2745 = vshrl.u32 %v2744, 7
        %v2746 = vsub.s32 1, %v2745
        %v2747 = vrot.slane %v2183, %v2746
        %v2748 = vmul.f32 %v2742, %v2747
        %v2749 = vmul.f32 %v2743, %v2747
        %v2750 = vsub.f32 %v2739, %v2748
        %v2751 = vsub.f32 %v2740, %v2749
        %v2752 = vadd.f32 %v2730, %v2750
        %v2753 = vadd.f32 %v2731, %v2751
        %s2754 = scalar_lea.vmem [#allocation13], 288
        %v2755 = vld [vmem:[%s2754] sm:$0xff]
        %v2756 = vld [vmem:[%s2754 + $0x8] sm:$0xff]
        %v2757 = vlaneseq
        %v2758 = vshrl.u32 %v2757, 7
        %v2759 = vsub.s32 2, %v2758
        %v2760 = vrot.slane %v2179, %v2759
        %v2761 = vmul.f32 %v2755, %v2760
        %v2762 = vmul.f32 %v2756, %v2760
        %s2763 = scalar_lea.vmem [#allocation14], 288
        %v2764 = vld [vmem:[%s2763] sm:$0xff]
        %v2765 = vld [vmem:[%s2763 + $0x8] sm:$0xff]
        %v2766 = vlaneseq
        %v2767 = vshrl.u32 %v2766, 7
        %v2768 = vsub.s32 2, %v2767
        %v2769 = vrot.slane %v2183, %v2768
        %v2770 = vmul.f32 %v2764, %v2769
        %v2771 = vmul.f32 %v2765, %v2769
        %v2772 = vsub.f32 %v2761, %v2770
        %v2773 = vsub.f32 %v2762, %v2771
        %v2774 = vadd.f32 %v2752, %v2772
        %v2775 = vadd.f32 %v2753, %v2773
        %s2776 = scalar_lea.vmem [#allocation13], 304
        %v2777 = vld [vmem:[%s2776] sm:$0xff]
        %v2778 = vld [vmem:[%s2776 + $0x8] sm:$0xff]
        %v2779 = vlaneseq
        %v2780 = vshrl.u32 %v2779, 7
        %v2781 = vsub.s32 3, %v2780
        %v2782 = vrot.slane %v2179, %v2781
        %v2783 = vmul.f32 %v2777, %v2782
        %v2784 = vmul.f32 %v2778, %v2782
        %s2785 = scalar_lea.vmem [#allocation14], 304
        %v2786 = vld [vmem:[%s2785] sm:$0xff]
        %v2787 = vld [vmem:[%s2785 + $0x8] sm:$0xff]
        %v2788 = vlaneseq
        %v2789 = vshrl.u32 %v2788, 7
        %v2790 = vsub.s32 3, %v2789
        %v2791 = vrot.slane %v2183, %v2790
        %v2792 = vmul.f32 %v2786, %v2791
        %v2793 = vmul.f32 %v2787, %v2791
        %v2794 = vsub.f32 %v2783, %v2792
        %v2795 = vsub.f32 %v2784, %v2793
        %v2796 = vadd.f32 %v2774, %v2794
        %v2797 = vadd.f32 %v2775, %v2795
        %s2798 = scalar_lea.vmem [#allocation13], 320
        %v2799 = vld [vmem:[%s2798] sm:$0xff]
        %v2800 = vld [vmem:[%s2798 + $0x8] sm:$0xff]
        %v2801 = vlaneseq
        %v2802 = vshrl.u32 %v2801, 7
        %v2803 = vsub.s32 4, %v2802
        %v2804 = vrot.slane %v2179, %v2803
        %v2805 = vmul.f32 %v2799, %v2804
        %v2806 = vmul.f32 %v2800, %v2804
        %s2807 = scalar_lea.vmem [#allocation14], 320
        %v2808 = vld [vmem:[%s2807] sm:$0xff]
        %v2809 = vld [vmem:[%s2807 + $0x8] sm:$0xff]
        %v2810 = vlaneseq
        %v2811 = vshrl.u32 %v2810, 7
        %v2812 = vsub.s32 4, %v2811
        %v2813 = vrot.slane %v2183, %v2812
        %v2814 = vmul.f32 %v2808, %v2813
        %v2815 = vmul.f32 %v2809, %v2813
        %v2816 = vsub.f32 %v2805, %v2814
        %v2817 = vsub.f32 %v2806, %v2815
        %v2818 = vadd.f32 %v2796, %v2816
        %v2819 = vadd.f32 %v2797, %v2817
        %s2820 = scalar_lea.vmem [#allocation13], 336
        %v2821 = vld [vmem:[%s2820] sm:$0xff]
        %v2822 = vld [vmem:[%s2820 + $0x8] sm:$0xff]
        %v2823 = vlaneseq
        %v2824 = vshrl.u32 %v2823, 7
        %v2825 = vsub.s32 5, %v2824
        %v2826 = vrot.slane %v2179, %v2825
        %v2827 = vmul.f32 %v2821, %v2826
        %v2828 = vmul.f32 %v2822, %v2826
        %s2829 = scalar_lea.vmem [#allocation14], 336
        %v2830 = vld [vmem:[%s2829] sm:$0xff]
        %v2831 = vld [vmem:[%s2829 + $0x8] sm:$0xff]
        %v2832 = vlaneseq
        %v2833 = vshrl.u32 %v2832, 7
        %v2834 = vsub.s32 5, %v2833
        %v2835 = vrot.slane %v2183, %v2834
        %v2836 = vmul.f32 %v2830, %v2835
        %v2837 = vmul.f32 %v2831, %v2835
        %v2838 = vsub.f32 %v2827, %v2836
        %v2839 = vsub.f32 %v2828, %v2837
        %v2840 = vadd.f32 %v2818, %v2838
        %v2841 = vadd.f32 %v2819, %v2839
        %s2842 = scalar_lea.vmem [#allocation13], 352
        %v2843 = vld [vmem:[%s2842] sm:$0xff]
        %v2844 = vld [vmem:[%s2842 + $0x8] sm:$0xff]
        %v2845 = vlaneseq
        %v2846 = vshrl.u32 %v2845, 7
        %v2847 = vsub.s32 6, %v2846
        %v2848 = vrot.slane %v2179, %v2847
        %v2849 = vmul.f32 %v2843, %v2848
        %v2850 = vmul.f32 %v2844, %v2848
        %s2851 = scalar_lea.vmem [#allocation14], 352
        %v2852 = vld [vmem:[%s2851] sm:$0xff]
        %v2853 = vld [vmem:[%s2851 + $0x8] sm:$0xff]
        %v2854 = vlaneseq
        %v2855 = vshrl.u32 %v2854, 7
        %v2856 = vsub.s32 6, %v2855
        %v2857 = vrot.slane %v2183, %v2856
        %v2858 = vmul.f32 %v2852, %v2857
        %v2859 = vmul.f32 %v2853, %v2857
        %v2860 = vsub.f32 %v2849, %v2858
        %v2861 = vsub.f32 %v2850, %v2859
        %v2862 = vadd.f32 %v2840, %v2860
        %v2863 = vadd.f32 %v2841, %v2861
        %s2864 = scalar_lea.vmem [#allocation13], 368
        %v2865 = vld [vmem:[%s2864] sm:$0xff]
        %v2866 = vld [vmem:[%s2864 + $0x8] sm:$0xff]
        %v2867 = vlaneseq
        %v2868 = vshrl.u32 %v2867, 7
        %v2869 = vsub.s32 7, %v2868
        %v2870 = vrot.slane %v2179, %v2869
        %v2871 = vmul.f32 %v2865, %v2870
        %v2872 = vmul.f32 %v2866, %v2870
        %s2873 = scalar_lea.vmem [#allocation14], 368
        %v2874 = vld [vmem:[%s2873] sm:$0xff]
        %v2875 = vld [vmem:[%s2873 + $0x8] sm:$0xff]
        %v2876 = vlaneseq
        %v2877 = vshrl.u32 %v2876, 7
        %v2878 = vsub.s32 7, %v2877
        %v2879 = vrot.slane %v2183, %v2878
        %v2880 = vmul.f32 %v2874, %v2879
        %v2881 = vmul.f32 %v2875, %v2879
        %v2882 = vsub.f32 %v2871, %v2880
        %v2883 = vsub.f32 %v2872, %v2881
        %v2884 = vadd.f32 %v2862, %v2882
        %v2885 = vadd.f32 %v2863, %v2883
        %s2886 = scalar_lea.vmem [#allocation13], 384
        %v2887 = vld [vmem:[%s2886] sm:$0xff]
        %v2888 = vld [vmem:[%s2886 + $0x8] sm:$0xff]
        %v2889 = vlaneseq
        %v2890 = vshrl.u32 %v2889, 7
        %v2891 = vsub.s32 0, %v2890
        %v2892 = vrot.slane %v2180, %v2891
        %v2893 = vmul.f32 %v2887, %v2892
        %v2894 = vmul.f32 %v2888, %v2892
        %s2895 = scalar_lea.vmem [#allocation14], 384
        %v2896 = vld [vmem:[%s2895] sm:$0xff]
        %v2897 = vld [vmem:[%s2895 + $0x8] sm:$0xff]
        %v2898 = vlaneseq
        %v2899 = vshrl.u32 %v2898, 7
        %v2900 = vsub.s32 0, %v2899
        %v2901 = vrot.slane %v2184, %v2900
        %v2902 = vmul.f32 %v2896, %v2901
        %v2903 = vmul.f32 %v2897, %v2901
        %v2904 = vsub.f32 %v2893, %v2902
        %v2905 = vsub.f32 %v2894, %v2903
        %v2906 = vadd.f32 %v2884, %v2904
        %v2907 = vadd.f32 %v2885, %v2905
        %s2908 = scalar_lea.vmem [#allocation13], 400
        %v2909 = vld [vmem:[%s2908] sm:$0xff]
        %v2910 = vld [vmem:[%s2908 + $0x8] sm:$0xff]
        %v2911 = vlaneseq
        %v2912 = vshrl.u32 %v2911, 7
        %v2913 = vsub.s32 1, %v2912
        %v2914 = vrot.slane %v2180, %v2913
        %v2915 = vmul.f32 %v2909, %v2914
        %v2916 = vmul.f32 %v2910, %v2914
        %s2917 = scalar_lea.vmem [#allocation14], 400
        %v2918 = vld [vmem:[%s2917] sm:$0xff]
        %v2919 = vld [vmem:[%s2917 + $0x8] sm:$0xff]
        %v2920 = vlaneseq
        %v2921 = vshrl.u32 %v2920, 7
        %v2922 = vsub.s32 1, %v2921
        %v2923 = vrot.slane %v2184, %v2922
        %v2924 = vmul.f32 %v2918, %v2923
        %v2925 = vmul.f32 %v2919, %v2923
        %v2926 = vsub.f32 %v2915, %v2924
        %v2927 = vsub.f32 %v2916, %v2925
        %v2928 = vadd.f32 %v2906, %v2926
        %v2929 = vadd.f32 %v2907, %v2927
        %s2930 = scalar_lea.vmem [#allocation13], 416
        %v2931 = vld [vmem:[%s2930] sm:$0xff]
        %v2932 = vld [vmem:[%s2930 + $0x8] sm:$0xff]
        %v2933 = vlaneseq
        %v2934 = vshrl.u32 %v2933, 7
        %v2935 = vsub.s32 2, %v2934
        %v2936 = vrot.slane %v2180, %v2935
        %v2937 = vmul.f32 %v2931, %v2936
        %v2938 = vmul.f32 %v2932, %v2936
        %s2939 = scalar_lea.vmem [#allocation14], 416
        %v2940 = vld [vmem:[%s2939] sm:$0xff]
        %v2941 = vld [vmem:[%s2939 + $0x8] sm:$0xff]
        %v2942 = vlaneseq
        %v2943 = vshrl.u32 %v2942, 7
        %v2944 = vsub.s32 2, %v2943
        %v2945 = vrot.slane %v2184, %v2944
        %v2946 = vmul.f32 %v2940, %v2945
        %v2947 = vmul.f32 %v2941, %v2945
        %v2948 = vsub.f32 %v2937, %v2946
        %v2949 = vsub.f32 %v2938, %v2947
        %v2950 = vadd.f32 %v2928, %v2948
        %v2951 = vadd.f32 %v2929, %v2949
        %s2952 = scalar_lea.vmem [#allocation13], 432
        %v2953 = vld [vmem:[%s2952] sm:$0xff]
        %v2954 = vld [vmem:[%s2952 + $0x8] sm:$0xff]
        %v2955 = vlaneseq
        %v2956 = vshrl.u32 %v2955, 7
        %v2957 = vsub.s32 3, %v2956
        %v2958 = vrot.slane %v2180, %v2957
        %v2959 = vmul.f32 %v2953, %v2958
        %v2960 = vmul.f32 %v2954, %v2958
        %s2961 = scalar_lea.vmem [#allocation14], 432
        %v2962 = vld [vmem:[%s2961] sm:$0xff]
        %v2963 = vld [vmem:[%s2961 + $0x8] sm:$0xff]
        %v2964 = vlaneseq
        %v2965 = vshrl.u32 %v2964, 7
        %v2966 = vsub.s32 3, %v2965
        %v2967 = vrot.slane %v2184, %v2966
        %v2968 = vmul.f32 %v2962, %v2967
        %v2969 = vmul.f32 %v2963, %v2967
        %v2970 = vsub.f32 %v2959, %v2968
        %v2971 = vsub.f32 %v2960, %v2969
        %v2972 = vadd.f32 %v2950, %v2970
        %v2973 = vadd.f32 %v2951, %v2971
        %s2974 = scalar_lea.vmem [#allocation13], 448
        %v2975 = vld [vmem:[%s2974] sm:$0xff]
        %v2976 = vld [vmem:[%s2974 + $0x8] sm:$0xff]
        %v2977 = vlaneseq
        %v2978 = vshrl.u32 %v2977, 7
        %v2979 = vsub.s32 4, %v2978
        %v2980 = vrot.slane %v2180, %v2979
        %v2981 = vmul.f32 %v2975, %v2980
        %v2982 = vmul.f32 %v2976, %v2980
        %s2983 = scalar_lea.vmem [#allocation14], 448
        %v2984 = vld [vmem:[%s2983] sm:$0xff]
        %v2985 = vld [vmem:[%s2983 + $0x8] sm:$0xff]
        %v2986 = vlaneseq
        %v2987 = vshrl.u32 %v2986, 7
        %v2988 = vsub.s32 4, %v2987
        %v2989 = vrot.slane %v2184, %v2988
        %v2990 = vmul.f32 %v2984, %v2989
        %v2991 = vmul.f32 %v2985, %v2989
        %v2992 = vsub.f32 %v2981, %v2990
        %v2993 = vsub.f32 %v2982, %v2991
        %v2994 = vadd.f32 %v2972, %v2992
        %v2995 = vadd.f32 %v2973, %v2993
        %s2996 = scalar_lea.vmem [#allocation13], 464
        %v2997 = vld [vmem:[%s2996] sm:$0xff]
        %v2998 = vld [vmem:[%s2996 + $0x8] sm:$0xff]
        %v2999 = vlaneseq
        %v3000 = vshrl.u32 %v2999, 7
        %v3001 = vsub.s32 5, %v3000
        %v3002 = vrot.slane %v2180, %v3001
        %v3003 = vmul.f32 %v2997, %v3002
        %v3004 = vmul.f32 %v2998, %v3002
        %s3005 = scalar_lea.vmem [#allocation14], 464
        %v3006 = vld [vmem:[%s3005] sm:$0xff]
        %v3007 = vld [vmem:[%s3005 + $0x8] sm:$0xff]
        %v3008 = vlaneseq
        %v3009 = vshrl.u32 %v3008, 7
        %v3010 = vsub.s32 5, %v3009
        %v3011 = vrot.slane %v2184, %v3010
        %v3012 = vmul.f32 %v3006, %v3011
        %v3013 = vmul.f32 %v3007, %v3011
        %v3014 = vsub.f32 %v3003, %v3012
        %v3015 = vsub.f32 %v3004, %v3013
        %v3016 = vadd.f32 %v2994, %v3014
        %v3017 = vadd.f32 %v2995, %v3015
        %s3018 = scalar_lea.vmem [#allocation13], 480
        %v3019 = vld [vmem:[%s3018] sm:$0xff]
        %v3020 = vld [vmem:[%s3018 + $0x8] sm:$0xff]
        %v3021 = vlaneseq
        %v3022 = vshrl.u32 %v3021, 7
        %v3023 = vsub.s32 6, %v3022
        %v3024 = vrot.slane %v2180, %v3023
        %v3025 = vmul.f32 %v3019, %v3024
        %v3026 = vmul.f32 %v3020, %v3024
        %s3027 = scalar_lea.vmem [#allocation14], 480
        %v3028 = vld [vmem:[%s3027] sm:$0xff]
        %v3029 = vld [vmem:[%s3027 + $0x8] sm:$0xff]
        %v3030 = vlaneseq
        %v3031 = vshrl.u32 %v3030, 7
        %v3032 = vsub.s32 6, %v3031
        %v3033 = vrot.slane %v2184, %v3032
        %v3034 = vmul.f32 %v3028, %v3033
        %v3035 = vmul.f32 %v3029, %v3033
        %v3036 = vsub.f32 %v3025, %v3034
        %v3037 = vsub.f32 %v3026, %v3035
        %v3038 = vadd.f32 %v3016, %v3036
        %v3039 = vadd.f32 %v3017, %v3037
        %s3040 = scalar_lea.vmem [#allocation13], 496
        %v3041 = vld [vmem:[%s3040] sm:$0xff]
        %v3042 = vld [vmem:[%s3040 + $0x8] sm:$0xff]
        %v3043 = vlaneseq
        %v3044 = vshrl.u32 %v3043, 7
        %v3045 = vsub.s32 7, %v3044
        %v3046 = vrot.slane %v2180, %v3045
        %v3047 = vmul.f32 %v3041, %v3046
        %v3048 = vmul.f32 %v3042, %v3046
        %s3049 = scalar_lea.vmem [#allocation14], 496
        %v3050 = vld [vmem:[%s3049] sm:$0xff]
        %v3051 = vld [vmem:[%s3049 + $0x8] sm:$0xff]
        %v3052 = vlaneseq
        %v3053 = vshrl.u32 %v3052, 7
        %v3054 = vsub.s32 7, %v3053
        %v3055 = vrot.slane %v2184, %v3054
        %v3056 = vmul.f32 %v3050, %v3055
        %v3057 = vmul.f32 %v3051, %v3055
        %v3058 = vsub.f32 %v3047, %v3056
        %v3059 = vsub.f32 %v3048, %v3057
        %v3060 = vadd.f32 %v3038, %v3058
        %v3061 = vadd.f32 %v3039, %v3059
        %v3062 = vld [vmem:[%s10] sm:$0xff]
        %v3063 = vld [vmem:[%s10 + $0x8] sm:$0xff]
        %v3064 = vld [vmem:[%s10 + $0x10] sm:$0xff]
        %v3065 = vld [vmem:[%s10 + $0x18] sm:$0xff]
        %v3066 = vmul.f32 %v3062, %v2177
        %v3067 = vmul.f32 %v3063, %v2178
        %v3068 = vmul.f32 %v3064, %v2179
        %v3069 = vmul.f32 %v3065, %v2180
        %v3070 = vld [vmem:[#allocation19] sm:$0xff]
        %v3071 = vld [vmem:[#allocation19 + $0x8] sm:$0xff]
        %v3072 = vld [vmem:[#allocation19 + $0x10] sm:$0xff]
        %v3073 = vld [vmem:[#allocation19 + $0x18] sm:$0xff]
        %v3074 = vmul.f32 %v3070, %v2181
        %v3075 = vmul.f32 %v3071, %v2182
        %v3076 = vmul.f32 %v3072, %v2183
        %v3077 = vmul.f32 %v3073, %v2184
        %v3078 = vsub.f32 %v3066, %v3074
        %v3079 = vsub.f32 %v3067, %v3075
        %v3080 = vsub.f32 %v3068, %v3076
        %v3081 = vsub.f32 %v3069, %v3077
        %v3082 = vmul.f32 %v3062, %v2181
        %v3083 = vmul.f32 %v3063, %v2182
        %v3084 = vmul.f32 %v3064, %v2183
        %v3085 = vmul.f32 %v3065, %v2184
        %v3086 = vmul.f32 %v3070, %v2177
        %v3087 = vmul.f32 %v3071, %v2178
        %v3088 = vmul.f32 %v3072, %v2179
        %v3089 = vmul.f32 %v3073, %v2180
        %v3090 = vadd.f32 %v3082, %v3086
        %v3091 = vadd.f32 %v3083, %v3087
        %v3092 = vadd.f32 %v3084, %v3088
        %v3093 = vadd.f32 %v3085, %v3089
        %v3094 = vld [vmem:[#allocation16] sm:$0xff]
        %v3095 = vld [vmem:[#allocation16 + $0x8] sm:$0xff]
        %v3096 = vld [vmem:[#allocation16 + $0x10] sm:$0xff]
        %v3097 = vld [vmem:[#allocation16 + $0x18] sm:$0xff]
        %v3098 = vmul.f32 %v3094, %v2190
        %v3099 = vmul.f32 %v3095, %v2190
        %v3100 = vmul.f32 %v3096, %v2190
        %v3101 = vmul.f32 %v3097, %v2190
        %v3102 = vadd.f32 %v3078, %v3098
        %v3103 = vadd.f32 %v3079, %v3099
        %v3104 = vadd.f32 %v3080, %v3100
        %v3105 = vadd.f32 %v3081, %v3101
        %v3106 = vld [vmem:[#allocation17] sm:$0xff]
        %v3107 = vld [vmem:[#allocation17 + $0x8] sm:$0xff]
        %v3108 = vld [vmem:[#allocation17 + $0x10] sm:$0xff]
        %v3109 = vld [vmem:[#allocation17 + $0x18] sm:$0xff]
        %v3110 = vmul.f32 %v3106, %v2190
        %v3111 = vmul.f32 %v3107, %v2190
        %v3112 = vmul.f32 %v3108, %v2190
        %v3113 = vmul.f32 %v3109, %v2190
        %v3114 = vadd.f32 %v3090, %v3110
        %v3115 = vadd.f32 %v3091, %v3111
        %v3116 = vadd.f32 %v3092, %v3112
        %v3117 = vadd.f32 %v3093, %v3113
        %s3118 = scalar_lea.vmem [#allocation16], 32
        %v3119 = vld [vmem:[%s3118] sm:$0xff]
        %v3120 = vld [vmem:[%s3118 + $0x8] sm:$0xff]
        %v3121 = vld [vmem:[%s3118 + $0x10] sm:$0xff]
        %v3122 = vld [vmem:[%s3118 + $0x18] sm:$0xff]
        %v3123 = vmul.f32 %v3119, %v2201
        %v3124 = vmul.f32 %v3120, %v2201
        %v3125 = vmul.f32 %v3121, %v2201
        %v3126 = vmul.f32 %v3122, %v2201
        %v3127 = vadd.f32 %v3102, %v3123
        %v3128 = vadd.f32 %v3103, %v3124
        %v3129 = vadd.f32 %v3104, %v3125
        %v3130 = vadd.f32 %v3105, %v3126
        %s3131 = scalar_lea.vmem [#allocation17], 32
        %v3132 = vld [vmem:[%s3131] sm:$0xff]
        %v3133 = vld [vmem:[%s3131 + $0x8] sm:$0xff]
        %v3134 = vld [vmem:[%s3131 + $0x10] sm:$0xff]
        %v3135 = vld [vmem:[%s3131 + $0x18] sm:$0xff]
        %v3136 = vmul.f32 %v3132, %v2201
        %v3137 = vmul.f32 %v3133, %v2201
        %v3138 = vmul.f32 %v3134, %v2201
        %v3139 = vmul.f32 %v3135, %v2201
        %v3140 = vadd.f32 %v3114, %v3136
        %v3141 = vadd.f32 %v3115, %v3137
        %v3142 = vadd.f32 %v3116, %v3138
        %v3143 = vadd.f32 %v3117, %v3139
        %s3144 = scalar_lea.vmem [#allocation16], 64
        %v3145 = vld [vmem:[%s3144] sm:$0xff]
        %v3146 = vld [vmem:[%s3144 + $0x8] sm:$0xff]
        %v3147 = vld [vmem:[%s3144 + $0x10] sm:$0xff]
        %v3148 = vld [vmem:[%s3144 + $0x18] sm:$0xff]
        %v3149 = vmul.f32 %v3145, %v2212
        %v3150 = vmul.f32 %v3146, %v2212
        %v3151 = vmul.f32 %v3147, %v2212
        %v3152 = vmul.f32 %v3148, %v2212
        %v3153 = vadd.f32 %v3127, %v3149
        %v3154 = vadd.f32 %v3128, %v3150
        %v3155 = vadd.f32 %v3129, %v3151
        %v3156 = vadd.f32 %v3130, %v3152
        %s3157 = scalar_lea.vmem [#allocation17], 64
        %v3158 = vld [vmem:[%s3157] sm:$0xff]
        %v3159 = vld [vmem:[%s3157 + $0x8] sm:$0xff]
        %v3160 = vld [vmem:[%s3157 + $0x10] sm:$0xff]
        %v3161 = vld [vmem:[%s3157 + $0x18] sm:$0xff]
        %v3162 = vmul.f32 %v3158, %v2212
        %v3163 = vmul.f32 %v3159, %v2212
        %v3164 = vmul.f32 %v3160, %v2212
        %v3165 = vmul.f32 %v3161, %v2212
        %v3166 = vadd.f32 %v3140, %v3162
        %v3167 = vadd.f32 %v3141, %v3163
        %v3168 = vadd.f32 %v3142, %v3164
        %v3169 = vadd.f32 %v3143, %v3165
        %s3170 = scalar_lea.vmem [#allocation16], 96
        %v3171 = vld [vmem:[%s3170] sm:$0xff]
        %v3172 = vld [vmem:[%s3170 + $0x8] sm:$0xff]
        %v3173 = vld [vmem:[%s3170 + $0x10] sm:$0xff]
        %v3174 = vld [vmem:[%s3170 + $0x18] sm:$0xff]
        %v3175 = vmul.f32 %v3171, %v2223
        %v3176 = vmul.f32 %v3172, %v2223
        %v3177 = vmul.f32 %v3173, %v2223
        %v3178 = vmul.f32 %v3174, %v2223
        %v3179 = vadd.f32 %v3153, %v3175
        %v3180 = vadd.f32 %v3154, %v3176
        %v3181 = vadd.f32 %v3155, %v3177
        %v3182 = vadd.f32 %v3156, %v3178
        %s3183 = scalar_lea.vmem [#allocation17], 96
        %v3184 = vld [vmem:[%s3183] sm:$0xff]
        %v3185 = vld [vmem:[%s3183 + $0x8] sm:$0xff]
        %v3186 = vld [vmem:[%s3183 + $0x10] sm:$0xff]
        %v3187 = vld [vmem:[%s3183 + $0x18] sm:$0xff]
        %v3188 = vmul.f32 %v3184, %v2223
        %v3189 = vmul.f32 %v3185, %v2223
        %v3190 = vmul.f32 %v3186, %v2223
        %v3191 = vmul.f32 %v3187, %v2223
        %v3192 = vadd.f32 %v3166, %v3188
        %v3193 = vadd.f32 %v3167, %v3189
        %v3194 = vadd.f32 %v3168, %v3190
        %v3195 = vadd.f32 %v3169, %v3191
        %s3196 = scalar_lea.vmem [#allocation16], 128
        %v3197 = vld [vmem:[%s3196] sm:$0xff]
        %v3198 = vld [vmem:[%s3196 + $0x8] sm:$0xff]
        %v3199 = vld [vmem:[%s3196 + $0x10] sm:$0xff]
        %v3200 = vld [vmem:[%s3196 + $0x18] sm:$0xff]
        %v3201 = vmul.f32 %v3197, %v2234
        %v3202 = vmul.f32 %v3198, %v2234
        %v3203 = vmul.f32 %v3199, %v2234
        %v3204 = vmul.f32 %v3200, %v2234
        %v3205 = vadd.f32 %v3179, %v3201
        %v3206 = vadd.f32 %v3180, %v3202
        %v3207 = vadd.f32 %v3181, %v3203
        %v3208 = vadd.f32 %v3182, %v3204
        %s3209 = scalar_lea.vmem [#allocation17], 128
        %v3210 = vld [vmem:[%s3209] sm:$0xff]
        %v3211 = vld [vmem:[%s3209 + $0x8] sm:$0xff]
        %v3212 = vld [vmem:[%s3209 + $0x10] sm:$0xff]
        %v3213 = vld [vmem:[%s3209 + $0x18] sm:$0xff]
        %v3214 = vmul.f32 %v3210, %v2234
        %v3215 = vmul.f32 %v3211, %v2234
        %v3216 = vmul.f32 %v3212, %v2234
        %v3217 = vmul.f32 %v3213, %v2234
        %v3218 = vadd.f32 %v3192, %v3214
        %v3219 = vadd.f32 %v3193, %v3215
        %v3220 = vadd.f32 %v3194, %v3216
        %v3221 = vadd.f32 %v3195, %v3217
        %s3222 = scalar_lea.vmem [#allocation16], 160
        %v3223 = vld [vmem:[%s3222] sm:$0xff]
        %v3224 = vld [vmem:[%s3222 + $0x8] sm:$0xff]
        %v3225 = vld [vmem:[%s3222 + $0x10] sm:$0xff]
        %v3226 = vld [vmem:[%s3222 + $0x18] sm:$0xff]
        %v3227 = vmul.f32 %v3223, %v2245
        %v3228 = vmul.f32 %v3224, %v2245
        %v3229 = vmul.f32 %v3225, %v2245
        %v3230 = vmul.f32 %v3226, %v2245
        %v3231 = vadd.f32 %v3205, %v3227
        %v3232 = vadd.f32 %v3206, %v3228
        %v3233 = vadd.f32 %v3207, %v3229
        %v3234 = vadd.f32 %v3208, %v3230
        %s3235 = scalar_lea.vmem [#allocation17], 160
        %v3236 = vld [vmem:[%s3235] sm:$0xff]
        %v3237 = vld [vmem:[%s3235 + $0x8] sm:$0xff]
        %v3238 = vld [vmem:[%s3235 + $0x10] sm:$0xff]
        %v3239 = vld [vmem:[%s3235 + $0x18] sm:$0xff]
        %v3240 = vmul.f32 %v3236, %v2245
        %v3241 = vmul.f32 %v3237, %v2245
        %v3242 = vmul.f32 %v3238, %v2245
        %v3243 = vmul.f32 %v3239, %v2245
        %v3244 = vadd.f32 %v3218, %v3240
        %v3245 = vadd.f32 %v3219, %v3241
        %v3246 = vadd.f32 %v3220, %v3242
        %v3247 = vadd.f32 %v3221, %v3243
        %s3248 = scalar_lea.vmem [#allocation16], 192
        %v3249 = vld [vmem:[%s3248] sm:$0xff]
        %v3250 = vld [vmem:[%s3248 + $0x8] sm:$0xff]
        %v3251 = vld [vmem:[%s3248 + $0x10] sm:$0xff]
        %v3252 = vld [vmem:[%s3248 + $0x18] sm:$0xff]
        %v3253 = vmul.f32 %v3249, %v2256
        %v3254 = vmul.f32 %v3250, %v2256
        %v3255 = vmul.f32 %v3251, %v2256
        %v3256 = vmul.f32 %v3252, %v2256
        %v3257 = vadd.f32 %v3231, %v3253
        %v3258 = vadd.f32 %v3232, %v3254
        %v3259 = vadd.f32 %v3233, %v3255
        %v3260 = vadd.f32 %v3234, %v3256
        %s3261 = scalar_lea.vmem [#allocation17], 192
        %v3262 = vld [vmem:[%s3261] sm:$0xff]
        %v3263 = vld [vmem:[%s3261 + $0x8] sm:$0xff]
        %v3264 = vld [vmem:[%s3261 + $0x10] sm:$0xff]
        %v3265 = vld [vmem:[%s3261 + $0x18] sm:$0xff]
        %v3266 = vmul.f32 %v3262, %v2256
        %v3267 = vmul.f32 %v3263, %v2256
        %v3268 = vmul.f32 %v3264, %v2256
        %v3269 = vmul.f32 %v3265, %v2256
        %v3270 = vadd.f32 %v3244, %v3266
        %v3271 = vadd.f32 %v3245, %v3267
        %v3272 = vadd.f32 %v3246, %v3268
        %v3273 = vadd.f32 %v3247, %v3269
        %s3274 = scalar_lea.vmem [#allocation16], 224
        %v3275 = vld [vmem:[%s3274] sm:$0xff]
        %v3276 = vld [vmem:[%s3274 + $0x8] sm:$0xff]
        %v3277 = vld [vmem:[%s3274 + $0x10] sm:$0xff]
        %v3278 = vld [vmem:[%s3274 + $0x18] sm:$0xff]
        %v3279 = vmul.f32 %v3275, %v2267
        %v3280 = vmul.f32 %v3276, %v2267
        %v3281 = vmul.f32 %v3277, %v2267
        %v3282 = vmul.f32 %v3278, %v2267
        %v3283 = vadd.f32 %v3257, %v3279
        %v3284 = vadd.f32 %v3258, %v3280
        %v3285 = vadd.f32 %v3259, %v3281
        %v3286 = vadd.f32 %v3260, %v3282
        %s3287 = scalar_lea.vmem [#allocation17], 224
        %v3288 = vld [vmem:[%s3287] sm:$0xff]
        %v3289 = vld [vmem:[%s3287 + $0x8] sm:$0xff]
        %v3290 = vld [vmem:[%s3287 + $0x10] sm:$0xff]
        %v3291 = vld [vmem:[%s3287 + $0x18] sm:$0xff]
        %v3292 = vmul.f32 %v3288, %v2267
        %v3293 = vmul.f32 %v3289, %v2267
        %v3294 = vmul.f32 %v3290, %v2267
        %v3295 = vmul.f32 %v3291, %v2267
        %v3296 = vadd.f32 %v3270, %v3292
        %v3297 = vadd.f32 %v3271, %v3293
        %v3298 = vadd.f32 %v3272, %v3294
        %v3299 = vadd.f32 %v3273, %v3295
        %s3300 = scalar_lea.vmem [#allocation16], 256
        %v3301 = vld [vmem:[%s3300] sm:$0xff]
        %v3302 = vld [vmem:[%s3300 + $0x8] sm:$0xff]
        %v3303 = vld [vmem:[%s3300 + $0x10] sm:$0xff]
        %v3304 = vld [vmem:[%s3300 + $0x18] sm:$0xff]
        %v3305 = vmul.f32 %v3301, %v2278
        %v3306 = vmul.f32 %v3302, %v2278
        %v3307 = vmul.f32 %v3303, %v2278
        %v3308 = vmul.f32 %v3304, %v2278
        %v3309 = vadd.f32 %v3283, %v3305
        %v3310 = vadd.f32 %v3284, %v3306
        %v3311 = vadd.f32 %v3285, %v3307
        %v3312 = vadd.f32 %v3286, %v3308
        %s3313 = scalar_lea.vmem [#allocation17], 256
        %v3314 = vld [vmem:[%s3313] sm:$0xff]
        %v3315 = vld [vmem:[%s3313 + $0x8] sm:$0xff]
        %v3316 = vld [vmem:[%s3313 + $0x10] sm:$0xff]
        %v3317 = vld [vmem:[%s3313 + $0x18] sm:$0xff]
        %v3318 = vmul.f32 %v3314, %v2278
        %v3319 = vmul.f32 %v3315, %v2278
        %v3320 = vmul.f32 %v3316, %v2278
        %v3321 = vmul.f32 %v3317, %v2278
        %v3322 = vadd.f32 %v3296, %v3318
        %v3323 = vadd.f32 %v3297, %v3319
        %v3324 = vadd.f32 %v3298, %v3320
        %v3325 = vadd.f32 %v3299, %v3321
        %s3326 = scalar_lea.vmem [#allocation16], 288
        %v3327 = vld [vmem:[%s3326] sm:$0xff]
        %v3328 = vld [vmem:[%s3326 + $0x8] sm:$0xff]
        %v3329 = vld [vmem:[%s3326 + $0x10] sm:$0xff]
        %v3330 = vld [vmem:[%s3326 + $0x18] sm:$0xff]
        %v3331 = vmul.f32 %v3327, %v2289
        %v3332 = vmul.f32 %v3328, %v2289
        %v3333 = vmul.f32 %v3329, %v2289
        %v3334 = vmul.f32 %v3330, %v2289
        %v3335 = vadd.f32 %v3309, %v3331
        %v3336 = vadd.f32 %v3310, %v3332
        %v3337 = vadd.f32 %v3311, %v3333
        %v3338 = vadd.f32 %v3312, %v3334
        %s3339 = scalar_lea.vmem [#allocation17], 288
        %v3340 = vld [vmem:[%s3339] sm:$0xff]
        %v3341 = vld [vmem:[%s3339 + $0x8] sm:$0xff]
        %v3342 = vld [vmem:[%s3339 + $0x10] sm:$0xff]
        %v3343 = vld [vmem:[%s3339 + $0x18] sm:$0xff]
        %v3344 = vmul.f32 %v3340, %v2289
        %v3345 = vmul.f32 %v3341, %v2289
        %v3346 = vmul.f32 %v3342, %v2289
        %v3347 = vmul.f32 %v3343, %v2289
        %v3348 = vadd.f32 %v3322, %v3344
        %v3349 = vadd.f32 %v3323, %v3345
        %v3350 = vadd.f32 %v3324, %v3346
        %v3351 = vadd.f32 %v3325, %v3347
        %s3352 = scalar_lea.vmem [#allocation16], 320
        %v3353 = vld [vmem:[%s3352] sm:$0xff]
        %v3354 = vld [vmem:[%s3352 + $0x8] sm:$0xff]
        %v3355 = vld [vmem:[%s3352 + $0x10] sm:$0xff]
        %v3356 = vld [vmem:[%s3352 + $0x18] sm:$0xff]
        %v3357 = vmul.f32 %v3353, %v2300
        %v3358 = vmul.f32 %v3354, %v2300
        %v3359 = vmul.f32 %v3355, %v2300
        %v3360 = vmul.f32 %v3356, %v2300
        %v3361 = vadd.f32 %v3335, %v3357
        %v3362 = vadd.f32 %v3336, %v3358
        %v3363 = vadd.f32 %v3337, %v3359
        %v3364 = vadd.f32 %v3338, %v3360
        %s3365 = scalar_lea.vmem [#allocation17], 320
        %v3366 = vld [vmem:[%s3365] sm:$0xff]
        %v3367 = vld [vmem:[%s3365 + $0x8] sm:$0xff]
        %v3368 = vld [vmem:[%s3365 + $0x10] sm:$0xff]
        %v3369 = vld [vmem:[%s3365 + $0x18] sm:$0xff]
        %v3370 = vmul.f32 %v3366, %v2300
        %v3371 = vmul.f32 %v3367, %v2300
        %v3372 = vmul.f32 %v3368, %v2300
        %v3373 = vmul.f32 %v3369, %v2300
        %v3374 = vadd.f32 %v3348, %v3370
        %v3375 = vadd.f32 %v3349, %v3371
        %v3376 = vadd.f32 %v3350, %v3372
        %v3377 = vadd.f32 %v3351, %v3373
        %s3378 = scalar_lea.vmem [#allocation16], 352
        %v3379 = vld [vmem:[%s3378] sm:$0xff]
        %v3380 = vld [vmem:[%s3378 + $0x8] sm:$0xff]
        %v3381 = vld [vmem:[%s3378 + $0x10] sm:$0xff]
        %v3382 = vld [vmem:[%s3378 + $0x18] sm:$0xff]
        %v3383 = vmul.f32 %v3379, %v2311
        %v3384 = vmul.f32 %v3380, %v2311
        %v3385 = vmul.f32 %v3381, %v2311
        %v3386 = vmul.f32 %v3382, %v2311
        %v3387 = vadd.f32 %v3361, %v3383
        %v3388 = vadd.f32 %v3362, %v3384
        %v3389 = vadd.f32 %v3363, %v3385
        %v3390 = vadd.f32 %v3364, %v3386
        %s3391 = scalar_lea.vmem [#allocation17], 352
        %v3392 = vld [vmem:[%s3391] sm:$0xff]
        %v3393 = vld [vmem:[%s3391 + $0x8] sm:$0xff]
        %v3394 = vld [vmem:[%s3391 + $0x10] sm:$0xff]
        %v3395 = vld [vmem:[%s3391 + $0x18] sm:$0xff]
        %v3396 = vmul.f32 %v3392, %v2311
        %v3397 = vmul.f32 %v3393, %v2311
        %v3398 = vmul.f32 %v3394, %v2311
        %v3399 = vmul.f32 %v3395, %v2311
        %v3400 = vadd.f32 %v3374, %v3396
        %v3401 = vadd.f32 %v3375, %v3397
        %v3402 = vadd.f32 %v3376, %v3398
        %v3403 = vadd.f32 %v3377, %v3399
        %s3404 = scalar_lea.vmem [#allocation16], 384
        %v3405 = vld [vmem:[%s3404] sm:$0xff]
        %v3406 = vld [vmem:[%s3404 + $0x8] sm:$0xff]
        %v3407 = vld [vmem:[%s3404 + $0x10] sm:$0xff]
        %v3408 = vld [vmem:[%s3404 + $0x18] sm:$0xff]
        %v3409 = vmul.f32 %v3405, %v2322
        %v3410 = vmul.f32 %v3406, %v2322
        %v3411 = vmul.f32 %v3407, %v2322
        %v3412 = vmul.f32 %v3408, %v2322
        %v3413 = vadd.f32 %v3387, %v3409
        %v3414 = vadd.f32 %v3388, %v3410
        %v3415 = vadd.f32 %v3389, %v3411
        %v3416 = vadd.f32 %v3390, %v3412
        %s3417 = scalar_lea.vmem [#allocation17], 384
        %v3418 = vld [vmem:[%s3417] sm:$0xff]
        %v3419 = vld [vmem:[%s3417 + $0x8] sm:$0xff]
        %v3420 = vld [vmem:[%s3417 + $0x10] sm:$0xff]
        %v3421 = vld [vmem:[%s3417 + $0x18] sm:$0xff]
        %v3422 = vmul.f32 %v3418, %v2322
        %v3423 = vmul.f32 %v3419, %v2322
        %v3424 = vmul.f32 %v3420, %v2322
        %v3425 = vmul.f32 %v3421, %v2322
        %v3426 = vadd.f32 %v3400, %v3422
        %v3427 = vadd.f32 %v3401, %v3423
        %v3428 = vadd.f32 %v3402, %v3424
        %v3429 = vadd.f32 %v3403, %v3425
        %s3430 = scalar_lea.vmem [#allocation16], 416
        %v3431 = vld [vmem:[%s3430] sm:$0xff]
        %v3432 = vld [vmem:[%s3430 + $0x8] sm:$0xff]
        %v3433 = vld [vmem:[%s3430 + $0x10] sm:$0xff]
        %v3434 = vld [vmem:[%s3430 + $0x18] sm:$0xff]
        %v3435 = vmul.f32 %v3431, %v2333
        %v3436 = vmul.f32 %v3432, %v2333
        %v3437 = vmul.f32 %v3433, %v2333
        %v3438 = vmul.f32 %v3434, %v2333
        %v3439 = vadd.f32 %v3413, %v3435
        %v3440 = vadd.f32 %v3414, %v3436
        %v3441 = vadd.f32 %v3415, %v3437
        %v3442 = vadd.f32 %v3416, %v3438
        %s3443 = scalar_lea.vmem [#allocation17], 416
        %v3444 = vld [vmem:[%s3443] sm:$0xff]
        %v3445 = vld [vmem:[%s3443 + $0x8] sm:$0xff]
        %v3446 = vld [vmem:[%s3443 + $0x10] sm:$0xff]
        %v3447 = vld [vmem:[%s3443 + $0x18] sm:$0xff]
        %v3448 = vmul.f32 %v3444, %v2333
        %v3449 = vmul.f32 %v3445, %v2333
        %v3450 = vmul.f32 %v3446, %v2333
        %v3451 = vmul.f32 %v3447, %v2333
        %v3452 = vadd.f32 %v3426, %v3448
        %v3453 = vadd.f32 %v3427, %v3449
        %v3454 = vadd.f32 %v3428, %v3450
        %v3455 = vadd.f32 %v3429, %v3451
        %s3456 = scalar_lea.vmem [#allocation16], 448
        %v3457 = vld [vmem:[%s3456] sm:$0xff]
        %v3458 = vld [vmem:[%s3456 + $0x8] sm:$0xff]
        %v3459 = vld [vmem:[%s3456 + $0x10] sm:$0xff]
        %v3460 = vld [vmem:[%s3456 + $0x18] sm:$0xff]
        %v3461 = vmul.f32 %v3457, %v2344
        %v3462 = vmul.f32 %v3458, %v2344
        %v3463 = vmul.f32 %v3459, %v2344
        %v3464 = vmul.f32 %v3460, %v2344
        %v3465 = vadd.f32 %v3439, %v3461
        %v3466 = vadd.f32 %v3440, %v3462
        %v3467 = vadd.f32 %v3441, %v3463
        %v3468 = vadd.f32 %v3442, %v3464
        %s3469 = scalar_lea.vmem [#allocation17], 448
        %v3470 = vld [vmem:[%s3469] sm:$0xff]
        %v3471 = vld [vmem:[%s3469 + $0x8] sm:$0xff]
        %v3472 = vld [vmem:[%s3469 + $0x10] sm:$0xff]
        %v3473 = vld [vmem:[%s3469 + $0x18] sm:$0xff]
        %v3474 = vmul.f32 %v3470, %v2344
        %v3475 = vmul.f32 %v3471, %v2344
        %v3476 = vmul.f32 %v3472, %v2344
        %v3477 = vmul.f32 %v3473, %v2344
        %v3478 = vadd.f32 %v3452, %v3474
        %v3479 = vadd.f32 %v3453, %v3475
        %v3480 = vadd.f32 %v3454, %v3476
        %v3481 = vadd.f32 %v3455, %v3477
        %s3482 = scalar_lea.vmem [#allocation16], 480
        %v3483 = vld [vmem:[%s3482] sm:$0xff]
        %v3484 = vld [vmem:[%s3482 + $0x8] sm:$0xff]
        %v3485 = vld [vmem:[%s3482 + $0x10] sm:$0xff]
        %v3486 = vld [vmem:[%s3482 + $0x18] sm:$0xff]
        %v3487 = vmul.f32 %v3483, %v2355
        %v3488 = vmul.f32 %v3484, %v2355
        %v3489 = vmul.f32 %v3485, %v2355
        %v3490 = vmul.f32 %v3486, %v2355
        %v3491 = vadd.f32 %v3465, %v3487
        %v3492 = vadd.f32 %v3466, %v3488
        %v3493 = vadd.f32 %v3467, %v3489
        %v3494 = vadd.f32 %v3468, %v3490
        %s3495 = scalar_lea.vmem [#allocation17], 480
        %v3496 = vld [vmem:[%s3495] sm:$0xff]
        %v3497 = vld [vmem:[%s3495 + $0x8] sm:$0xff]
        %v3498 = vld [vmem:[%s3495 + $0x10] sm:$0xff]
        %v3499 = vld [vmem:[%s3495 + $0x18] sm:$0xff]
        %v3500 = vmul.f32 %v3496, %v2355
        %v3501 = vmul.f32 %v3497, %v2355
        %v3502 = vmul.f32 %v3498, %v2355
        %v3503 = vmul.f32 %v3499, %v2355
        %v3504 = vadd.f32 %v3478, %v3500
        %v3505 = vadd.f32 %v3479, %v3501
        %v3506 = vadd.f32 %v3480, %v3502
        %v3507 = vadd.f32 %v3481, %v3503
        %3508 = vst [vmem:[#allocation3] sm:$0xff] %v3491
        %3509 = vst [vmem:[#allocation3 + $0x8] sm:$0xff] %v3492
        %3510 = vst [vmem:[#allocation3 + $0x10] sm:$0xff] %v3493
        %3511 = vst [vmem:[#allocation3 + $0x18] sm:$0xff] %v3494
        %3512 = vst [vmem:[#allocation4] sm:$0xff] %v3504
        %3513 = vst [vmem:[#allocation4 + $0x8] sm:$0xff] %v3505
        %3514 = vst [vmem:[#allocation4 + $0x10] sm:$0xff] %v3506
        %3515 = vst [vmem:[#allocation4 + $0x18] sm:$0xff] %v3507
        %v3516 = vld [vmem:[%s12] sm:$0x1]
        %v3518 = vlaneseq
        %v3519 = vshrl.u32 %v3518, 7
        %v3520 = vsub.s32 0, %v3519
        %v3521 = vrot.slane %v3516, %v3520
        %v3523 = vmul.f32 %v3521, %v2175
        %v3524 = vmul.f32 %v3521, %v2176
        %v3525 = vadd.f32 %v3060, %v3523
        %v3526 = vadd.f32 %v3061, %v3524
        %v3527 = vmul.f32 %v3525, %v900
        %v3528 = vmul.f32 %v3526, %v904
        %v3529 = vpack.c.bf16 %v3528, %v3527
        %v3530 = vld [vmem:[#allocation20] sm:$0xf]
        %v3531 = vld [vmem:[#allocation20 + $0x4] sm:$0xf]
        %v3532 = vld [vmem:[#allocation20 + $0x8] sm:$0xf]
        %v3533 = vld [vmem:[#allocation20 + $0xc] sm:$0xf]
        %v3534 = vld [vmem:[#allocation20 + $0x10] sm:$0xf]
        %v3535 = vld [vmem:[#allocation20 + $0x14] sm:$0xf]
        %v3536 = vld [vmem:[#allocation20 + $0x18] sm:$0xf]
        %v3537 = vld [vmem:[#allocation20 + $0x1c] sm:$0xf]
        %v3538 = vld [vmem:[#allocation20 + $0x20] sm:$0xf]
        %v3539 = vld [vmem:[#allocation20 + $0x24] sm:$0xf]
        %v3540 = vld [vmem:[#allocation20 + $0x28] sm:$0xf]
        %v3541 = vld [vmem:[#allocation20 + $0x2c] sm:$0xf]
        %v3542 = vld [vmem:[#allocation20 + $0x30] sm:$0xf]
        %v3543 = vld [vmem:[#allocation20 + $0x34] sm:$0xf]
        %v3544 = vld [vmem:[#allocation20 + $0x38] sm:$0xf]
        %v3545 = vld [vmem:[#allocation20 + $0x3c] sm:$0xf]
        %v3546 = vld [vmem:[%s14] sm:$0x1]
        %v3548 = vlaneseq
        %v3549 = vshrl.u32 %v3548, 7
        %v3550 = vsub.s32 0, %v3549
        %v3551 = vrot.slane %v3546, %v3550
        %v3569 = vunpack.c.l.b16 %v3530
        %v3570 = vunpack.c.l.b16 %v3531
        %v3571 = vunpack.c.l.b16 %v3532
        %v3572 = vunpack.c.l.b16 %v3533
        %v3573 = vunpack.c.l.b16 %v3534
        %v3574 = vunpack.c.l.b16 %v3535
        %v3575 = vunpack.c.l.b16 %v3536
        %v3576 = vunpack.c.l.b16 %v3537
        %v3577 = vunpack.c.l.b16 %v3538
        %v3578 = vunpack.c.l.b16 %v3539
        %v3579 = vunpack.c.l.b16 %v3540
        %v3580 = vunpack.c.l.b16 %v3541
        %v3581 = vunpack.c.l.b16 %v3542
        %v3582 = vunpack.c.l.b16 %v3543
        %v3583 = vunpack.c.l.b16 %v3544
        %v3584 = vunpack.c.l.b16 %v3545
        %v3585 = vpack.c.b16 %v3570, %v3569
        %v3586 = vpack.c.b16 %v3572, %v3571
        %v3587 = vpack.c.b16 %v3574, %v3573
        %v3588 = vpack.c.b16 %v3576, %v3575
        %v3589 = vpack.c.b16 %v3578, %v3577
        %v3590 = vpack.c.b16 %v3580, %v3579
        %v3591 = vpack.c.b16 %v3582, %v3581
        %v3592 = vpack.c.b16 %v3584, %v3583
        %3601 = vmatprep.subr.bf16.mxu0 0
        %3602 = vmatpush1.bf16.msra.mxu0 %v3585
        %3603 = vmatprep.subr.bf16.mxu0 0
        %3604 = vmatpush1.bf16.msra.mxu0 %v3586
        %3605 = vmatprep.subr.bf16.mxu0 0
        %3606 = vmatpush1.bf16.msra.mxu0 %v3587
        %3607 = vmatprep.subr.bf16.mxu0 0
        %3608 = vmatpush1.bf16.msra.mxu0 %v3588
        %3609 = vmatprep.subr.bf16.mxu0 0
        %3610 = vmatpush1.bf16.msra.mxu0 %v3589
        %3611 = vmatprep.subr.bf16.mxu0 0
        %3612 = vmatpush1.bf16.msra.mxu0 %v3590
        %3613 = vmatprep.subr.bf16.mxu0 0
        %3614 = vmatpush1.bf16.msra.mxu0 %v3591
        %3615 = vmatprep.subr.bf16.mxu0 0
        %3616 = vmatpush1.bf16.msra.mxu0 %v3592
        %3617 = vmatprep.subr.bf16.mxu0 0
        %3618 = vmatpush1.bf16.msra.mxu0 0
        %3619 = vmatprep.subr.bf16.mxu0 0
        %3620 = vmatpush1.bf16.msra.mxu0 0
        %3621 = vmatprep.subr.bf16.mxu0 0
        %3622 = vmatpush1.bf16.msra.mxu0 0
        %3623 = vmatprep.subr.bf16.mxu0 0
        %3624 = vmatpush1.bf16.msra.mxu0 0
        %3625 = vmatprep.subr.bf16.mxu0 0
        %3626 = vmatpush1.bf16.msra.mxu0 0
        %3627 = vmatprep.subr.bf16.mxu0 0
        %3628 = vmatpush1.bf16.msra.mxu0 0
        %3629 = vmatprep.subr.bf16.mxu0 0
        %3630 = vmatpush1.bf16.msra.mxu0 0
        %3631 = vmatprep.subr.bf16.mxu0 0
        %3632 = vmatpush1.bf16.msra.mxu0 0
        %3633 = vmatprep.mubr.bf16.mxu0 0
        %3634 = vmatmul.mubr.bf16.gmra.mrb[0].mxu0 %v3529
        %v3635 = vpop.f32.mrb[0].mxu0
        %v3636 = vadd.f32 %v3551, %v3635
        %v3637 = vpop.f32.mrb[0].mxu0
        %v3638 = vpop.f32.mrb[0].mxu0
        %v3639 = vadd.f32 %v3551, %v3638
        %v3640 = vpop.f32.mrb[0].mxu0
        %3641 = vdwg.mxu0
        %3642 = vst [vmem:[%s661] sm:$0xff] %v3636
        %3643 = vst [vmem:[%s661 + $0x8] sm:$0xff] %v3639
        %s3644 = sand.u32 %s381, 1
        %s3645 = scalar_lea.sflag [#allocation7], %s3644
        %s3646 = sand.u32 %s381, 1
        %s3647 = smul.addr %s3646, 16
        %s3648 = scalar_lea.vmem [#allocation22], %s3647
        // Predicated region
        $region125: #{tpu_custom_call.1} parent=79 // pred_check
          %p3649 = pneg %p391
        $region126: #{tpu_custom_call.1} parent=79 // pred_check_branch
          %3651 = sbr.rel (%p3649) target = $region128
        $region127: #{tpu_custom_call.1} parent=79 // pred_region
          %s3652 = smul.u32 2, %s42
          %s3654 = ssub.s32 256, 256
          %3655 = vsyncadd %s3645, %s3654
          %s3656 = smul.addr %s41, 8
          %s3657 = sadd.s32 %s3652, %s3656
          %s3658 = smul.addr %s3657, 128
          %s3659 = scalar_lea.hbm %s15, %s3658
          %s3660 = sshll.u32 %s3648, 4
          %s3661 = int_to_ptr.vmem [resolvable:$true] %s3660
          %3666 = dma.vmem_to_hbm [thread:$0]  %s3661, 256, %s3659, %s3645, 128, 128, 8
        $region128: #{tpu_custom_call.1} parent=79 // pred_fallthru
          _
      $region80: #{tpu_custom_call.1} parent=5 // pred_fallthru
        _
      %p3667 = scmp.le.s32.totalorder 2, %s32
      // Predicated region
      $region129: #{tpu_custom_call.1} parent=5 // pred_check
        %p3668 = pneg %p3667
      $region130: #{tpu_custom_call.1} parent=5 // pred_check_branch
        %3670 = sbr.rel (%p3668) target = $region132
      $region131: #{tpu_custom_call.1} parent=5 // pred_region
        %s3671 = ssub.s32 %s32, 2
        // Predicated region
        $region133: #{tpu_custom_call.1} parent=131 // pred_check
          %p3672 = pneg %p397
        $region134: #{tpu_custom_call.1} parent=131 // pred_check_branch
          %3674 = sbr.rel (%p3672) target = $region136
        $region135: #{tpu_custom_call.1} parent=131 // pred_region
          %s3675 = sand.u32 %s382, 1
          %s3676 = scalar_lea.sflag [#allocation7], %s3675
          %s3677 = sand.u32 %s382, 1
          %s3678 = smul.addr %s3677, 16
          %s3679 = scalar_lea.vmem [#allocation22], %s3678
          %3680 = dma.done %s3676, 256
        $region136: #{tpu_custom_call.1} parent=131 // pred_fallthru
          _
      $region132: #{tpu_custom_call.1} parent=5 // pred_fallthru
        _
    $region6: #{tpu_custom_call.1} parent=1 // loop_footer
      %s36 = sadd.s32 1, %s32
    $region7: #{tpu_custom_call.1} parent=1 // loop_footer_branch
      %31 = sbr.rel target = $region3
    $region8: #{tpu_custom_call.1} parent=1 // loop_exit
      _
    %3681 = vsyncpa [#allocation6], 1
    %s3682 = scalar_lea.sflag [#allocation6], 1
    %3683 = vsyncpa %s3682, 1
    %3684 = vsyncpa [#allocation9], 1
    %3685 = vsyncpa [#allocation12], 1
    %3686 = vsyncpa [#allocation15], 1
    %3687 = vsyncpa [#allocation18], 1
    %3688 = vsyncpa [#allocation21], 1
    %3689 = vsyncpa [#allocation7], 1
    %s3690 = scalar_lea.sflag [#allocation7], 1
    %3691 = vsyncpa %s3690, 1

</llo_original>
